<compile_context>
chip_gen: v7x
topology: tpu7x:2x2x1
jax: 0.10.0
libtpu: 0.0.40
codegen_flags: <defaults>
</compile_context>

<pallas_src>
import functools

import jax
import jax.numpy as jnp
from jax.experimental import pallas as pl
from jax.experimental.pallas import tpu as pltpu

EPS = 1e-5            # nn.InstanceNorm2d default eps
_BAND_UNROLL = 8      # unroll depth for the band loops (LLO visibility)


# ---------------------------------------------------------------- kernel ----
def resnet_block_kernel(x_ref, w1_ref, w2_ref, o_ref, y1_ref, y2_ref, *, rb):
    _, H, W, C = x_ref.shape
    nb = H // rb            # number of row bands (static)
    mb = rb * W             # pixels per band == MXU M dim (multiple of 8)
    npix = H * W
    cdtype = w1_ref.dtype   # MXU operand dtype (bf16 in production)

    # Column-position masks for the reflected left/right boundary columns.
    col = jax.lax.broadcasted_iota(jnp.int32, (mb, 1), 0) % W
    first_col = col == 0
    last_col = col == (W - 1)

    def build_patches(band3):
        """band3: (rb+2, W, C) f32 source rows [r0-1, r0+rb] (already
        row-reflected).  Returns the (mb, 9C) im2col slab in `cdtype`; tap
        order is (dh, dw) row-major with channels innermost, matching the
        (9C, C) weight layout.  Width shifts use XLU sublane rolls on the
        flattened (mb, C) slab + a reflected-column fixup, so the sublane
        extent stays a multiple of 8 (no misaligned W+2 slices)."""
        taps = []
        for dh in range(3):
            s2 = band3[dh:dh + rb].reshape(mb, C)        # layout-preserving
            prev = pltpu.roll(s2, shift=1, axis=0)       # pixel m-1 (XLU)
            nxt = pltpu.roll(s2, shift=mb - 1, axis=0)   # pixel m+1 (XLU)
            left = jnp.where(first_col, nxt, prev)       # col w-1, reflected
            right = jnp.where(last_col, prev, nxt)       # col w+1, reflected
            taps += [left, s2, right]
        return jnp.concatenate([t.astype(cdtype) for t in taps], axis=-1)

    def halo_rows(i):
        # Source rows bracketing band i, with ReflectionPad2d(1) semantics.
        top = jnp.where(i == 0, 1, i * rb - 1)
        bot = jnp.where(i == nb - 1, H - 2, (i + 1) * rb)
        return top, bot

    zeros = jnp.zeros((1, C), jnp.float32)
    unroll = min(nb, _BAND_UNROLL)

    # ---- conv block 1: reflect-pad -> 3x3 conv (bias elided) ----------------
    # y1 (pre-norm, f32) goes to scratch; per-channel sum / sum-of-squares are
    # accumulated in the same pass (fused instance-norm statistics).
    def conv1_band(i, carry):
        s, ss = carry
        top, bot = halo_rows(i)
        band = jnp.concatenate(
            [x_ref[0, pl.ds(top, 1)],
             x_ref[0, pl.ds(i * rb, rb)],
             x_ref[0, pl.ds(bot, 1)]], axis=0).astype(jnp.float32)
        p = build_patches(band)
        y = jnp.dot(p, w1_ref[...], preferred_element_type=jnp.float32)
        y1_ref[pl.ds(i * rb, rb)] = y.reshape(rb, W, C)
        return (s + jnp.sum(y, axis=0, keepdims=True),
                ss + jnp.sum(y * y, axis=0, keepdims=True))

    sum1, sumsq1 = jax.lax.fori_loop(0, nb, conv1_band, (zeros, zeros),
                                     unroll=unroll)
    mean1 = sum1 / npix
    var1 = jnp.maximum(sumsq1 / npix - mean1 * mean1, 0.0)
    rstd1 = jax.lax.rsqrt(var1 + EPS)
    # use_dropout=False (an eval-mode Dropout(0.5) would be identity anyway)

    # ---- conv block 2: h1 = relu(instance_norm(y1)) normalized on the fly ---
    def conv2_band(i, carry):
        s, ss = carry
        top, bot = halo_rows(i)
        band_y = jnp.concatenate(
            [y1_ref[pl.ds(top, 1)],
             y1_ref[pl.ds(i * rb, rb)],
             y1_ref[pl.ds(bot, 1)]], axis=0)
        band_h = jnp.maximum((band_y - mean1) * rstd1, 0.0)
        p = build_patches(band_h)
        y = jnp.dot(p, w2_ref[...], preferred_element_type=jnp.float32)
        y2_ref[pl.ds(i * rb, rb)] = y.reshape(rb, W, C)
        return (s + jnp.sum(y, axis=0, keepdims=True),
                ss + jnp.sum(y * y, axis=0, keepdims=True))

    sum2, sumsq2 = jax.lax.fori_loop(0, nb, conv2_band, (zeros, zeros),
                                     unroll=unroll)
    mean2 = sum2 / npix
    var2 = jnp.maximum(sumsq2 / npix - mean2 * mean2, 0.0)
    rstd2 = jax.lax.rsqrt(var2 + EPS)

    # ---- epilogue: out = x + instance_norm(y2), banded, in x's dtype --------
    def epilogue_band(i, carry):
        h2 = (y2_ref[pl.ds(i * rb, rb)] - mean2) * rstd2
        xb = x_ref[0, pl.ds(i * rb, rb)]
        o_ref[0, pl.ds(i * rb, rb)] = (xb + h2.astype(xb.dtype)).astype(o_ref.dtype)
        return carry

    jax.lax.fori_loop(0, nb, epilogue_band, 0, unroll=unroll)


# --------------------------------------------------------------- wrapper ----
def _pick_band_rows(H, W, target_pixels=512):
    """Largest divisor of H giving roughly `target_pixels` pixels per band."""
    rb = max(1, min(H, target_pixels // max(W, 1)))
    while H % rb:
        rb -= 1
    return rb


def _vmem_capacity_bytes():
    try:
        return int(pltpu.get_tpu_info().vmem_capacity_bytes)
    except Exception:
        return 64 << 20   # conservative: v7x has 64 MiB per TensorCore


def _vmem_limit_bytes(H, W, C, rb, x_bytes, c_bytes):
    img = H * W * C
    band_src = (rb + 2) * W * C
    band_m = rb * W
    est = (2 * img * x_bytes                  # x + out blocks (single-buffered)
           + 2 * 9 * C * C * c_bytes          # w1 + w2 slabs (single-buffered)
           + 2 * img * 4                      # y1/y2 f32 pre-norm scratch
           + 6 * band_src * 4                 # band source rows + f32 tap temps
           + 2 * band_m * 9 * C * c_bytes     # band im2col slab (+ copy)
           + 2 * band_m * C * 4)              # band f32 matmul output
    est = int(est * 1.25) + (4 << 20)         # compiler-temporary headroom
    cap = _vmem_capacity_bytes() - (8 << 20)  # generation-aware hard budget
    return max(16 << 20, min(est, cap))


def resnet_block(x_nchw, w1, b1, w2, b2, *, compute_dtype=jnp.bfloat16):
    """x_nchw: (N, C, H, W); w1/w2: (C, C, 3, 3) PyTorch OIHW; b1/b2: (C,).

    b1/b2 are accepted for API parity with Conv2d(bias=True) but unused in the
    kernel: a per-channel conv bias is exactly cancelled by the following
    InstanceNorm2d(affine=False).  (Only valid for this norm choice — if the
    norm layer is swapped the bias must be re-applied.)"""
    del b1, b2
    N, C, H, W = x_nchw.shape
    assert H >= 2 and W >= 2, "ReflectionPad2d(1) needs H, W >= 2"
    assert W % 8 == 0, "W must be a multiple of 8 (sublane-aligned layout)"
    # TODO(synk): for C < 128 the lane dim is underutilized and output stores
    # are masked; pack W into the lane dim (or pad C) for such configs.

    x = jnp.transpose(x_nchw, (0, 2, 3, 1))                        # NHWC

    def prep_w(w):
        # OIHW -> (kh, kw, cin, cout) -> (9*Cin, Cout); cast to the MXU dtype
        # in the wrapper (free); row order matches the im2col tap ordering.
        return jnp.transpose(w, (2, 3, 1, 0)).reshape(9 * C, C).astype(compute_dtype)

    w1_k, w2_k = prep_w(w1), prep_w(w2)

    rb = _pick_band_rows(H, W)
    x_bytes = jnp.dtype(x.dtype).itemsize
    c_bytes = jnp.dtype(compute_dtype).itemsize
    vmem_limit = _vmem_limit_bytes(H, W, C, rb, x_bytes, c_bytes)

    # Advisory cost hint (2 convs, 2 flops/MAC) so XLA schedules around us.
    cost = pl.CostEstimate(
        flops=2 * 2 * N * H * W * 9 * C * C,
        transcendentals=2 * N * C,
        bytes_accessed=int(2 * N * H * W * C * x_bytes + 2 * 9 * C * C * c_bytes))

    # Full-image blocks and grid-invariant weights: single-buffered (the batch
    # grid axis is already "parallel" across TensorCores, so there is little
    # to overlap and the VMEM is better spent on the band working set).
    single = pl.Buffered(1)
    kernel = functools.partial(resnet_block_kernel, rb=rb)

    out = pl.pallas_call(
        kernel,
        out_shape=jax.ShapeDtypeStruct((N, H, W, C), x.dtype),
        grid=(N,),
        in_specs=[
            pl.BlockSpec((1, H, W, C), lambda n: (n, 0, 0, 0), pipeline_mode=single),
            pl.BlockSpec((9 * C, C), lambda n: (0, 0), pipeline_mode=single),
            pl.BlockSpec((9 * C, C), lambda n: (0, 0), pipeline_mode=single),
        ],
        out_specs=pl.BlockSpec((1, H, W, C), lambda n: (n, 0, 0, 0),
                               pipeline_mode=single),
        scratch_shapes=[pltpu.VMEM((H, W, C), jnp.float32),    # y1 (pre-norm)
                        pltpu.VMEM((H, W, C), jnp.float32)],   # y2 (pre-norm)
        compiler_params=pltpu.CompilerParams(
            dimension_semantics=("parallel",),
            vmem_limit_bytes=vmem_limit),
        cost_estimate=cost,
    )(x, w1_k, w2_k)
    # TODO(synk): for N == 1 on v7x, add a second "parallel" grid axis over row
    # bands (two-pass cross-band instance norm) so both TensorCores are used.
    return jnp.transpose(out, (0, 3, 1, 2))                        # back to NCHW


# ---------------------------------------------------- pure-JAX reference ----
def ref_resnet_block(x, w1, b1, w2, b2):
    def reflect_pad(a):
        return jnp.pad(a, ((0, 0), (0, 0), (1, 1), (1, 1)), mode="reflect")

    def conv(a, w, b):
        y = jax.lax.conv_general_dilated(
            a, w, (1, 1), "VALID",
            dimension_numbers=("NCHW", "OIHW", "NCHW"))
        return y + b[None, :, None, None]

    def inorm(a):
        mean = jnp.mean(a, axis=(2, 3), keepdims=True)
        var = jnp.mean((a - mean) ** 2, axis=(2, 3), keepdims=True)
        return (a - mean) / jnp.sqrt(var + EPS)

    h = jnp.maximum(inorm(conv(reflect_pad(x), w1, b1)), 0.0)
    h = inorm(conv(reflect_pad(h), w2, b2))
    return x + h


# ------------------------------------------------------------------ main ----
if __name__ == "__main__":
    def run_case(N, C, H, W, compute_dtype, tol):
        key = jax.random.PRNGKey(0)
        kx, kw1, kb1, kw2, kb2 = jax.random.split(key, 5)
        x = jax.random.normal(kx, (N, C, H, W), jnp.float32)
        # deterministic synthetic Conv2d(dim, dim, 3, bias=True) parameters
        w1 = 0.1 * jax.random.normal(kw1, (C, C, 3, 3), jnp.float32)
        b1 = 0.1 * jax.random.normal(kb1, (C,), jnp.float32)
        w2 = 0.1 * jax.random.normal(kw2, (C, C, 3, 3), jnp.float32)
        b2 = 0.1 * jax.random.normal(kb2, (C,), jnp.float32)

        ref = ref_resnet_block(x, w1, b1, w2, b2)
        out = jax.block_until_ready(
            resnet_block(x, w1, b1, w2, b2, compute_dtype=compute_dtype))
        assert out.shape == (N, C, H, W)
        assert jnp.allclose(out, ref, atol=tol, rtol=tol), \
            f"{compute_dtype} max err {jnp.max(jnp.abs(out - ref))}"

    # Primary small config (single band): tight f32 check + bf16 production path.
    run_case(2, 4, 16, 16, jnp.float32, 5e-4)
    run_case(2, 4, 16, 16, jnp.bfloat16, 5e-2)
    # Multi-band path (nb > 1) with N=1: exercises halos + cross-band stats.
    run_case(1, 8, 32, 32, jnp.float32, 2e-3)

    print("KERNEL_OK")
</pallas_src>

<mosaic_0001>
module attributes {stable_mosaic.version = 11 : i64} {
  func.func @resnet_block_kernel(%arg0: i32, %arg1: memref<1x16x16x4xf32, #tpu.memory_space<vmem>>, %arg2: memref<36x4xf32, #tpu.memory_space<vmem>>, %arg3: memref<36x4xf32, #tpu.memory_space<vmem>>, %arg4: memref<1x16x16x4xf32, #tpu.memory_space<vmem>>, %arg5: memref<16x16x4xf32, #tpu.memory_space<vmem>>, %arg6: memref<16x16x4xf32, #tpu.memory_space<vmem>>) attributes {dimension_semantics = [#tpu.dimension_semantics<parallel>], iteration_bounds = array<i64: 2>, scalar_prefetch = 0 : i64, scratch_operands = 2 : i64, tpu.core_type = #tpu.core_type<tc>, window_params = [{pipeline_mode = #tpu.pipeline_mode<synchronous>, transform_indices = @transform_0, window_bounds = array<i64: 1, 16, 16, 4>}, {pipeline_mode = #tpu.pipeline_mode<synchronous>, transform_indices = @transform_1, window_bounds = array<i64: 36, 4>}, {pipeline_mode = #tpu.pipeline_mode<synchronous>, transform_indices = @transform_2, window_bounds = array<i64: 36, 4>}, {pipeline_mode = #tpu.pipeline_mode<synchronous>, transform_indices = @transform_3, window_bounds = array<i64: 1, 16, 16, 4>}]} {
    %0 = tpu.iota {dimensions = array<i32: 0>} : vector<256x1xi32>
    %c16_i32 = arith.constant 16 : i32
    %c0_i32 = arith.constant 0 : i32
    %1 = arith.cmpi eq, %c16_i32, %c0_i32 : i32
    %c1_i32 = arith.constant 1 : i32
    %2 = arith.select %1, %c1_i32, %c16_i32 : i32
    %3 = vector.broadcast %2 : i32 to vector<256x1xi32>
    %4 = arith.remsi %0, %3 : vector<256x1xi32>
    %c0_i32_0 = arith.constant 0 : i32
    %5 = vector.broadcast %c0_i32_0 : i32 to vector<256x1xi32>
    %6 = arith.cmpi ne, %4, %5 : vector<256x1xi32>
    %c0_i32_1 = arith.constant 0 : i32
    %7 = vector.broadcast %c0_i32_1 : i32 to vector<256x1xi32>
    %8 = arith.cmpi slt, %4, %7 : vector<256x1xi32>
    %c0_i32_2 = arith.constant 0 : i32
    %9 = arith.cmpi slt, %2, %c0_i32_2 : i32
    %10 = vector.broadcast %9 : i1 to vector<256x1xi1>
    %11 = vector.broadcast %10 : vector<256x1xi1> to vector<256x1xi1>
    %12 = arith.xori %8, %11 : vector<256x1xi1>
    %13 = arith.andi %12, %6 : vector<256x1xi1>
    %14 = vector.broadcast %2 : i32 to vector<256x1xi32>
    %15 = arith.addi %4, %14 : vector<256x1xi32>
    %16 = arith.select %13, %15, %4 : vector<256x1xi1>, vector<256x1xi32>
    %c0_i32_3 = arith.constant 0 : i32
    %17 = vector.broadcast %c0_i32_3 : i32 to vector<256x1xi32>
    %18 = arith.cmpi eq, %16, %17 : vector<256x1xi32>
    %c15_i32 = arith.constant 15 : i32
    %19 = vector.broadcast %c15_i32 : i32 to vector<256x1xi32>
    %20 = arith.cmpi eq, %16, %19 : vector<256x1xi32>
    %cst = arith.constant 0.000000e+00 : f32
    %21 = vector.broadcast %cst : f32 to vector<1x4xf32>
    %c0_i32_4 = arith.constant 0 : i32
    %c0_i32_5 = arith.constant 0 : i32
    %22 = arith.cmpi eq, %c0_i32_4, %c0_i32_5 : i32
    %c16_i32_6 = arith.constant 16 : i32
    %23 = arith.muli %c0_i32_4, %c16_i32_6 : i32
    %c1_i32_7 = arith.constant 1 : i32
    %24 = arith.subi %23, %c1_i32_7 : i32
    %c1_i32_8 = arith.constant 1 : i32
    %25 = arith.select %22, %c1_i32_8, %24 : i32
    %c0_i32_9 = arith.constant 0 : i32
    %26 = arith.cmpi eq, %c0_i32_4, %c0_i32_9 : i32
    %c1_i32_10 = arith.constant 1 : i32
    %27 = arith.addi %c0_i32_4, %c1_i32_10 : i32
    %c16_i32_11 = arith.constant 16 : i32
    %28 = arith.muli %27, %c16_i32_11 : i32
    %c14_i32 = arith.constant 14 : i32
    %29 = arith.select %26, %c14_i32, %28 : i32
    %c0 = arith.constant 0 : index
    %30 = arith.index_cast %25 : i32 to index
    %c0_12 = arith.constant 0 : index
    %c0_13 = arith.constant 0 : index
    %31 = vector.load %arg1[%c0, %30, %c0_12, %c0_13] : memref<1x16x16x4xf32, #tpu.memory_space<vmem>>, vector<1x1x16x4xf32>
    %32 = vector.shape_cast %31 : vector<1x1x16x4xf32> to vector<1x16x4xf32>
    %c16_i32_14 = arith.constant 16 : i32
    %33 = arith.muli %c0_i32_4, %c16_i32_14 : i32
    %c0_15 = arith.constant 0 : index
    %34 = arith.index_cast %33 : i32 to index
    %c0_16 = arith.constant 0 : index
    %c0_17 = arith.constant 0 : index
    %35 = vector.load %arg1[%c0_15, %34, %c0_16, %c0_17] : memref<1x16x16x4xf32, #tpu.memory_space<vmem>>, vector<1x16x16x4xf32>
    %36 = vector.shape_cast %35 : vector<1x16x16x4xf32> to vector<16x16x4xf32>
    %c0_18 = arith.constant 0 : index
    %37 = arith.index_cast %29 : i32 to index
    %c0_19 = arith.constant 0 : index
    %c0_20 = arith.constant 0 : index
    %38 = vector.load %arg1[%c0_18, %37, %c0_19, %c0_20] : memref<1x16x16x4xf32, #tpu.memory_space<vmem>>, vector<1x1x16x4xf32>
    %39 = vector.shape_cast %38 : vector<1x1x16x4xf32> to vector<1x16x4xf32>
    %40 = tpu.concatenate %32, %36, %39 in 0 : vector<1x16x4xf32>, vector<16x16x4xf32>, vector<1x16x4xf32> -> vector<18x16x4xf32>
    %41 = vector.extract_strided_slice %40 {offsets = [0, 0, 0], sizes = [16, 16, 4], strides = [1, 1, 1]} : vector<18x16x4xf32> to vector<16x16x4xf32>
    %42 = vector.shape_cast %41 : vector<16x16x4xf32> to vector<256x4xf32>
    %c1_i32_21 = arith.constant 1 : i32
    %43 = tpu.dynamic_rotate %42 by %c1_i32_21 dim 0 : vector<256x4xf32>, i32 -> vector<256x4xf32>
    %c255_i32 = arith.constant 255 : i32
    %44 = tpu.dynamic_rotate %42 by %c255_i32 dim 0 : vector<256x4xf32>, i32 -> vector<256x4xf32>
    %45 = vector.shape_cast %18 : vector<256x1xi1> to vector<256x1xi1>
    %46 = vector.broadcast %45 : vector<256x1xi1> to vector<256x4xi1>
    %47 = arith.select %46, %44, %43 : vector<256x4xi1>, vector<256x4xf32>
    %48 = vector.shape_cast %20 : vector<256x1xi1> to vector<256x1xi1>
    %49 = vector.broadcast %48 : vector<256x1xi1> to vector<256x4xi1>
    %50 = arith.select %49, %43, %44 : vector<256x4xi1>, vector<256x4xf32>
    %51 = vector.extract_strided_slice %40 {offsets = [1, 0, 0], sizes = [16, 16, 4], strides = [1, 1, 1]} : vector<18x16x4xf32> to vector<16x16x4xf32>
    %52 = vector.shape_cast %51 : vector<16x16x4xf32> to vector<256x4xf32>
    %c1_i32_22 = arith.constant 1 : i32
    %53 = tpu.dynamic_rotate %52 by %c1_i32_22 dim 0 : vector<256x4xf32>, i32 -> vector<256x4xf32>
    %c255_i32_23 = arith.constant 255 : i32
    %54 = tpu.dynamic_rotate %52 by %c255_i32_23 dim 0 : vector<256x4xf32>, i32 -> vector<256x4xf32>
    %55 = vector.shape_cast %18 : vector<256x1xi1> to vector<256x1xi1>
    %56 = vector.broadcast %55 : vector<256x1xi1> to vector<256x4xi1>
    %57 = arith.select %56, %54, %53 : vector<256x4xi1>, vector<256x4xf32>
    %58 = vector.shape_cast %20 : vector<256x1xi1> to vector<256x1xi1>
    %59 = vector.broadcast %58 : vector<256x1xi1> to vector<256x4xi1>
    %60 = arith.select %59, %53, %54 : vector<256x4xi1>, vector<256x4xf32>
    %61 = vector.extract_strided_slice %40 {offsets = [2, 0, 0], sizes = [16, 16, 4], strides = [1, 1, 1]} : vector<18x16x4xf32> to vector<16x16x4xf32>
    %62 = vector.shape_cast %61 : vector<16x16x4xf32> to vector<256x4xf32>
    %c1_i32_24 = arith.constant 1 : i32
    %63 = tpu.dynamic_rotate %62 by %c1_i32_24 dim 0 : vector<256x4xf32>, i32 -> vector<256x4xf32>
    %c255_i32_25 = arith.constant 255 : i32
    %64 = tpu.dynamic_rotate %62 by %c255_i32_25 dim 0 : vector<256x4xf32>, i32 -> vector<256x4xf32>
    %65 = vector.shape_cast %18 : vector<256x1xi1> to vector<256x1xi1>
    %66 = vector.broadcast %65 : vector<256x1xi1> to vector<256x4xi1>
    %67 = arith.select %66, %64, %63 : vector<256x4xi1>, vector<256x4xf32>
    %68 = vector.shape_cast %20 : vector<256x1xi1> to vector<256x1xi1>
    %69 = vector.broadcast %68 : vector<256x1xi1> to vector<256x4xi1>
    %70 = arith.select %69, %63, %64 : vector<256x4xi1>, vector<256x4xf32>
    %71 = tpu.concatenate %47, %42, %50, %57, %52, %60, %67, %62, %70 in 1 : vector<256x4xf32>, vector<256x4xf32>, vector<256x4xf32>, vector<256x4xf32>, vector<256x4xf32>, vector<256x4xf32>, vector<256x4xf32>, vector<256x4xf32>, vector<256x4xf32> -> vector<256x36xf32>
    %c0_26 = arith.constant 0 : index
    %c0_27 = arith.constant 0 : index
    %72 = vector.load %arg2[%c0_26, %c0_27] : memref<36x4xf32, #tpu.memory_space<vmem>>, vector<36x4xf32>
    %cst_28 = arith.constant dense<0.000000e+00> : vector<256x4xf32>
    %73 = tpu.matmul %71, %72, %cst_28 {dimension_numbers = #tpu.dot_dimension_numbers<[1], [0], [0], [1], [0, 0, 1, 1], [], []>} : vector<256x36xf32>, vector<36x4xf32>, vector<256x4xf32> -> vector<256x4xf32>
    %74 = vector.shape_cast %73 : vector<256x4xf32> to vector<16x16x4xf32>
    %c16_i32_29 = arith.constant 16 : i32
    %75 = arith.muli %c0_i32_4, %c16_i32_29 : i32
    %76 = arith.index_cast %75 : i32 to index
    %c0_30 = arith.constant 0 : index
    %c0_31 = arith.constant 0 : index
    %77 = vector.load %arg5[%76, %c0_30, %c0_31] : memref<16x16x4xf32, #tpu.memory_space<vmem>>, vector<16x16x4xf32>
    tpu.vector_store %arg5[%76, %c0_30, %c0_31], %74 {strides = array<i32>} : memref<16x16x4xf32, #tpu.memory_space<vmem>>, vector<16x16x4xf32>,
    %cst_32 = arith.constant dense<0.000000e+00> : vector<4xf32>
    %78 = vector.multi_reduction <add>, %73, %cst_32 [0] : vector<256x4xf32> to vector<4xf32>
    %79 = vector.shape_cast %78 : vector<4xf32> to vector<1x4xf32>
    %80 = arith.addf %21, %79 : vector<1x4xf32>
    %81 = arith.mulf %73, %73 : vector<256x4xf32>
    %cst_33 = arith.constant dense<0.000000e+00> : vector<4xf32>
    %82 = vector.multi_reduction <add>, %81, %cst_33 [0] : vector<256x4xf32> to vector<4xf32>
    %83 = vector.shape_cast %82 : vector<4xf32> to vector<1x4xf32>
    %84 = arith.addf %21, %83 : vector<1x4xf32>
    %c1_i32_34 = arith.constant 1 : i32
    %cst_35 = arith.constant 2.560000e+02 : f32
    %85 = vector.broadcast %cst_35 : f32 to vector<1x4xf32>
    %86 = arith.divf %80, %85 : vector<1x4xf32>
    %cst_36 = arith.constant 2.560000e+02 : f32
    %87 = vector.broadcast %cst_36 : f32 to vector<1x4xf32>
    %88 = arith.divf %84, %87 : vector<1x4xf32>
    %89 = arith.mulf %86, %86 : vector<1x4xf32>
    %90 = arith.subf %88, %89 : vector<1x4xf32>
    %cst_37 = arith.constant 0.000000e+00 : f32
    %91 = vector.broadcast %cst_37 : f32 to vector<1x4xf32>
    %92 = arith.maximumf %90, %91 : vector<1x4xf32>
    %cst_38 = arith.constant 9.99999974E-6 : f32
    %93 = vector.broadcast %cst_38 : f32 to vector<1x4xf32>
    %94 = arith.addf %92, %93 : vector<1x4xf32>
    %95 = math.rsqrt %94 : vector<1x4xf32>
    %c0_i32_39 = arith.constant 0 : i32
    %c0_i32_40 = arith.constant 0 : i32
    %96 = arith.cmpi eq, %c0_i32_39, %c0_i32_40 : i32
    %c16_i32_41 = arith.constant 16 : i32
    %97 = arith.muli %c0_i32_39, %c16_i32_41 : i32
    %c1_i32_42 = arith.constant 1 : i32
    %98 = arith.subi %97, %c1_i32_42 : i32
    %c1_i32_43 = arith.constant 1 : i32
    %99 = arith.select %96, %c1_i32_43, %98 : i32
    %c0_i32_44 = arith.constant 0 : i32
    %100 = arith.cmpi eq, %c0_i32_39, %c0_i32_44 : i32
    %c1_i32_45 = arith.constant 1 : i32
    %101 = arith.addi %c0_i32_39, %c1_i32_45 : i32
    %c16_i32_46 = arith.constant 16 : i32
    %102 = arith.muli %101, %c16_i32_46 : i32
    %c14_i32_47 = arith.constant 14 : i32
    %103 = arith.select %100, %c14_i32_47, %102 : i32
    %104 = arith.index_cast %99 : i32 to index
    %c0_48 = arith.constant 0 : index
    %c0_49 = arith.constant 0 : index
    %105 = vector.load %arg5[%104, %c0_48, %c0_49] : memref<16x16x4xf32, #tpu.memory_space<vmem>>, vector<1x16x4xf32>
    %c16_i32_50 = arith.constant 16 : i32
    %106 = arith.muli %c0_i32_39, %c16_i32_50 : i32
    %107 = arith.index_cast %106 : i32 to index
    %c0_51 = arith.constant 0 : index
    %c0_52 = arith.constant 0 : index
    %108 = vector.load %arg5[%107, %c0_51, %c0_52] : memref<16x16x4xf32, #tpu.memory_space<vmem>>, vector<16x16x4xf32>
    %109 = arith.index_cast %103 : i32 to index
    %c0_53 = arith.constant 0 : index
    %c0_54 = arith.constant 0 : index
    %110 = vector.load %arg5[%109, %c0_53, %c0_54] : memref<16x16x4xf32, #tpu.memory_space<vmem>>, vector<1x16x4xf32>
    %111 = tpu.concatenate %105, %108, %110 in 0 : vector<1x16x4xf32>, vector<16x16x4xf32>, vector<1x16x4xf32> -> vector<18x16x4xf32>
    %112 = vector.shape_cast %86 : vector<1x4xf32> to vector<1x1x4xf32>
    %113 = vector.broadcast %112 : vector<1x1x4xf32> to vector<18x16x4xf32>
    %114 = arith.subf %111, %113 : vector<18x16x4xf32>
    %115 = vector.shape_cast %95 : vector<1x4xf32> to vector<1x1x4xf32>
    %116 = vector.broadcast %115 : vector<1x1x4xf32> to vector<18x16x4xf32>
    %117 = arith.mulf %114, %116 : vector<18x16x4xf32>
    %cst_55 = arith.constant 0.000000e+00 : f32
    %118 = vector.broadcast %cst_55 : f32 to vector<18x16x4xf32>
    %119 = arith.maximumf %117, %118 : vector<18x16x4xf32>
    %120 = vector.extract_strided_slice %119 {offsets = [0, 0, 0], sizes = [16, 16, 4], strides = [1, 1, 1]} : vector<18x16x4xf32> to vector<16x16x4xf32>
    %121 = vector.shape_cast %120 : vector<16x16x4xf32> to vector<256x4xf32>
    %c1_i32_56 = arith.constant 1 : i32
    %122 = tpu.dynamic_rotate %121 by %c1_i32_56 dim 0 : vector<256x4xf32>, i32 -> vector<256x4xf32>
    %c255_i32_57 = arith.constant 255 : i32
    %123 = tpu.dynamic_rotate %121 by %c255_i32_57 dim 0 : vector<256x4xf32>, i32 -> vector<256x4xf32>
    %124 = vector.shape_cast %18 : vector<256x1xi1> to vector<256x1xi1>
    %125 = vector.broadcast %124 : vector<256x1xi1> to vector<256x4xi1>
    %126 = arith.select %125, %123, %122 : vector<256x4xi1>, vector<256x4xf32>
    %127 = vector.shape_cast %20 : vector<256x1xi1> to vector<256x1xi1>
    %128 = vector.broadcast %127 : vector<256x1xi1> to vector<256x4xi1>
    %129 = arith.select %128, %122, %123 : vector<256x4xi1>, vector<256x4xf32>
    %130 = vector.extract_strided_slice %119 {offsets = [1, 0, 0], sizes = [16, 16, 4], strides = [1, 1, 1]} : vector<18x16x4xf32> to vector<16x16x4xf32>
    %131 = vector.shape_cast %130 : vector<16x16x4xf32> to vector<256x4xf32>
    %c1_i32_58 = arith.constant 1 : i32
    %132 = tpu.dynamic_rotate %131 by %c1_i32_58 dim 0 : vector<256x4xf32>, i32 -> vector<256x4xf32>
    %c255_i32_59 = arith.constant 255 : i32
    %133 = tpu.dynamic_rotate %131 by %c255_i32_59 dim 0 : vector<256x4xf32>, i32 -> vector<256x4xf32>
    %134 = vector.shape_cast %18 : vector<256x1xi1> to vector<256x1xi1>
    %135 = vector.broadcast %134 : vector<256x1xi1> to vector<256x4xi1>
    %136 = arith.select %135, %133, %132 : vector<256x4xi1>, vector<256x4xf32>
    %137 = vector.shape_cast %20 : vector<256x1xi1> to vector<256x1xi1>
    %138 = vector.broadcast %137 : vector<256x1xi1> to vector<256x4xi1>
    %139 = arith.select %138, %132, %133 : vector<256x4xi1>, vector<256x4xf32>
    %140 = vector.extract_strided_slice %119 {offsets = [2, 0, 0], sizes = [16, 16, 4], strides = [1, 1, 1]} : vector<18x16x4xf32> to vector<16x16x4xf32>
    %141 = vector.shape_cast %140 : vector<16x16x4xf32> to vector<256x4xf32>
    %c1_i32_60 = arith.constant 1 : i32
    %142 = tpu.dynamic_rotate %141 by %c1_i32_60 dim 0 : vector<256x4xf32>, i32 -> vector<256x4xf32>
    %c255_i32_61 = arith.constant 255 : i32
    %143 = tpu.dynamic_rotate %141 by %c255_i32_61 dim 0 : vector<256x4xf32>, i32 -> vector<256x4xf32>
    %144 = vector.shape_cast %18 : vector<256x1xi1> to vector<256x1xi1>
    %145 = vector.broadcast %144 : vector<256x1xi1> to vector<256x4xi1>
    %146 = arith.select %145, %143, %142 : vector<256x4xi1>, vector<256x4xf32>
    %147 = vector.shape_cast %20 : vector<256x1xi1> to vector<256x1xi1>
    %148 = vector.broadcast %147 : vector<256x1xi1> to vector<256x4xi1>
    %149 = arith.select %148, %142, %143 : vector<256x4xi1>, vector<256x4xf32>
    %150 = tpu.concatenate %126, %121, %129, %136, %131, %139, %146, %141, %149 in 1 : vector<256x4xf32>, vector<256x4xf32>, vector<256x4xf32>, vector<256x4xf32>, vector<256x4xf32>, vector<256x4xf32>, vector<256x4xf32>, vector<256x4xf32>, vector<256x4xf32> -> vector<256x36xf32>
    %c0_62 = arith.constant 0 : index
    %c0_63 = arith.constant 0 : index
    %151 = vector.load %arg3[%c0_62, %c0_63] : memref<36x4xf32, #tpu.memory_space<vmem>>, vector<36x4xf32>
    %cst_64 = arith.constant dense<0.000000e+00> : vector<256x4xf32>
    %152 = tpu.matmul %150, %151, %cst_64 {dimension_numbers = #tpu.dot_dimension_numbers<[1], [0], [0], [1], [0, 0, 1, 1], [], []>} : vector<256x36xf32>, vector<36x4xf32>, vector<256x4xf32> -> vector<256x4xf32>
    %153 = vector.shape_cast %152 : vector<256x4xf32> to vector<16x16x4xf32>
    %c16_i32_65 = arith.constant 16 : i32
    %154 = arith.muli %c0_i32_39, %c16_i32_65 : i32
    %155 = arith.index_cast %154 : i32 to index
    %c0_66 = arith.constant 0 : index
    %c0_67 = arith.constant 0 : index
    %156 = vector.load %arg6[%155, %c0_66, %c0_67] : memref<16x16x4xf32, #tpu.memory_space<vmem>>, vector<16x16x4xf32>
    tpu.vector_store %arg6[%155, %c0_66, %c0_67], %153 {strides = array<i32>} : memref<16x16x4xf32, #tpu.memory_space<vmem>>, vector<16x16x4xf32>,
    %cst_68 = arith.constant dense<0.000000e+00> : vector<4xf32>
    %157 = vector.multi_reduction <add>, %152, %cst_68 [0] : vector<256x4xf32> to vector<4xf32>
    %158 = vector.shape_cast %157 : vector<4xf32> to vector<1x4xf32>
    %159 = arith.addf %21, %158 : vector<1x4xf32>
    %160 = arith.mulf %152, %152 : vector<256x4xf32>
    %cst_69 = arith.constant dense<0.000000e+00> : vector<4xf32>
    %161 = vector.multi_reduction <add>, %160, %cst_69 [0] : vector<256x4xf32> to vector<4xf32>
    %162 = vector.shape_cast %161 : vector<4xf32> to vector<1x4xf32>
    %163 = arith.addf %21, %162 : vector<1x4xf32>
    %c1_i32_70 = arith.constant 1 : i32
    %cst_71 = arith.constant 2.560000e+02 : f32
    %164 = vector.broadcast %cst_71 : f32 to vector<1x4xf32>
    %165 = arith.divf %159, %164 : vector<1x4xf32>
    %cst_72 = arith.constant 2.560000e+02 : f32
    %166 = vector.broadcast %cst_72 : f32 to vector<1x4xf32>
    %167 = arith.divf %163, %166 : vector<1x4xf32>
    %168 = arith.mulf %165, %165 : vector<1x4xf32>
    %169 = arith.subf %167, %168 : vector<1x4xf32>
    %cst_73 = arith.constant 0.000000e+00 : f32
    %170 = vector.broadcast %cst_73 : f32 to vector<1x4xf32>
    %171 = arith.maximumf %169, %170 : vector<1x4xf32>
    %cst_74 = arith.constant 9.99999974E-6 : f32
    %172 = vector.broadcast %cst_74 : f32 to vector<1x4xf32>
    %173 = arith.addf %171, %172 : vector<1x4xf32>
    %174 = math.rsqrt %173 : vector<1x4xf32>
    %c0_i32_75 = arith.constant 0 : i32
    %c16_i32_76 = arith.constant 16 : i32
    %175 = arith.muli %c0_i32_75, %c16_i32_76 : i32
    %176 = arith.index_cast %175 : i32 to index
    %c0_77 = arith.constant 0 : index
    %c0_78 = arith.constant 0 : index
    %177 = vector.load %arg6[%176, %c0_77, %c0_78] : memref<16x16x4xf32, #tpu.memory_space<vmem>>, vector<16x16x4xf32>
    %178 = vector.shape_cast %165 : vector<1x4xf32> to vector<1x1x4xf32>
    %179 = vector.broadcast %178 : vector<1x1x4xf32> to vector<16x16x4xf32>
    %180 = arith.subf %177, %179 : vector<16x16x4xf32>
    %181 = vector.shape_cast %174 : vector<1x4xf32> to vector<1x1x4xf32>
    %182 = vector.broadcast %181 : vector<1x1x4xf32> to vector<16x16x4xf32>
    %183 = arith.mulf %180, %182 : vector<16x16x4xf32>
    %c16_i32_79 = arith.constant 16 : i32
    %184 = arith.muli %c0_i32_75, %c16_i32_79 : i32
    %c0_80 = arith.constant 0 : index
    %185 = arith.index_cast %184 : i32 to index
    %c0_81 = arith.constant 0 : index
    %c0_82 = arith.constant 0 : index
    %186 = vector.load %arg1[%c0_80, %185, %c0_81, %c0_82] : memref<1x16x16x4xf32, #tpu.memory_space<vmem>>, vector<1x16x16x4xf32>
    %187 = vector.shape_cast %186 : vector<1x16x16x4xf32> to vector<16x16x4xf32>
    %188 = arith.addf %187, %183 : vector<16x16x4xf32>
    %c16_i32_83 = arith.constant 16 : i32
    %189 = arith.muli %c0_i32_75, %c16_i32_83 : i32
    %c0_84 = arith.constant 0 : index
    %190 = arith.index_cast %189 : i32 to index
    %c0_85 = arith.constant 0 : index
    %c0_86 = arith.constant 0 : index
    %191 = vector.load %arg4[%c0_84, %190, %c0_85, %c0_86] : memref<1x16x16x4xf32, #tpu.memory_space<vmem>>, vector<1x16x16x4xf32>
    %192 = vector.shape_cast %191 : vector<1x16x16x4xf32> to vector<16x16x4xf32>
    %193 = vector.shape_cast %188 : vector<16x16x4xf32> to vector<1x16x16x4xf32>
    tpu.vector_store %arg4[%c0_84, %190, %c0_85, %c0_86], %193 {strides = array<i32>} : memref<1x16x16x4xf32, #tpu.memory_space<vmem>>, vector<1x16x16x4xf32>,
    %c1_i32_87 = arith.constant 1 : i32
    return
  }
  func.func @transform_0(%arg0: i32) -> (i32, i32, i32, i32) {
    %c0_i32 = arith.constant 0 : i32
    %c0_i32_0 = arith.constant 0 : i32
    %c0_i32_1 = arith.constant 0 : i32
    %c0_i32_2 = arith.constant 0 : i32
    return %arg0, %c0_i32, %c0_i32_0, %c0_i32_1 : i32, i32, i32, i32
  }
  func.func @transform_1(%arg0: i32) -> (i32, i32) {
    %c0_i32 = arith.constant 0 : i32
    %c0_i32_0 = arith.constant 0 : i32
    %c0_i32_1 = arith.constant 0 : i32
    return %c0_i32, %c0_i32_0 : i32, i32
  }
  func.func @transform_2(%arg0: i32) -> (i32, i32) {
    %c0_i32 = arith.constant 0 : i32
    %c0_i32_0 = arith.constant 0 : i32
    %c0_i32_1 = arith.constant 0 : i32
    return %c0_i32, %c0_i32_0 : i32, i32
  }
  func.func @transform_3(%arg0: i32) -> (i32, i32, i32, i32) {
    %c0_i32 = arith.constant 0 : i32
    %c0_i32_0 = arith.constant 0 : i32
    %c0_i32_1 = arith.constant 0 : i32
    %c0_i32_2 = arith.constant 0 : i32
    return %arg0, %c0_i32, %c0_i32_0, %c0_i32_1 : i32, i32, i32, i32
  }
}

</mosaic_0001>

<llo_original>
// kernel: tpu_custom_call.1
$region0: #{tpu_custom_call.1}
  #allocation0 [shape = 'u32[]', space=smem, size = 0x4, offset = 0x4, fixed_abs, tag = 'smem constant byte address 0x4 - core index']
  #allocation1 [shape = 'u32[144,128]{1,0:T(1,128)}', space=vmem, size = 0x12000, scoped, tag = 'internal scratch']
  #allocation2 [shape = 'f32[16,16,4]{2,1,0:T(8,128)}', space=vmem, size = 0x20000, scoped, tag = 'scratch operand']
  #allocation3 [shape = 'f32[16,16,4]{2,1,0:T(8,128)}', space=vmem, size = 0x20000, scoped, tag = 'scratch operand']
  %s0 = inlined_call_operand.vmem [shape: f32[2,16,16,4], index: 0, kind: input, shape index: {}]
  %s1 = inlined_call_operand.vmem [shape: f32[36,4], index: 1, kind: input, shape index: {}]
  %s2 = inlined_call_operand.vmem [shape: f32[36,4], index: 2, kind: input, shape index: {}]
  %s3 = inlined_call_operand.vmem [shape: f32[2,16,16,4], index: 3, kind: output, shape index: {}]
  %s4 = sld [smem:[#allocation0]]
  $region45: #{tpu_custom_call.1} parent=0
    _
  %s6 = ssub.s32 1, %s4
  %s7 = scalar_select 0, %s6, %s4
  loop: start=0, step=1, limit=4
  $region2: #{tpu_custom_call.1} parent=0 // loop_pre_header
    _
  $region3: #{tpu_custom_call.1} parent=0 // loop_header
    %s9 = sphi 0, %s13
    %p10 = scmp.ge.s32.totalorder %s9, 4
    %s19 = sphi 0, %s21
    %s22 = sphi 0, %s19
    %s23 = sphi 0, %s22
    %s39 = sphi 0, %s23
    %s43 = sphi 0, %s43
    %s45 = sphi 0, %s43
    %s46 = sphi 0, %s45
    %s60 = sphi 0, %s46
    %s64 = sphi 0, %s64
    %s66 = sphi 0, %s64
    %s67 = sphi 0, %s66
    %s81 = sphi 0, %s67
    %s87 = sphi 0, %s89
    %s90 = sphi 0, %s87
    %s91 = sphi 0, %s90
    %s107 = sphi 0, %s91
  $region4: #{tpu_custom_call.1} parent=0 // loop_header_branch
    %12 = sbr.rel (%p10) target = $region8
  $region5: #{tpu_custom_call.1} parent=0 // loop_body
    %s14 = ssub.s32 %s9, 1
    %s15 = ssub.s32 %s9, 2
    %s16 = sadd.s32 %s9, 1
    %s17 = ssub.s32 %s9, %s16
    %p18 = scmp.eq.s32.totalorder %s17, 0
    %s20 = sadd.s32 %s19, 1
    %s21 = scalar_select %p18, %s19, %s20
    %p24 = pneg %p18
    %p25 = scmp.eq.s32.totalorder %s9, 1
    %p26 = por %p24, %p25
    %p27 = scmp.ne.s32.totalorder %s19, %s22
    %p28 = scmp.eq.s32.totalorder %s9, 0
    %p29 = por %p27, %p28
    %p30 = scmp.ne.s32.totalorder %s19, %s22
    %p31 = scmp.eq.s32.totalorder %s14, 1
    %p32 = por %p30, %p31
    %p33 = scmp.ne.s32.totalorder %s22, %s23
    %p34 = scmp.eq.s32.totalorder %s14, 0
    %p35 = por %p33, %p34
    %p36 = scmp.ne.s32.totalorder %s22, %s23
    %p37 = scmp.eq.s32.totalorder %s15, 1
    %p38 = por %p36, %p37
    %p40 = scmp.ne.s32.totalorder %s23, %s39
    %p41 = scmp.eq.s32.totalorder %s15, 0
    %p42 = por %p40, %p41
    %s44 = sadd.s32 %s43, 1
    %p47 = scmp.eq.s32.totalorder %s9, 1
    %p48 = scmp.ne.s32.totalorder %s43, %s45
    %p49 = scmp.eq.s32.totalorder %s9, 0
    %p50 = por %p48, %p49
    %p51 = scmp.ne.s32.totalorder %s43, %s45
    %p52 = scmp.eq.s32.totalorder %s14, 1
    %p53 = por %p51, %p52
    %p54 = scmp.ne.s32.totalorder %s45, %s46
    %p55 = scmp.eq.s32.totalorder %s14, 0
    %p56 = por %p54, %p55
    %p57 = scmp.ne.s32.totalorder %s45, %s46
    %p58 = scmp.eq.s32.totalorder %s15, 1
    %p59 = por %p57, %p58
    %p61 = scmp.ne.s32.totalorder %s46, %s60
    %p62 = scmp.eq.s32.totalorder %s15, 0
    %p63 = por %p61, %p62
    %s65 = sadd.s32 %s64, 1
    %p68 = scmp.eq.s32.totalorder %s9, 1
    %p69 = scmp.ne.s32.totalorder %s64, %s66
    %p70 = scmp.eq.s32.totalorder %s9, 0
    %p71 = por %p69, %p70
    %p72 = scmp.ne.s32.totalorder %s64, %s66
    %p73 = scmp.eq.s32.totalorder %s14, 1
    %p74 = por %p72, %p73
    %p75 = scmp.ne.s32.totalorder %s66, %s67
    %p76 = scmp.eq.s32.totalorder %s14, 0
    %p77 = por %p75, %p76
    %p78 = scmp.ne.s32.totalorder %s66, %s67
    %p79 = scmp.eq.s32.totalorder %s15, 1
    %p80 = por %p78, %p79
    %p82 = scmp.ne.s32.totalorder %s67, %s81
    %p83 = scmp.eq.s32.totalorder %s15, 0
    %p84 = por %p82, %p83
    %s85 = ssub.s32 %s9, %s16
    %p86 = scmp.eq.s32.totalorder %s85, 0
    %s88 = sadd.s32 %s87, 1
    %s89 = scalar_select %p86, %s87, %s88
    %p92 = pneg %p86
    %p93 = scmp.eq.s32.totalorder %s9, 1
    %p94 = por %p92, %p93
    %p95 = scmp.ne.s32.totalorder %s87, %s90
    %p96 = scmp.eq.s32.totalorder %s9, 0
    %p97 = por %p95, %p96
    %p98 = scmp.ne.s32.totalorder %s87, %s90
    %p99 = scmp.eq.s32.totalorder %s14, 1
    %p100 = por %p98, %p99
    %p101 = scmp.ne.s32.totalorder %s90, %s91
    %p102 = scmp.eq.s32.totalorder %s14, 0
    %p103 = por %p101, %p102
    %p104 = scmp.ne.s32.totalorder %s90, %s91
    %p105 = scmp.eq.s32.totalorder %s15, 1
    %p106 = por %p104, %p105
    %p108 = scmp.ne.s32.totalorder %s91, %s107
    %p109 = scmp.eq.s32.totalorder %s15, 0
    %p110 = por %p108, %p109
    %p111 = scmp.le.s32.totalorder 1, %s9
    %p112 = scmp.lt.s32.totalorder %s9, 3
    %p113 = pnand %p111, %p112
    %p114 = pneg %p113
    // Predicated region
    $region9: #{tpu_custom_call.1} parent=5 // pred_check
      _
    $region10: #{tpu_custom_call.1} parent=5 // pred_check_branch
      %116 = sbr.rel (%p113) target = $region12
    $region11: #{tpu_custom_call.1} parent=5 // pred_region
      %s117 = ssub.s32 %s9, 1
      // Predicated region
      $region13: #{tpu_custom_call.1} parent=11 // pred_check
        %p118 = pneg %p35
      $region14: #{tpu_custom_call.1} parent=11 // pred_check_branch
        %120 = sbr.rel (%p118) target = $region16
      $region15: #{tpu_custom_call.1} parent=11 // pred_region
        %p121 = scmp.lt.s32.totalorder %s14, 1
        %s122 = scalar_select %p121, %s14, 1
        %s123 = smul.addr %s122, 32
        %s124 = smul.addr %s123, 8
        %s125 = scalar_lea.vmem %s0, %s124
      $region16: #{tpu_custom_call.1} parent=11 // pred_fallthru
        _
      // Predicated region
      $region17: #{tpu_custom_call.1} parent=11 // pred_check
        %p126 = pneg %p56
      $region18: #{tpu_custom_call.1} parent=11 // pred_check_branch
        %128 = sbr.rel (%p126) target = $region20
      $region19: #{tpu_custom_call.1} parent=11 // pred_region
        _
      $region20: #{tpu_custom_call.1} parent=11 // pred_fallthru
        _
      // Predicated region
      $region21: #{tpu_custom_call.1} parent=11 // pred_check
        %p129 = pneg %p77
      $region22: #{tpu_custom_call.1} parent=11 // pred_check_branch
        %131 = sbr.rel (%p129) target = $region24
      $region23: #{tpu_custom_call.1} parent=11 // pred_region
        _
      $region24: #{tpu_custom_call.1} parent=11 // pred_fallthru
        _
    $region12: #{tpu_custom_call.1} parent=5 // pred_fallthru
      _
    %p132 = scmp.lt.s32.totalorder %s9, 2
    // Predicated region
    $region25: #{tpu_custom_call.1} parent=5 // pred_check
      %p133 = pneg %p132
    $region26: #{tpu_custom_call.1} parent=5 // pred_check_branch
      %135 = sbr.rel (%p133) target = $region28
    $region27: #{tpu_custom_call.1} parent=5 // pred_region
      _
    $region28: #{tpu_custom_call.1} parent=5 // pred_fallthru
      _
    %p136 = scmp.le.s32.totalorder 1, %s9
    %p137 = scmp.lt.s32.totalorder %s9, 3
    %p138 = pnand %p136, %p137
    %p139 = pneg %p138
    // Predicated region
    $region29: #{tpu_custom_call.1} parent=5 // pred_check
      _
    $region30: #{tpu_custom_call.1} parent=5 // pred_check_branch
      %141 = sbr.rel (%p138) target = $region32
    $region31: #{tpu_custom_call.1} parent=5 // pred_region
      %s142 = ssub.s32 %s9, 1
      %p143 = scmp.lt.s32.totalorder %s14, 1
      %s144 = scalar_select %p143, %s14, 1
      %s145 = smul.addr %s144, 32
      %s146 = smul.addr %s145, 8
      %s147 = scalar_lea.vmem %s0, %s146
      %p148 = pneg %p35
      %p149 = pneg %p32
      %p150 = pneg %p56
      %p151 = pneg %p53
      %p152 = pneg %p77
      %p153 = pneg %p74
      %p154 = pneg %p103
      %p155 = pneg %p100
      %p156 = scmp.lt.s32.totalorder %s14, 1
      %s157 = scalar_select %p156, %s14, 1
      %s158 = smul.addr %s157, 32
      %s159 = smul.addr %s158, 8
      %s160 = scalar_lea.vmem %s3, %s159
      %p161 = scmp.lt.s32.totalorder %s14, 1
      %s162 = scalar_select %p161, %s14, 1
      %s163 = smul.addr %s162, 32
      %s164 = smul.addr %s163, 8
      %s165 = scalar_lea.vmem %s0, %s164
      %p166 = scmp.lt.s32.totalorder %s14, 1
      %s167 = scalar_select %p166, %s14, 1
      %s168 = smul.addr %s167, 32
      %s169 = smul.addr %s168, 8
      %s170 = scalar_lea.vmem %s3, %s169
      %v171 = vlaneseq
      %v172 = vshrl.u32 %v171, 7
      %v173 = vadd.s32 %v172, 8
      %v174 = vadd.s32 %v172, 16
      %v175 = vadd.s32 %v172, 24
      %v176 = vadd.s32 %v172, 32
      %v177 = vadd.s32 %v172, 40
      %v178 = vadd.s32 %v172, 48
      %v179 = vadd.s32 %v172, 56
      %v180 = vadd.s32 %v172, 64
      %v181 = vadd.s32 %v172, 72
      %v182 = vadd.s32 %v172, 80
      %v183 = vadd.s32 %v172, 88
      %v184 = vadd.s32 %v172, 96
      %v185 = vadd.s32 %v172, 104
      %v186 = vadd.s32 %v172, 112
      %v187 = vadd.s32 %v172, 120
      %v188 = vadd.s32 %v172, 128
      %v189 = vadd.s32 %v172, 136
      %v190 = vadd.s32 %v172, 144
      %v191 = vadd.s32 %v172, 152
      %v192 = vadd.s32 %v172, 160
      %v193 = vadd.s32 %v172, 168
      %v194 = vadd.s32 %v172, 176
      %v195 = vadd.s32 %v172, 184
      %v196 = vadd.s32 %v172, 192
      %v197 = vadd.s32 %v172, 200
      %v198 = vadd.s32 %v172, 208
      %v199 = vadd.s32 %v172, 216
      %v200 = vadd.s32 %v172, 224
      %v201 = vadd.s32 %v172, 232
      %v202 = vadd.s32 %v172, 240
      %v203 = vadd.s32 %v172, 248
      %vm204 = vcmp.lt.s32.totalorder %v172, 0
      %v205 = vsub.s32 0, %v172
      %v206 = vsel %vm204, %v205, %v172
      %v207 = vshrl.u32 %v206, 4
      %v208 = vand.u32 %v206, 15
      %v209 = vsub.s32 0, %v208
      %v210 = vsel %vm204, %v209, %v208
      %vm211 = vcmp.lt.s32.totalorder %v173, 0
      %v212 = vsub.s32 0, %v173
      %v213 = vsel %vm211, %v212, %v173
      %v214 = vshrl.u32 %v213, 4
      %v215 = vand.u32 %v213, 15
      %v216 = vsub.s32 0, %v215
      %v217 = vsel %vm211, %v216, %v215
      %vm218 = vcmp.lt.s32.totalorder %v174, 0
      %v219 = vsub.s32 0, %v174
      %v220 = vsel %vm218, %v219, %v174
      %v221 = vshrl.u32 %v220, 4
      %v222 = vand.u32 %v220, 15
      %v223 = vsub.s32 0, %v222
      %v224 = vsel %vm218, %v223, %v222
      %vm225 = vcmp.lt.s32.totalorder %v175, 0
      %v226 = vsub.s32 0, %v175
      %v227 = vsel %vm225, %v226, %v175
      %v228 = vshrl.u32 %v227, 4
      %v229 = vand.u32 %v227, 15
      %v230 = vsub.s32 0, %v229
      %v231 = vsel %vm225, %v230, %v229
      %vm232 = vcmp.lt.s32.totalorder %v176, 0
      %v233 = vsub.s32 0, %v176
      %v234 = vsel %vm232, %v233, %v176
      %v235 = vshrl.u32 %v234, 4
      %v236 = vand.u32 %v234, 15
      %v237 = vsub.s32 0, %v236
      %v238 = vsel %vm232, %v237, %v236
      %vm239 = vcmp.lt.s32.totalorder %v177, 0
      %v240 = vsub.s32 0, %v177
      %v241 = vsel %vm239, %v240, %v177
      %v242 = vshrl.u32 %v241, 4
      %v243 = vand.u32 %v241, 15
      %v244 = vsub.s32 0, %v243
      %v245 = vsel %vm239, %v244, %v243
      %vm246 = vcmp.lt.s32.totalorder %v178, 0
      %v247 = vsub.s32 0, %v178
      %v248 = vsel %vm246, %v247, %v178
      %v249 = vshrl.u32 %v248, 4
      %v250 = vand.u32 %v248, 15
      %v251 = vsub.s32 0, %v250
      %v252 = vsel %vm246, %v251, %v250
      %vm253 = vcmp.lt.s32.totalorder %v179, 0
      %v254 = vsub.s32 0, %v179
      %v255 = vsel %vm253, %v254, %v179
      %v256 = vshrl.u32 %v255, 4
      %v257 = vand.u32 %v255, 15
      %v258 = vsub.s32 0, %v257
      %v259 = vsel %vm253, %v258, %v257
      %vm260 = vcmp.lt.s32.totalorder %v180, 0
      %v261 = vsub.s32 0, %v180
      %v262 = vsel %vm260, %v261, %v180
      %v263 = vshrl.u32 %v262, 4
      %v264 = vand.u32 %v262, 15
      %v265 = vsub.s32 0, %v264
      %v266 = vsel %vm260, %v265, %v264
      %vm267 = vcmp.lt.s32.totalorder %v181, 0
      %v268 = vsub.s32 0, %v181
      %v269 = vsel %vm267, %v268, %v181
      %v270 = vshrl.u32 %v269, 4
      %v271 = vand.u32 %v269, 15
      %v272 = vsub.s32 0, %v271
      %v273 = vsel %vm267, %v272, %v271
      %vm274 = vcmp.lt.s32.totalorder %v182, 0
      %v275 = vsub.s32 0, %v182
      %v276 = vsel %vm274, %v275, %v182
      %v277 = vshrl.u32 %v276, 4
      %v278 = vand.u32 %v276, 15
      %v279 = vsub.s32 0, %v278
      %v280 = vsel %vm274, %v279, %v278
      %vm281 = vcmp.lt.s32.totalorder %v183, 0
      %v282 = vsub.s32 0, %v183
      %v283 = vsel %vm281, %v282, %v183
      %v284 = vshrl.u32 %v283, 4
      %v285 = vand.u32 %v283, 15
      %v286 = vsub.s32 0, %v285
      %v287 = vsel %vm281, %v286, %v285
      %vm288 = vcmp.lt.s32.totalorder %v184, 0
      %v289 = vsub.s32 0, %v184
      %v290 = vsel %vm288, %v289, %v184
      %v291 = vshrl.u32 %v290, 4
      %v292 = vand.u32 %v290, 15
      %v293 = vsub.s32 0, %v292
      %v294 = vsel %vm288, %v293, %v292
      %vm295 = vcmp.lt.s32.totalorder %v185, 0
      %v296 = vsub.s32 0, %v185
      %v297 = vsel %vm295, %v296, %v185
      %v298 = vshrl.u32 %v297, 4
      %v299 = vand.u32 %v297, 15
      %v300 = vsub.s32 0, %v299
      %v301 = vsel %vm295, %v300, %v299
      %vm302 = vcmp.lt.s32.totalorder %v186, 0
      %v303 = vsub.s32 0, %v186
      %v304 = vsel %vm302, %v303, %v186
      %v305 = vshrl.u32 %v304, 4
      %v306 = vand.u32 %v304, 15
      %v307 = vsub.s32 0, %v306
      %v308 = vsel %vm302, %v307, %v306
      %vm309 = vcmp.lt.s32.totalorder %v187, 0
      %v310 = vsub.s32 0, %v187
      %v311 = vsel %vm309, %v310, %v187
      %v312 = vshrl.u32 %v311, 4
      %v313 = vand.u32 %v311, 15
      %v314 = vsub.s32 0, %v313
      %v315 = vsel %vm309, %v314, %v313
      %vm316 = vcmp.lt.s32.totalorder %v188, 0
      %v317 = vsub.s32 0, %v188
      %v318 = vsel %vm316, %v317, %v188
      %v319 = vshrl.u32 %v318, 4
      %v320 = vand.u32 %v318, 15
      %v321 = vsub.s32 0, %v320
      %v322 = vsel %vm316, %v321, %v320
      %vm323 = vcmp.lt.s32.totalorder %v189, 0
      %v324 = vsub.s32 0, %v189
      %v325 = vsel %vm323, %v324, %v189
      %v326 = vshrl.u32 %v325, 4
      %v327 = vand.u32 %v325, 15
      %v328 = vsub.s32 0, %v327
      %v329 = vsel %vm323, %v328, %v327
      %vm330 = vcmp.lt.s32.totalorder %v190, 0
      %v331 = vsub.s32 0, %v190
      %v332 = vsel %vm330, %v331, %v190
      %v333 = vshrl.u32 %v332, 4
      %v334 = vand.u32 %v332, 15
      %v335 = vsub.s32 0, %v334
      %v336 = vsel %vm330, %v335, %v334
      %vm337 = vcmp.lt.s32.totalorder %v191, 0
      %v338 = vsub.s32 0, %v191
      %v339 = vsel %vm337, %v338, %v191
      %v340 = vshrl.u32 %v339, 4
      %v341 = vand.u32 %v339, 15
      %v342 = vsub.s32 0, %v341
      %v343 = vsel %vm337, %v342, %v341
      %vm344 = vcmp.lt.s32.totalorder %v192, 0
      %v345 = vsub.s32 0, %v192
      %v346 = vsel %vm344, %v345, %v192
      %v347 = vshrl.u32 %v346, 4
      %v348 = vand.u32 %v346, 15
      %v349 = vsub.s32 0, %v348
      %v350 = vsel %vm344, %v349, %v348
      %vm351 = vcmp.lt.s32.totalorder %v193, 0
      %v352 = vsub.s32 0, %v193
      %v353 = vsel %vm351, %v352, %v193
      %v354 = vshrl.u32 %v353, 4
      %v355 = vand.u32 %v353, 15
      %v356 = vsub.s32 0, %v355
      %v357 = vsel %vm351, %v356, %v355
      %vm358 = vcmp.lt.s32.totalorder %v194, 0
      %v359 = vsub.s32 0, %v194
      %v360 = vsel %vm358, %v359, %v194
      %v361 = vshrl.u32 %v360, 4
      %v362 = vand.u32 %v360, 15
      %v363 = vsub.s32 0, %v362
      %v364 = vsel %vm358, %v363, %v362
      %vm365 = vcmp.lt.s32.totalorder %v195, 0
      %v366 = vsub.s32 0, %v195
      %v367 = vsel %vm365, %v366, %v195
      %v368 = vshrl.u32 %v367, 4
      %v369 = vand.u32 %v367, 15
      %v370 = vsub.s32 0, %v369
      %v371 = vsel %vm365, %v370, %v369
      %vm372 = vcmp.lt.s32.totalorder %v196, 0
      %v373 = vsub.s32 0, %v196
      %v374 = vsel %vm372, %v373, %v196
      %v375 = vshrl.u32 %v374, 4
      %v376 = vand.u32 %v374, 15
      %v377 = vsub.s32 0, %v376
      %v378 = vsel %vm372, %v377, %v376
      %vm379 = vcmp.lt.s32.totalorder %v197, 0
      %v380 = vsub.s32 0, %v197
      %v381 = vsel %vm379, %v380, %v197
      %v382 = vshrl.u32 %v381, 4
      %v383 = vand.u32 %v381, 15
      %v384 = vsub.s32 0, %v383
      %v385 = vsel %vm379, %v384, %v383
      %vm386 = vcmp.lt.s32.totalorder %v198, 0
      %v387 = vsub.s32 0, %v198
      %v388 = vsel %vm386, %v387, %v198
      %v389 = vshrl.u32 %v388, 4
      %v390 = vand.u32 %v388, 15
      %v391 = vsub.s32 0, %v390
      %v392 = vsel %vm386, %v391, %v390
      %vm393 = vcmp.lt.s32.totalorder %v199, 0
      %v394 = vsub.s32 0, %v199
      %v395 = vsel %vm393, %v394, %v199
      %v396 = vshrl.u32 %v395, 4
      %v397 = vand.u32 %v395, 15
      %v398 = vsub.s32 0, %v397
      %v399 = vsel %vm393, %v398, %v397
      %vm400 = vcmp.lt.s32.totalorder %v200, 0
      %v401 = vsub.s32 0, %v200
      %v402 = vsel %vm400, %v401, %v200
      %v403 = vshrl.u32 %v402, 4
      %v404 = vand.u32 %v402, 15
      %v405 = vsub.s32 0, %v404
      %v406 = vsel %vm400, %v405, %v404
      %vm407 = vcmp.lt.s32.totalorder %v201, 0
      %v408 = vsub.s32 0, %v201
      %v409 = vsel %vm407, %v408, %v201
      %v410 = vshrl.u32 %v409, 4
      %v411 = vand.u32 %v409, 15
      %v412 = vsub.s32 0, %v411
      %v413 = vsel %vm407, %v412, %v411
      %vm414 = vcmp.lt.s32.totalorder %v202, 0
      %v415 = vsub.s32 0, %v202
      %v416 = vsel %vm414, %v415, %v202
      %v417 = vshrl.u32 %v416, 4
      %v418 = vand.u32 %v416, 15
      %v419 = vsub.s32 0, %v418
      %v420 = vsel %vm414, %v419, %v418
      %vm421 = vcmp.lt.s32.totalorder %v203, 0
      %v422 = vsub.s32 0, %v203
      %v423 = vsel %vm421, %v422, %v203
      %v424 = vshrl.u32 %v423, 4
      %v425 = vand.u32 %v423, 15
      %v426 = vsub.s32 0, %v425
      %v427 = vsel %vm421, %v426, %v425
      %vm428 = vcmp.ne.s32.totalorder %v210, 0
      %vm429 = vcmp.ne.s32.totalorder %v217, 0
      %vm430 = vcmp.ne.s32.totalorder %v224, 0
      %vm431 = vcmp.ne.s32.totalorder %v231, 0
      %vm432 = vcmp.ne.s32.totalorder %v238, 0
      %vm433 = vcmp.ne.s32.totalorder %v245, 0
      %vm434 = vcmp.ne.s32.totalorder %v252, 0
      %vm435 = vcmp.ne.s32.totalorder %v259, 0
      %vm436 = vcmp.ne.s32.totalorder %v266, 0
      %vm437 = vcmp.ne.s32.totalorder %v273, 0
      %vm438 = vcmp.ne.s32.totalorder %v280, 0
      %vm439 = vcmp.ne.s32.totalorder %v287, 0
      %vm440 = vcmp.ne.s32.totalorder %v294, 0
      %vm441 = vcmp.ne.s32.totalorder %v301, 0
      %vm442 = vcmp.ne.s32.totalorder %v308, 0
      %vm443 = vcmp.ne.s32.totalorder %v315, 0
      %vm444 = vcmp.ne.s32.totalorder %v322, 0
      %vm445 = vcmp.ne.s32.totalorder %v329, 0
      %vm446 = vcmp.ne.s32.totalorder %v336, 0
      %vm447 = vcmp.ne.s32.totalorder %v343, 0
      %vm448 = vcmp.ne.s32.totalorder %v350, 0
      %vm449 = vcmp.ne.s32.totalorder %v357, 0
      %vm450 = vcmp.ne.s32.totalorder %v364, 0
      %vm451 = vcmp.ne.s32.totalorder %v371, 0
      %vm452 = vcmp.ne.s32.totalorder %v378, 0
      %vm453 = vcmp.ne.s32.totalorder %v385, 0
      %vm454 = vcmp.ne.s32.totalorder %v392, 0
      %vm455 = vcmp.ne.s32.totalorder %v399, 0
      %vm456 = vcmp.ne.s32.totalorder %v406, 0
      %vm457 = vcmp.ne.s32.totalorder %v413, 0
      %vm458 = vcmp.ne.s32.totalorder %v420, 0
      %vm459 = vcmp.ne.s32.totalorder %v427, 0
      %vm460 = vcmp.lt.s32.totalorder %v210, 0
      %vm461 = vcmp.lt.s32.totalorder %v217, 0
      %vm462 = vcmp.lt.s32.totalorder %v224, 0
      %vm463 = vcmp.lt.s32.totalorder %v231, 0
      %vm464 = vcmp.lt.s32.totalorder %v238, 0
      %vm465 = vcmp.lt.s32.totalorder %v245, 0
      %vm466 = vcmp.lt.s32.totalorder %v252, 0
      %vm467 = vcmp.lt.s32.totalorder %v259, 0
      %vm468 = vcmp.lt.s32.totalorder %v266, 0
      %vm469 = vcmp.lt.s32.totalorder %v273, 0
      %vm470 = vcmp.lt.s32.totalorder %v280, 0
      %vm471 = vcmp.lt.s32.totalorder %v287, 0
      %vm472 = vcmp.lt.s32.totalorder %v294, 0
      %vm473 = vcmp.lt.s32.totalorder %v301, 0
      %vm474 = vcmp.lt.s32.totalorder %v308, 0
      %vm475 = vcmp.lt.s32.totalorder %v315, 0
      %vm476 = vcmp.lt.s32.totalorder %v322, 0
      %vm477 = vcmp.lt.s32.totalorder %v329, 0
      %vm478 = vcmp.lt.s32.totalorder %v336, 0
      %vm479 = vcmp.lt.s32.totalorder %v343, 0
      %vm480 = vcmp.lt.s32.totalorder %v350, 0
      %vm481 = vcmp.lt.s32.totalorder %v357, 0
      %vm482 = vcmp.lt.s32.totalorder %v364, 0
      %vm483 = vcmp.lt.s32.totalorder %v371, 0
      %vm484 = vcmp.lt.s32.totalorder %v378, 0
      %vm485 = vcmp.lt.s32.totalorder %v385, 0
      %vm486 = vcmp.lt.s32.totalorder %v392, 0
      %vm487 = vcmp.lt.s32.totalorder %v399, 0
      %vm488 = vcmp.lt.s32.totalorder %v406, 0
      %vm489 = vcmp.lt.s32.totalorder %v413, 0
      %vm490 = vcmp.lt.s32.totalorder %v420, 0
      %vm491 = vcmp.lt.s32.totalorder %v427, 0
      %vm492 = vmand %vm460, %vm428
      %vm493 = vmand %vm461, %vm429
      %vm494 = vmand %vm462, %vm430
      %vm495 = vmand %vm463, %vm431
      %vm496 = vmand %vm464, %vm432
      %vm497 = vmand %vm465, %vm433
      %vm498 = vmand %vm466, %vm434
      %vm499 = vmand %vm467, %vm435
      %vm500 = vmand %vm468, %vm436
      %vm501 = vmand %vm469, %vm437
      %vm502 = vmand %vm470, %vm438
      %vm503 = vmand %vm471, %vm439
      %vm504 = vmand %vm472, %vm440
      %vm505 = vmand %vm473, %vm441
      %vm506 = vmand %vm474, %vm442
      %vm507 = vmand %vm475, %vm443
      %vm508 = vmand %vm476, %vm444
      %vm509 = vmand %vm477, %vm445
      %vm510 = vmand %vm478, %vm446
      %vm511 = vmand %vm479, %vm447
      %vm512 = vmand %vm480, %vm448
      %vm513 = vmand %vm481, %vm449
      %vm514 = vmand %vm482, %vm450
      %vm515 = vmand %vm483, %vm451
      %vm516 = vmand %vm484, %vm452
      %vm517 = vmand %vm485, %vm453
      %vm518 = vmand %vm486, %vm454
      %vm519 = vmand %vm487, %vm455
      %vm520 = vmand %vm488, %vm456
      %vm521 = vmand %vm489, %vm457
      %vm522 = vmand %vm490, %vm458
      %vm523 = vmand %vm491, %vm459
      %v524 = vadd.s32 %v210, 16
      %v525 = vadd.s32 %v217, 16
      %v526 = vadd.s32 %v224, 16
      %v527 = vadd.s32 %v231, 16
      %v528 = vadd.s32 %v238, 16
      %v529 = vadd.s32 %v245, 16
      %v530 = vadd.s32 %v252, 16
      %v531 = vadd.s32 %v259, 16
      %v532 = vadd.s32 %v266, 16
      %v533 = vadd.s32 %v273, 16
      %v534 = vadd.s32 %v280, 16
      %v535 = vadd.s32 %v287, 16
      %v536 = vadd.s32 %v294, 16
      %v537 = vadd.s32 %v301, 16
      %v538 = vadd.s32 %v308, 16
      %v539 = vadd.s32 %v315, 16
      %v540 = vadd.s32 %v322, 16
      %v541 = vadd.s32 %v329, 16
      %v542 = vadd.s32 %v336, 16
      %v543 = vadd.s32 %v343, 16
      %v544 = vadd.s32 %v350, 16
      %v545 = vadd.s32 %v357, 16
      %v546 = vadd.s32 %v364, 16
      %v547 = vadd.s32 %v371, 16
      %v548 = vadd.s32 %v378, 16
      %v549 = vadd.s32 %v385, 16
      %v550 = vadd.s32 %v392, 16
      %v551 = vadd.s32 %v399, 16
      %v552 = vadd.s32 %v406, 16
      %v553 = vadd.s32 %v413, 16
      %v554 = vadd.s32 %v420, 16
      %v555 = vadd.s32 %v427, 16
      %v556 = vsel %vm492, %v524, %v210
      %v557 = vsel %vm493, %v525, %v217
      %v558 = vsel %vm494, %v526, %v224
      %v559 = vsel %vm495, %v527, %v231
      %v560 = vsel %vm496, %v528, %v238
      %v561 = vsel %vm497, %v529, %v245
      %v562 = vsel %vm498, %v530, %v252
      %v563 = vsel %vm499, %v531, %v259
      %v564 = vsel %vm500, %v532, %v266
      %v565 = vsel %vm501, %v533, %v273
      %v566 = vsel %vm502, %v534, %v280
      %v567 = vsel %vm503, %v535, %v287
      %v568 = vsel %vm504, %v536, %v294
      %v569 = vsel %vm505, %v537, %v301
      %v570 = vsel %vm506, %v538, %v308
      %v571 = vsel %vm507, %v539, %v315
      %v572 = vsel %vm508, %v540, %v322
      %v573 = vsel %vm509, %v541, %v329
      %v574 = vsel %vm510, %v542, %v336
      %v575 = vsel %vm511, %v543, %v343
      %v576 = vsel %vm512, %v544, %v350
      %v577 = vsel %vm513, %v545, %v357
      %v578 = vsel %vm514, %v546, %v364
      %v579 = vsel %vm515, %v547, %v371
      %v580 = vsel %vm516, %v548, %v378
      %v581 = vsel %vm517, %v549, %v385
      %v582 = vsel %vm518, %v550, %v392
      %v583 = vsel %vm519, %v551, %v399
      %v584 = vsel %vm520, %v552, %v406
      %v585 = vsel %vm521, %v553, %v413
      %v586 = vsel %vm522, %v554, %v420
      %v587 = vsel %vm523, %v555, %v427
      %vm588 = vcmp.eq.s32.totalorder %v556, 0
      %vm589 = vcmp.eq.s32.totalorder %v557, 0
      %vm590 = vcmp.eq.s32.totalorder %v558, 0
      %vm591 = vcmp.eq.s32.totalorder %v559, 0
      %vm592 = vcmp.eq.s32.totalorder %v560, 0
      %vm593 = vcmp.eq.s32.totalorder %v561, 0
      %vm594 = vcmp.eq.s32.totalorder %v562, 0
      %vm595 = vcmp.eq.s32.totalorder %v563, 0
      %vm596 = vcmp.eq.s32.totalorder %v564, 0
      %vm597 = vcmp.eq.s32.totalorder %v565, 0
      %vm598 = vcmp.eq.s32.totalorder %v566, 0
      %vm599 = vcmp.eq.s32.totalorder %v567, 0
      %vm600 = vcmp.eq.s32.totalorder %v568, 0
      %vm601 = vcmp.eq.s32.totalorder %v569, 0
      %vm602 = vcmp.eq.s32.totalorder %v570, 0
      %vm603 = vcmp.eq.s32.totalorder %v571, 0
      %vm604 = vcmp.eq.s32.totalorder %v572, 0
      %vm605 = vcmp.eq.s32.totalorder %v573, 0
      %vm606 = vcmp.eq.s32.totalorder %v574, 0
      %vm607 = vcmp.eq.s32.totalorder %v575, 0
      %vm608 = vcmp.eq.s32.totalorder %v576, 0
      %vm609 = vcmp.eq.s32.totalorder %v577, 0
      %vm610 = vcmp.eq.s32.totalorder %v578, 0
      %vm611 = vcmp.eq.s32.totalorder %v579, 0
      %vm612 = vcmp.eq.s32.totalorder %v580, 0
      %vm613 = vcmp.eq.s32.totalorder %v581, 0
      %vm614 = vcmp.eq.s32.totalorder %v582, 0
      %vm615 = vcmp.eq.s32.totalorder %v583, 0
      %vm616 = vcmp.eq.s32.totalorder %v584, 0
      %vm617 = vcmp.eq.s32.totalorder %v585, 0
      %vm618 = vcmp.eq.s32.totalorder %v586, 0
      %vm619 = vcmp.eq.s32.totalorder %v587, 0
      %vm620 = vcmp.eq.s32.totalorder %v556, 15
      %vm621 = vcmp.eq.s32.totalorder %v557, 15
      %vm622 = vcmp.eq.s32.totalorder %v558, 15
      %vm623 = vcmp.eq.s32.totalorder %v559, 15
      %vm624 = vcmp.eq.s32.totalorder %v560, 15
      %vm625 = vcmp.eq.s32.totalorder %v561, 15
      %vm626 = vcmp.eq.s32.totalorder %v562, 15
      %vm627 = vcmp.eq.s32.totalorder %v563, 15
      %vm628 = vcmp.eq.s32.totalorder %v564, 15
      %vm629 = vcmp.eq.s32.totalorder %v565, 15
      %vm630 = vcmp.eq.s32.totalorder %v566, 15
      %vm631 = vcmp.eq.s32.totalorder %v567, 15
      %vm632 = vcmp.eq.s32.totalorder %v568, 15
      %vm633 = vcmp.eq.s32.totalorder %v569, 15
      %vm634 = vcmp.eq.s32.totalorder %v570, 15
      %vm635 = vcmp.eq.s32.totalorder %v571, 15
      %vm636 = vcmp.eq.s32.totalorder %v572, 15
      %vm637 = vcmp.eq.s32.totalorder %v573, 15
      %vm638 = vcmp.eq.s32.totalorder %v574, 15
      %vm639 = vcmp.eq.s32.totalorder %v575, 15
      %vm640 = vcmp.eq.s32.totalorder %v576, 15
      %vm641 = vcmp.eq.s32.totalorder %v577, 15
      %vm642 = vcmp.eq.s32.totalorder %v578, 15
      %vm643 = vcmp.eq.s32.totalorder %v579, 15
      %vm644 = vcmp.eq.s32.totalorder %v580, 15
      %vm645 = vcmp.eq.s32.totalorder %v581, 15
      %vm646 = vcmp.eq.s32.totalorder %v582, 15
      %vm647 = vcmp.eq.s32.totalorder %v583, 15
      %vm648 = vcmp.eq.s32.totalorder %v584, 15
      %vm649 = vcmp.eq.s32.totalorder %v585, 15
      %vm650 = vcmp.eq.s32.totalorder %v586, 15
      %vm651 = vcmp.eq.s32.totalorder %v587, 15
      %s652 = scalar_lea.vmem %s165, 16
      %v653 = vld [vmem:[%s652] sm:$0xff]
      %v654 = vld [vmem:[%s652 + $0x8] sm:$0xff]
      %v655 = vld [vmem:[%s165] sm:$0xff]
      %v656 = vld [vmem:[%s165 + $0x8] sm:$0xff]
      %v657 = vld [vmem:[%s165 + $0x10] sm:$0xff]
      %v658 = vld [vmem:[%s165 + $0x18] sm:$0xff]
      %v659 = vld [vmem:[%s165 + $0x20] sm:$0xff]
      %v660 = vld [vmem:[%s165 + $0x28] sm:$0xff]
      %v661 = vld [vmem:[%s165 + $0x30] sm:$0xff]
      %v662 = vld [vmem:[%s165 + $0x38] sm:$0xff]
      %v663 = vld [vmem:[%s165 + $0x40] sm:$0xff]
      %v664 = vld [vmem:[%s165 + $0x48] sm:$0xff]
      %v665 = vld [vmem:[%s165 + $0x50] sm:$0xff]
      %v666 = vld [vmem:[%s165 + $0x58] sm:$0xff]
      %v667 = vld [vmem:[%s165 + $0x60] sm:$0xff]
      %v668 = vld [vmem:[%s165 + $0x68] sm:$0xff]
      %v669 = vld [vmem:[%s165 + $0x70] sm:$0xff]
      %v670 = vld [vmem:[%s165 + $0x78] sm:$0xff]
      %v671 = vld [vmem:[%s165 + $0x80] sm:$0xff]
      %v672 = vld [vmem:[%s165 + $0x88] sm:$0xff]
      %v673 = vld [vmem:[%s165 + $0x90] sm:$0xff]
      %v674 = vld [vmem:[%s165 + $0x98] sm:$0xff]
      %v675 = vld [vmem:[%s165 + $0xa0] sm:$0xff]
      %v676 = vld [vmem:[%s165 + $0xa8] sm:$0xff]
      %v677 = vld [vmem:[%s165 + $0xb0] sm:$0xff]
      %v678 = vld [vmem:[%s165 + $0xb8] sm:$0xff]
      %v679 = vld [vmem:[%s165 + $0xc0] sm:$0xff]
      %v680 = vld [vmem:[%s165 + $0xc8] sm:$0xff]
      %v681 = vld [vmem:[%s165 + $0xd0] sm:$0xff]
      %v682 = vld [vmem:[%s165 + $0xd8] sm:$0xff]
      %v683 = vld [vmem:[%s165 + $0xe0] sm:$0xff]
      %v684 = vld [vmem:[%s165 + $0xe8] sm:$0xff]
      %v685 = vld [vmem:[%s165 + $0xf0] sm:$0xff]
      %v686 = vld [vmem:[%s165 + $0xf8] sm:$0xff]
      %s687 = scalar_lea.vmem %s165, 224
      %v688 = vld [vmem:[%s687] sm:$0xff]
      %v689 = vld [vmem:[%s687 + $0x8] sm:$0xff]
      %v690 = vrot.slane %v653, 7
      %v691 = vrot.slane %v654, 7
      %v692 = vrot.slane %v655, 7
      %v693 = vrot.slane %v656, 7
      %v694 = vrot.slane %v657, 7
      %v695 = vrot.slane %v658, 7
      %v696 = vrot.slane %v659, 7
      %v697 = vrot.slane %v660, 7
      %v698 = vrot.slane %v661, 7
      %v699 = vrot.slane %v662, 7
      %v700 = vrot.slane %v663, 7
      %v701 = vrot.slane %v664, 7
      %v702 = vrot.slane %v665, 7
      %v703 = vrot.slane %v666, 7
      %v704 = vrot.slane %v667, 7
      %v705 = vrot.slane %v668, 7
      %v706 = vrot.slane %v669, 7
      %v707 = vrot.slane %v670, 7
      %v708 = vrot.slane %v671, 7
      %v709 = vrot.slane %v672, 7
      %v710 = vrot.slane %v673, 7
      %v711 = vrot.slane %v674, 7
      %v712 = vrot.slane %v675, 7
      %v713 = vrot.slane %v676, 7
      %v714 = vrot.slane %v677, 7
      %v715 = vrot.slane %v678, 7
      %v716 = vrot.slane %v679, 7
      %v717 = vrot.slane %v680, 7
      %v718 = vrot.slane %v681, 7
      %v719 = vrot.slane %v682, 7
      %v720 = vrot.slane %v683, 7
      %v721 = vrot.slane %v684, 7
      %vm722 = vcmp.lt.s32.totalorder %v172, 1
      %v723 = vsel %vm722, %v720, %v721
      %v724 = vsel %vm722, %v719, %v720
      %v725 = vsel %vm722, %v718, %v719
      %v726 = vsel %vm722, %v717, %v718
      %v727 = vsel %vm722, %v716, %v717
      %v728 = vsel %vm722, %v715, %v716
      %v729 = vsel %vm722, %v714, %v715
      %v730 = vsel %vm722, %v713, %v714
      %v731 = vsel %vm722, %v712, %v713
      %v732 = vsel %vm722, %v711, %v712
      %v733 = vsel %vm722, %v710, %v711
      %v734 = vsel %vm722, %v709, %v710
      %v735 = vsel %vm722, %v708, %v709
      %v736 = vsel %vm722, %v707, %v708
      %v737 = vsel %vm722, %v706, %v707
      %v738 = vsel %vm722, %v705, %v706
      %v739 = vsel %vm722, %v704, %v705
      %v740 = vsel %vm722, %v703, %v704
      %v741 = vsel %vm722, %v702, %v703
      %v742 = vsel %vm722, %v701, %v702
      %v743 = vsel %vm722, %v700, %v701
      %v744 = vsel %vm722, %v699, %v700
      %v745 = vsel %vm722, %v698, %v699
      %v746 = vsel %vm722, %v697, %v698
      %v747 = vsel %vm722, %v696, %v697
      %v748 = vsel %vm722, %v695, %v696
      %v749 = vsel %vm722, %v694, %v695
      %v750 = vsel %vm722, %v693, %v694
      %v751 = vsel %vm722, %v692, %v693
      %v752 = vsel %vm722, %v691, %v692
      %v753 = vsel %vm722, %v690, %v691
      %v754 = vsel %vm722, %v721, %v690
      %v755 = vrot.slane %v653, 1
      %v756 = vrot.slane %v654, 1
      %v757 = vrot.slane %v655, 1
      %v758 = vrot.slane %v656, 1
      %v759 = vrot.slane %v657, 1
      %v760 = vrot.slane %v658, 1
      %v761 = vrot.slane %v659, 1
      %v762 = vrot.slane %v660, 1
      %v763 = vrot.slane %v661, 1
      %v764 = vrot.slane %v662, 1
      %v765 = vrot.slane %v663, 1
      %v766 = vrot.slane %v664, 1
      %v767 = vrot.slane %v665, 1
      %v768 = vrot.slane %v666, 1
      %v769 = vrot.slane %v667, 1
      %v770 = vrot.slane %v668, 1
      %v771 = vrot.slane %v669, 1
      %v772 = vrot.slane %v670, 1
      %v773 = vrot.slane %v671, 1
      %v774 = vrot.slane %v672, 1
      %v775 = vrot.slane %v673, 1
      %v776 = vrot.slane %v674, 1
      %v777 = vrot.slane %v675, 1
      %v778 = vrot.slane %v676, 1
      %v779 = vrot.slane %v677, 1
      %v780 = vrot.slane %v678, 1
      %v781 = vrot.slane %v679, 1
      %v782 = vrot.slane %v680, 1
      %v783 = vrot.slane %v681, 1
      %v784 = vrot.slane %v682, 1
      %v785 = vrot.slane %v683, 1
      %v786 = vrot.slane %v684, 1
      %vm787 = vcmp.lt.s32.totalorder %v172, 7
      %v788 = vsel %vm787, %v785, %v786
      %v789 = vsel %vm787, %v784, %v785
      %v790 = vsel %vm787, %v783, %v784
      %v791 = vsel %vm787, %v782, %v783
      %v792 = vsel %vm787, %v781, %v782
      %v793 = vsel %vm787, %v780, %v781
      %v794 = vsel %vm787, %v779, %v780
      %v795 = vsel %vm787, %v778, %v779
      %v796 = vsel %vm787, %v777, %v778
      %v797 = vsel %vm787, %v776, %v777
      %v798 = vsel %vm787, %v775, %v776
      %v799 = vsel %vm787, %v774, %v775
      %v800 = vsel %vm787, %v773, %v774
      %v801 = vsel %vm787, %v772, %v773
      %v802 = vsel %vm787, %v771, %v772
      %v803 = vsel %vm787, %v770, %v771
      %v804 = vsel %vm787, %v769, %v770
      %v805 = vsel %vm787, %v768, %v769
      %v806 = vsel %vm787, %v767, %v768
      %v807 = vsel %vm787, %v766, %v767
      %v808 = vsel %vm787, %v765, %v766
      %v809 = vsel %vm787, %v764, %v765
      %v810 = vsel %vm787, %v763, %v764
      %v811 = vsel %vm787, %v762, %v763
      %v812 = vsel %vm787, %v761, %v762
      %v813 = vsel %vm787, %v760, %v761
      %v814 = vsel %vm787, %v759, %v760
      %v815 = vsel %vm787, %v758, %v759
      %v816 = vsel %vm787, %v757, %v758
      %v817 = vsel %vm787, %v756, %v757
      %v818 = vsel %vm787, %v755, %v756
      %v819 = vsel %vm787, %v786, %v755
      %v820 = vsel %vm588, 1, 0
      %v821 = vsel %vm589, 1, 0
      %v822 = vsel %vm590, 1, 0
      %v823 = vsel %vm591, 1, 0
      %v824 = vsel %vm592, 1, 0
      %v825 = vsel %vm593, 1, 0
      %v826 = vsel %vm594, 1, 0
      %v827 = vsel %vm595, 1, 0
      %v828 = vsel %vm596, 1, 0
      %v829 = vsel %vm597, 1, 0
      %v830 = vsel %vm598, 1, 0
      %v831 = vsel %vm599, 1, 0
      %v832 = vsel %vm600, 1, 0
      %v833 = vsel %vm601, 1, 0
      %v834 = vsel %vm602, 1, 0
      %v835 = vsel %vm603, 1, 0
      %v836 = vsel %vm604, 1, 0
      %v837 = vsel %vm605, 1, 0
      %v838 = vsel %vm606, 1, 0
      %v839 = vsel %vm607, 1, 0
      %v840 = vsel %vm608, 1, 0
      %v841 = vsel %vm609, 1, 0
      %v842 = vsel %vm610, 1, 0
      %v843 = vsel %vm611, 1, 0
      %v844 = vsel %vm612, 1, 0
      %v845 = vsel %vm613, 1, 0
      %v846 = vsel %vm614, 1, 0
      %v847 = vsel %vm615, 1, 0
      %v848 = vsel %vm616, 1, 0
      %v849 = vsel %vm617, 1, 0
      %v850 = vsel %vm618, 1, 0
      %v851 = vsel %vm619, 1, 0
      %vm852 = vcmp.eq.s32.totalorder %v820, 1
      %vm853 = vcmp.eq.s32.totalorder %v821, 1
      %vm854 = vcmp.eq.s32.totalorder %v822, 1
      %vm855 = vcmp.eq.s32.totalorder %v823, 1
      %vm856 = vcmp.eq.s32.totalorder %v824, 1
      %vm857 = vcmp.eq.s32.totalorder %v825, 1
      %vm858 = vcmp.eq.s32.totalorder %v826, 1
      %vm859 = vcmp.eq.s32.totalorder %v827, 1
      %vm860 = vcmp.eq.s32.totalorder %v828, 1
      %vm861 = vcmp.eq.s32.totalorder %v829, 1
      %vm862 = vcmp.eq.s32.totalorder %v830, 1
      %vm863 = vcmp.eq.s32.totalorder %v831, 1
      %vm864 = vcmp.eq.s32.totalorder %v832, 1
      %vm865 = vcmp.eq.s32.totalorder %v833, 1
      %vm866 = vcmp.eq.s32.totalorder %v834, 1
      %vm867 = vcmp.eq.s32.totalorder %v835, 1
      %vm868 = vcmp.eq.s32.totalorder %v836, 1
      %vm869 = vcmp.eq.s32.totalorder %v837, 1
      %vm870 = vcmp.eq.s32.totalorder %v838, 1
      %vm871 = vcmp.eq.s32.totalorder %v839, 1
      %vm872 = vcmp.eq.s32.totalorder %v840, 1
      %vm873 = vcmp.eq.s32.totalorder %v841, 1
      %vm874 = vcmp.eq.s32.totalorder %v842, 1
      %vm875 = vcmp.eq.s32.totalorder %v843, 1
      %vm876 = vcmp.eq.s32.totalorder %v844, 1
      %vm877 = vcmp.eq.s32.totalorder %v845, 1
      %vm878 = vcmp.eq.s32.totalorder %v846, 1
      %vm879 = vcmp.eq.s32.totalorder %v847, 1
      %vm880 = vcmp.eq.s32.totalorder %v848, 1
      %vm881 = vcmp.eq.s32.totalorder %v849, 1
      %vm882 = vcmp.eq.s32.totalorder %v850, 1
      %vm883 = vcmp.eq.s32.totalorder %v851, 1
      %v884 = vsel %vm852, %v818, %v754
      %v885 = vsel %vm853, %v817, %v753
      %v886 = vsel %vm854, %v816, %v752
      %v887 = vsel %vm855, %v815, %v751
      %v888 = vsel %vm856, %v814, %v750
      %v889 = vsel %vm857, %v813, %v749
      %v890 = vsel %vm858, %v812, %v748
      %v891 = vsel %vm859, %v811, %v747
      %v892 = vsel %vm860, %v810, %v746
      %v893 = vsel %vm861, %v809, %v745
      %v894 = vsel %vm862, %v808, %v744
      %v895 = vsel %vm863, %v807, %v743
      %v896 = vsel %vm864, %v806, %v742
      %v897 = vsel %vm865, %v805, %v741
      %v898 = vsel %vm866, %v804, %v740
      %v899 = vsel %vm867, %v803, %v739
      %v900 = vsel %vm868, %v802, %v738
      %v901 = vsel %vm869, %v801, %v737
      %v902 = vsel %vm870, %v800, %v736
      %v903 = vsel %vm871, %v799, %v735
      %v904 = vsel %vm872, %v798, %v734
      %v905 = vsel %vm873, %v797, %v733
      %v906 = vsel %vm874, %v796, %v732
      %v907 = vsel %vm875, %v795, %v731
      %v908 = vsel %vm876, %v794, %v730
      %v909 = vsel %vm877, %v793, %v729
      %v910 = vsel %vm878, %v792, %v728
      %v911 = vsel %vm879, %v791, %v727
      %v912 = vsel %vm880, %v790, %v726
      %v913 = vsel %vm881, %v789, %v725
      %v914 = vsel %vm882, %v788, %v724
      %v915 = vsel %vm883, %v819, %v723
      %v916 = vsel %vm620, 1, 0
      %v917 = vsel %vm621, 1, 0
      %v918 = vsel %vm622, 1, 0
      %v919 = vsel %vm623, 1, 0
      %v920 = vsel %vm624, 1, 0
      %v921 = vsel %vm625, 1, 0
      %v922 = vsel %vm626, 1, 0
      %v923 = vsel %vm627, 1, 0
      %v924 = vsel %vm628, 1, 0
      %v925 = vsel %vm629, 1, 0
      %v926 = vsel %vm630, 1, 0
      %v927 = vsel %vm631, 1, 0
      %v928 = vsel %vm632, 1, 0
      %v929 = vsel %vm633, 1, 0
      %v930 = vsel %vm634, 1, 0
      %v931 = vsel %vm635, 1, 0
      %v932 = vsel %vm636, 1, 0
      %v933 = vsel %vm637, 1, 0
      %v934 = vsel %vm638, 1, 0
      %v935 = vsel %vm639, 1, 0
      %v936 = vsel %vm640, 1, 0
      %v937 = vsel %vm641, 1, 0
      %v938 = vsel %vm642, 1, 0
      %v939 = vsel %vm643, 1, 0
      %v940 = vsel %vm644, 1, 0
      %v941 = vsel %vm645, 1, 0
      %v942 = vsel %vm646, 1, 0
      %v943 = vsel %vm647, 1, 0
      %v944 = vsel %vm648, 1, 0
      %v945 = vsel %vm649, 1, 0
      %v946 = vsel %vm650, 1, 0
      %v947 = vsel %vm651, 1, 0
      %vm948 = vcmp.eq.s32.totalorder %v916, 1
      %vm949 = vcmp.eq.s32.totalorder %v917, 1
      %vm950 = vcmp.eq.s32.totalorder %v918, 1
      %vm951 = vcmp.eq.s32.totalorder %v919, 1
      %vm952 = vcmp.eq.s32.totalorder %v920, 1
      %vm953 = vcmp.eq.s32.totalorder %v921, 1
      %vm954 = vcmp.eq.s32.totalorder %v922, 1
      %vm955 = vcmp.eq.s32.totalorder %v923, 1
      %vm956 = vcmp.eq.s32.totalorder %v924, 1
      %vm957 = vcmp.eq.s32.totalorder %v925, 1
      %vm958 = vcmp.eq.s32.totalorder %v926, 1
      %vm959 = vcmp.eq.s32.totalorder %v927, 1
      %vm960 = vcmp.eq.s32.totalorder %v928, 1
      %vm961 = vcmp.eq.s32.totalorder %v929, 1
      %vm962 = vcmp.eq.s32.totalorder %v930, 1
      %vm963 = vcmp.eq.s32.totalorder %v931, 1
      %vm964 = vcmp.eq.s32.totalorder %v932, 1
      %vm965 = vcmp.eq.s32.totalorder %v933, 1
      %vm966 = vcmp.eq.s32.totalorder %v934, 1
      %vm967 = vcmp.eq.s32.totalorder %v935, 1
      %vm968 = vcmp.eq.s32.totalorder %v936, 1
      %vm969 = vcmp.eq.s32.totalorder %v937, 1
      %vm970 = vcmp.eq.s32.totalorder %v938, 1
      %vm971 = vcmp.eq.s32.totalorder %v939, 1
      %vm972 = vcmp.eq.s32.totalorder %v940, 1
      %vm973 = vcmp.eq.s32.totalorder %v941, 1
      %vm974 = vcmp.eq.s32.totalorder %v942, 1
      %vm975 = vcmp.eq.s32.totalorder %v943, 1
      %vm976 = vcmp.eq.s32.totalorder %v944, 1
      %vm977 = vcmp.eq.s32.totalorder %v945, 1
      %vm978 = vcmp.eq.s32.totalorder %v946, 1
      %vm979 = vcmp.eq.s32.totalorder %v947, 1
      %v980 = vsel %vm948, %v754, %v818
      %v981 = vsel %vm949, %v753, %v817
      %v982 = vsel %vm950, %v752, %v816
      %v983 = vsel %vm951, %v751, %v815
      %v984 = vsel %vm952, %v750, %v814
      %v985 = vsel %vm953, %v749, %v813
      %v986 = vsel %vm954, %v748, %v812
      %v987 = vsel %vm955, %v747, %v811
      %v988 = vsel %vm956, %v746, %v810
      %v989 = vsel %vm957, %v745, %v809
      %v990 = vsel %vm958, %v744, %v808
      %v991 = vsel %vm959, %v743, %v807
      %v992 = vsel %vm960, %v742, %v806
      %v993 = vsel %vm961, %v741, %v805
      %v994 = vsel %vm962, %v740, %v804
      %v995 = vsel %vm963, %v739, %v803
      %v996 = vsel %vm964, %v738, %v802
      %v997 = vsel %vm965, %v737, %v801
      %v998 = vsel %vm966, %v736, %v800
      %v999 = vsel %vm967, %v735, %v799
      %v1000 = vsel %vm968, %v734, %v798
      %v1001 = vsel %vm969, %v733, %v797
      %v1002 = vsel %vm970, %v732, %v796
      %v1003 = vsel %vm971, %v731, %v795
      %v1004 = vsel %vm972, %v730, %v794
      %v1005 = vsel %vm973, %v729, %v793
      %v1006 = vsel %vm974, %v728, %v792
      %v1007 = vsel %vm975, %v727, %v791
      %v1008 = vsel %vm976, %v726, %v790
      %v1009 = vsel %vm977, %v725, %v789
      %v1010 = vsel %vm978, %v724, %v788
      %v1011 = vsel %vm979, %v723, %v819
      %v1012 = vrot.slane %v685, 7
      %v1013 = vrot.slane %v686, 7
      %v1014 = vsel %vm722, %v1012, %v1013
      %v1015 = vsel %vm722, %v721, %v1012
      %v1016 = vsel %vm722, %v1013, %v692
      %v1017 = vrot.slane %v685, 1
      %v1018 = vrot.slane %v686, 1
      %v1019 = vsel %vm787, %v1017, %v1018
      %v1020 = vsel %vm787, %v786, %v1017
      %v1021 = vsel %vm787, %v1018, %v757
      %v1022 = vsel %vm852, %v816, %v1016
      %v1023 = vsel %vm853, %v815, %v751
      %v1024 = vsel %vm854, %v814, %v750
      %v1025 = vsel %vm855, %v813, %v749
      %v1026 = vsel %vm856, %v812, %v748
      %v1027 = vsel %vm857, %v811, %v747
      %v1028 = vsel %vm858, %v810, %v746
      %v1029 = vsel %vm859, %v809, %v745
      %v1030 = vsel %vm860, %v808, %v744
      %v1031 = vsel %vm861, %v807, %v743
      %v1032 = vsel %vm862, %v806, %v742
      %v1033 = vsel %vm863, %v805, %v741
      %v1034 = vsel %vm864, %v804, %v740
      %v1035 = vsel %vm865, %v803, %v739
      %v1036 = vsel %vm866, %v802, %v738
      %v1037 = vsel %vm867, %v801, %v737
      %v1038 = vsel %vm868, %v800, %v736
      %v1039 = vsel %vm869, %v799, %v735
      %v1040 = vsel %vm870, %v798, %v734
      %v1041 = vsel %vm871, %v797, %v733
      %v1042 = vsel %vm872, %v796, %v732
      %v1043 = vsel %vm873, %v795, %v731
      %v1044 = vsel %vm874, %v794, %v730
      %v1045 = vsel %vm875, %v793, %v729
      %v1046 = vsel %vm876, %v792, %v728
      %v1047 = vsel %vm877, %v791, %v727
      %v1048 = vsel %vm878, %v790, %v726
      %v1049 = vsel %vm879, %v789, %v725
      %v1050 = vsel %vm880, %v788, %v724
      %v1051 = vsel %vm881, %v1020, %v723
      %v1052 = vsel %vm882, %v1019, %v1015
      %v1053 = vsel %vm883, %v1021, %v1014
      %v1054 = vsel %vm948, %v1016, %v816
      %v1055 = vsel %vm949, %v751, %v815
      %v1056 = vsel %vm950, %v750, %v814
      %v1057 = vsel %vm951, %v749, %v813
      %v1058 = vsel %vm952, %v748, %v812
      %v1059 = vsel %vm953, %v747, %v811
      %v1060 = vsel %vm954, %v746, %v810
      %v1061 = vsel %vm955, %v745, %v809
      %v1062 = vsel %vm956, %v744, %v808
      %v1063 = vsel %vm957, %v743, %v807
      %v1064 = vsel %vm958, %v742, %v806
      %v1065 = vsel %vm959, %v741, %v805
      %v1066 = vsel %vm960, %v740, %v804
      %v1067 = vsel %vm961, %v739, %v803
      %v1068 = vsel %vm962, %v738, %v802
      %v1069 = vsel %vm963, %v737, %v801
      %v1070 = vsel %vm964, %v736, %v800
      %v1071 = vsel %vm965, %v735, %v799
      %v1072 = vsel %vm966, %v734, %v798
      %v1073 = vsel %vm967, %v733, %v797
      %v1074 = vsel %vm968, %v732, %v796
      %v1075 = vsel %vm969, %v731, %v795
      %v1076 = vsel %vm970, %v730, %v794
      %v1077 = vsel %vm971, %v729, %v793
      %v1078 = vsel %vm972, %v728, %v792
      %v1079 = vsel %vm973, %v727, %v791
      %v1080 = vsel %vm974, %v726, %v790
      %v1081 = vsel %vm975, %v725, %v789
      %v1082 = vsel %vm976, %v724, %v788
      %v1083 = vsel %vm977, %v723, %v1020
      %v1084 = vsel %vm978, %v1015, %v1019
      %v1085 = vsel %vm979, %v1014, %v1021
      %v1086 = vrot.slane %v688, 7
      %v1087 = vrot.slane %v689, 7
      %v1088 = vsel %vm722, %v1086, %v1087
      %v1089 = vsel %vm722, %v1013, %v1086
      %v1090 = vsel %vm722, %v1087, %v694
      %v1091 = vrot.slane %v688, 1
      %v1092 = vrot.slane %v689, 1
      %v1093 = vsel %vm787, %v1091, %v1092
      %v1094 = vsel %vm787, %v1018, %v1091
      %v1095 = vsel %vm787, %v1092, %v759
      %v1096 = vsel %vm852, %v814, %v1090
      %v1097 = vsel %vm853, %v813, %v749
      %v1098 = vsel %vm854, %v812, %v748
      %v1099 = vsel %vm855, %v811, %v747
      %v1100 = vsel %vm856, %v810, %v746
      %v1101 = vsel %vm857, %v809, %v745
      %v1102 = vsel %vm858, %v808, %v744
      %v1103 = vsel %vm859, %v807, %v743
      %v1104 = vsel %vm860, %v806, %v742
      %v1105 = vsel %vm861, %v805, %v741
      %v1106 = vsel %vm862, %v804, %v740
      %v1107 = vsel %vm863, %v803, %v739
      %v1108 = vsel %vm864, %v802, %v738
      %v1109 = vsel %vm865, %v801, %v737
      %v1110 = vsel %vm866, %v800, %v736
      %v1111 = vsel %vm867, %v799, %v735
      %v1112 = vsel %vm868, %v798, %v734
      %v1113 = vsel %vm869, %v797, %v733
      %v1114 = vsel %vm870, %v796, %v732
      %v1115 = vsel %vm871, %v795, %v731
      %v1116 = vsel %vm872, %v794, %v730
      %v1117 = vsel %vm873, %v793, %v729
      %v1118 = vsel %vm874, %v792, %v728
      %v1119 = vsel %vm875, %v791, %v727
      %v1120 = vsel %vm876, %v790, %v726
      %v1121 = vsel %vm877, %v789, %v725
      %v1122 = vsel %vm878, %v788, %v724
      %v1123 = vsel %vm879, %v1020, %v723
      %v1124 = vsel %vm880, %v1019, %v1015
      %v1125 = vsel %vm881, %v1094, %v1014
      %v1126 = vsel %vm882, %v1093, %v1089
      %v1127 = vsel %vm883, %v1095, %v1088
      %v1128 = vsel %vm948, %v1090, %v814
      %v1129 = vsel %vm949, %v749, %v813
      %v1130 = vsel %vm950, %v748, %v812
      %v1131 = vsel %vm951, %v747, %v811
      %v1132 = vsel %vm952, %v746, %v810
      %v1133 = vsel %vm953, %v745, %v809
      %v1134 = vsel %vm954, %v744, %v808
      %v1135 = vsel %vm955, %v743, %v807
      %v1136 = vsel %vm956, %v742, %v806
      %v1137 = vsel %vm957, %v741, %v805
      %v1138 = vsel %vm958, %v740, %v804
      %v1139 = vsel %vm959, %v739, %v803
      %v1140 = vsel %vm960, %v738, %v802
      %v1141 = vsel %vm961, %v737, %v801
      %v1142 = vsel %vm962, %v736, %v800
      %v1143 = vsel %vm963, %v735, %v799
      %v1144 = vsel %vm964, %v734, %v798
      %v1145 = vsel %vm965, %v733, %v797
      %v1146 = vsel %vm966, %v732, %v796
      %v1147 = vsel %vm967, %v731, %v795
      %v1148 = vsel %vm968, %v730, %v794
      %v1149 = vsel %vm969, %v729, %v793
      %v1150 = vsel %vm970, %v728, %v792
      %v1151 = vsel %vm971, %v727, %v791
      %v1152 = vsel %vm972, %v726, %v790
      %v1153 = vsel %vm973, %v725, %v789
      %v1154 = vsel %vm974, %v724, %v788
      %v1155 = vsel %vm975, %v723, %v1020
      %v1156 = vsel %vm976, %v1015, %v1019
      %v1157 = vsel %vm977, %v1014, %v1094
      %v1158 = vsel %vm978, %v1089, %v1093
      %v1159 = vsel %vm979, %v1088, %v1095
      %1192 = vrot.lane.b32.xlu0 %v653, 4
      %v1193 = vpop.permute.xlu0 %1192
      %1194 = vrot.lane.b32.xlu0 %v654, 4
      %v1195 = vpop.permute.xlu0 %1194
      %1196 = vrot.lane.b32.xlu0 %v655, 4
      %v1197 = vpop.permute.xlu0 %1196
      %1198 = vrot.lane.b32.xlu0 %v656, 4
      %v1199 = vpop.permute.xlu0 %1198
      %1200 = vrot.lane.b32.xlu0 %v657, 4
      %v1201 = vpop.permute.xlu0 %1200
      %1202 = vrot.lane.b32.xlu0 %v658, 4
      %v1203 = vpop.permute.xlu0 %1202
      %1204 = vrot.lane.b32.xlu0 %v659, 4
      %v1205 = vpop.permute.xlu0 %1204
      %1206 = vrot.lane.b32.xlu0 %v660, 4
      %v1207 = vpop.permute.xlu0 %1206
      %1208 = vrot.lane.b32.xlu0 %v661, 4
      %v1209 = vpop.permute.xlu0 %1208
      %1210 = vrot.lane.b32.xlu0 %v662, 4
      %v1211 = vpop.permute.xlu0 %1210
      %1212 = vrot.lane.b32.xlu0 %v663, 4
      %v1213 = vpop.permute.xlu0 %1212
      %1214 = vrot.lane.b32.xlu0 %v664, 4
      %v1215 = vpop.permute.xlu0 %1214
      %1216 = vrot.lane.b32.xlu0 %v665, 4
      %v1217 = vpop.permute.xlu0 %1216
      %1218 = vrot.lane.b32.xlu0 %v666, 4
      %v1219 = vpop.permute.xlu0 %1218
      %1220 = vrot.lane.b32.xlu0 %v667, 4
      %v1221 = vpop.permute.xlu0 %1220
      %1222 = vrot.lane.b32.xlu0 %v668, 4
      %v1223 = vpop.permute.xlu0 %1222
      %1224 = vrot.lane.b32.xlu0 %v669, 4
      %v1225 = vpop.permute.xlu0 %1224
      %1226 = vrot.lane.b32.xlu0 %v670, 4
      %v1227 = vpop.permute.xlu0 %1226
      %1228 = vrot.lane.b32.xlu0 %v671, 4
      %v1229 = vpop.permute.xlu0 %1228
      %1230 = vrot.lane.b32.xlu0 %v672, 4
      %v1231 = vpop.permute.xlu0 %1230
      %1232 = vrot.lane.b32.xlu0 %v673, 4
      %v1233 = vpop.permute.xlu0 %1232
      %1234 = vrot.lane.b32.xlu0 %v674, 4
      %v1235 = vpop.permute.xlu0 %1234
      %1236 = vrot.lane.b32.xlu0 %v675, 4
      %v1237 = vpop.permute.xlu0 %1236
      %1238 = vrot.lane.b32.xlu0 %v676, 4
      %v1239 = vpop.permute.xlu0 %1238
      %1240 = vrot.lane.b32.xlu0 %v677, 4
      %v1241 = vpop.permute.xlu0 %1240
      %1242 = vrot.lane.b32.xlu0 %v678, 4
      %v1243 = vpop.permute.xlu0 %1242
      %1244 = vrot.lane.b32.xlu0 %v679, 4
      %v1245 = vpop.permute.xlu0 %1244
      %1246 = vrot.lane.b32.xlu0 %v680, 4
      %v1247 = vpop.permute.xlu0 %1246
      %1248 = vrot.lane.b32.xlu0 %v681, 4
      %v1249 = vpop.permute.xlu0 %1248
      %1250 = vrot.lane.b32.xlu0 %v682, 4
      %v1251 = vpop.permute.xlu0 %1250
      %1252 = vrot.lane.b32.xlu0 %v683, 4
      %v1253 = vpop.permute.xlu0 %1252
      %1254 = vrot.lane.b32.xlu0 %v684, 4
      %v1255 = vpop.permute.xlu0 %1254
      %1320 = vrot.lane.b32.xlu0 %v980, 8
      %v1321 = vpop.permute.xlu0 %1320
      %1322 = vrot.lane.b32.xlu0 %v981, 8
      %v1323 = vpop.permute.xlu0 %1322
      %1324 = vrot.lane.b32.xlu0 %v982, 8
      %v1325 = vpop.permute.xlu0 %1324
      %1326 = vrot.lane.b32.xlu0 %v983, 8
      %v1327 = vpop.permute.xlu0 %1326
      %1328 = vrot.lane.b32.xlu0 %v984, 8
      %v1329 = vpop.permute.xlu0 %1328
      %1330 = vrot.lane.b32.xlu0 %v985, 8
      %v1331 = vpop.permute.xlu0 %1330
      %1332 = vrot.lane.b32.xlu0 %v986, 8
      %v1333 = vpop.permute.xlu0 %1332
      %1334 = vrot.lane.b32.xlu0 %v987, 8
      %v1335 = vpop.permute.xlu0 %1334
      %1336 = vrot.lane.b32.xlu0 %v988, 8
      %v1337 = vpop.permute.xlu0 %1336
      %1338 = vrot.lane.b32.xlu0 %v989, 8
      %v1339 = vpop.permute.xlu0 %1338
      %1340 = vrot.lane.b32.xlu0 %v990, 8
      %v1341 = vpop.permute.xlu0 %1340
      %1342 = vrot.lane.b32.xlu0 %v991, 8
      %v1343 = vpop.permute.xlu0 %1342
      %1344 = vrot.lane.b32.xlu0 %v992, 8
      %v1345 = vpop.permute.xlu0 %1344
      %1346 = vrot.lane.b32.xlu0 %v993, 8
      %v1347 = vpop.permute.xlu0 %1346
      %1348 = vrot.lane.b32.xlu0 %v994, 8
      %v1349 = vpop.permute.xlu0 %1348
      %1350 = vrot.lane.b32.xlu0 %v995, 8
      %v1351 = vpop.permute.xlu0 %1350
      %1352 = vrot.lane.b32.xlu0 %v996, 8
      %v1353 = vpop.permute.xlu0 %1352
      %1354 = vrot.lane.b32.xlu0 %v997, 8
      %v1355 = vpop.permute.xlu0 %1354
      %1356 = vrot.lane.b32.xlu0 %v998, 8
      %v1357 = vpop.permute.xlu0 %1356
      %1358 = vrot.lane.b32.xlu0 %v999, 8
      %v1359 = vpop.permute.xlu0 %1358
      %1360 = vrot.lane.b32.xlu0 %v1000, 8
      %v1361 = vpop.permute.xlu0 %1360
      %1362 = vrot.lane.b32.xlu0 %v1001, 8
      %v1363 = vpop.permute.xlu0 %1362
      %1364 = vrot.lane.b32.xlu0 %v1002, 8
      %v1365 = vpop.permute.xlu0 %1364
      %1366 = vrot.lane.b32.xlu0 %v1003, 8
      %v1367 = vpop.permute.xlu0 %1366
      %1368 = vrot.lane.b32.xlu0 %v1004, 8
      %v1369 = vpop.permute.xlu0 %1368
      %1370 = vrot.lane.b32.xlu0 %v1005, 8
      %v1371 = vpop.permute.xlu0 %1370
      %1372 = vrot.lane.b32.xlu0 %v1006, 8
      %v1373 = vpop.permute.xlu0 %1372
      %1374 = vrot.lane.b32.xlu0 %v1007, 8
      %v1375 = vpop.permute.xlu0 %1374
      %1376 = vrot.lane.b32.xlu0 %v1008, 8
      %v1377 = vpop.permute.xlu0 %1376
      %1378 = vrot.lane.b32.xlu0 %v1009, 8
      %v1379 = vpop.permute.xlu0 %1378
      %1380 = vrot.lane.b32.xlu0 %v1010, 8
      %v1381 = vpop.permute.xlu0 %1380
      %1382 = vrot.lane.b32.xlu0 %v1011, 8
      %v1383 = vpop.permute.xlu0 %1382
      %1448 = vrot.lane.b32.xlu0 %v1022, 12
      %v1449 = vpop.permute.xlu0 %1448
      %1450 = vrot.lane.b32.xlu0 %v1023, 12
      %v1451 = vpop.permute.xlu0 %1450
      %1452 = vrot.lane.b32.xlu0 %v1024, 12
      %v1453 = vpop.permute.xlu0 %1452
      %1454 = vrot.lane.b32.xlu0 %v1025, 12
      %v1455 = vpop.permute.xlu0 %1454
      %1456 = vrot.lane.b32.xlu0 %v1026, 12
      %v1457 = vpop.permute.xlu0 %1456
      %1458 = vrot.lane.b32.xlu0 %v1027, 12
      %v1459 = vpop.permute.xlu0 %1458
      %1460 = vrot.lane.b32.xlu0 %v1028, 12
      %v1461 = vpop.permute.xlu0 %1460
      %1462 = vrot.lane.b32.xlu0 %v1029, 12
      %v1463 = vpop.permute.xlu0 %1462
      %1464 = vrot.lane.b32.xlu0 %v1030, 12
      %v1465 = vpop.permute.xlu0 %1464
      %1466 = vrot.lane.b32.xlu0 %v1031, 12
      %v1467 = vpop.permute.xlu0 %1466
      %1468 = vrot.lane.b32.xlu0 %v1032, 12
      %v1469 = vpop.permute.xlu0 %1468
      %1470 = vrot.lane.b32.xlu0 %v1033, 12
      %v1471 = vpop.permute.xlu0 %1470
      %1472 = vrot.lane.b32.xlu0 %v1034, 12
      %v1473 = vpop.permute.xlu0 %1472
      %1474 = vrot.lane.b32.xlu0 %v1035, 12
      %v1475 = vpop.permute.xlu0 %1474
      %1476 = vrot.lane.b32.xlu0 %v1036, 12
      %v1477 = vpop.permute.xlu0 %1476
      %1478 = vrot.lane.b32.xlu0 %v1037, 12
      %v1479 = vpop.permute.xlu0 %1478
      %1480 = vrot.lane.b32.xlu0 %v1038, 12
      %v1481 = vpop.permute.xlu0 %1480
      %1482 = vrot.lane.b32.xlu0 %v1039, 12
      %v1483 = vpop.permute.xlu0 %1482
      %1484 = vrot.lane.b32.xlu0 %v1040, 12
      %v1485 = vpop.permute.xlu0 %1484
      %1486 = vrot.lane.b32.xlu0 %v1041, 12
      %v1487 = vpop.permute.xlu0 %1486
      %1488 = vrot.lane.b32.xlu0 %v1042, 12
      %v1489 = vpop.permute.xlu0 %1488
      %1490 = vrot.lane.b32.xlu0 %v1043, 12
      %v1491 = vpop.permute.xlu0 %1490
      %1492 = vrot.lane.b32.xlu0 %v1044, 12
      %v1493 = vpop.permute.xlu0 %1492
      %1494 = vrot.lane.b32.xlu0 %v1045, 12
      %v1495 = vpop.permute.xlu0 %1494
      %1496 = vrot.lane.b32.xlu0 %v1046, 12
      %v1497 = vpop.permute.xlu0 %1496
      %1498 = vrot.lane.b32.xlu0 %v1047, 12
      %v1499 = vpop.permute.xlu0 %1498
      %1500 = vrot.lane.b32.xlu0 %v1048, 12
      %v1501 = vpop.permute.xlu0 %1500
      %1502 = vrot.lane.b32.xlu0 %v1049, 12
      %v1503 = vpop.permute.xlu0 %1502
      %1504 = vrot.lane.b32.xlu0 %v1050, 12
      %v1505 = vpop.permute.xlu0 %1504
      %1506 = vrot.lane.b32.xlu0 %v1051, 12
      %v1507 = vpop.permute.xlu0 %1506
      %1508 = vrot.lane.b32.xlu0 %v1052, 12
      %v1509 = vpop.permute.xlu0 %1508
      %1510 = vrot.lane.b32.xlu0 %v1053, 12
      %v1511 = vpop.permute.xlu0 %1510
      %1546 = vrot.lane.b32.xlu0 %v655, 16
      %v1547 = vpop.permute.xlu0 %1546
      %1548 = vrot.lane.b32.xlu0 %v656, 16
      %v1549 = vpop.permute.xlu0 %1548
      %1550 = vrot.lane.b32.xlu0 %v657, 16
      %v1551 = vpop.permute.xlu0 %1550
      %1552 = vrot.lane.b32.xlu0 %v658, 16
      %v1553 = vpop.permute.xlu0 %1552
      %1554 = vrot.lane.b32.xlu0 %v659, 16
      %v1555 = vpop.permute.xlu0 %1554
      %1556 = vrot.lane.b32.xlu0 %v660, 16
      %v1557 = vpop.permute.xlu0 %1556
      %1558 = vrot.lane.b32.xlu0 %v661, 16
      %v1559 = vpop.permute.xlu0 %1558
      %1560 = vrot.lane.b32.xlu0 %v662, 16
      %v1561 = vpop.permute.xlu0 %1560
      %1562 = vrot.lane.b32.xlu0 %v663, 16
      %v1563 = vpop.permute.xlu0 %1562
      %1564 = vrot.lane.b32.xlu0 %v664, 16
      %v1565 = vpop.permute.xlu0 %1564
      %1566 = vrot.lane.b32.xlu0 %v665, 16
      %v1567 = vpop.permute.xlu0 %1566
      %1568 = vrot.lane.b32.xlu0 %v666, 16
      %v1569 = vpop.permute.xlu0 %1568
      %1570 = vrot.lane.b32.xlu0 %v667, 16
      %v1571 = vpop.permute.xlu0 %1570
      %1572 = vrot.lane.b32.xlu0 %v668, 16
      %v1573 = vpop.permute.xlu0 %1572
      %1574 = vrot.lane.b32.xlu0 %v669, 16
      %v1575 = vpop.permute.xlu0 %1574
      %1576 = vrot.lane.b32.xlu0 %v670, 16
      %v1577 = vpop.permute.xlu0 %1576
      %1578 = vrot.lane.b32.xlu0 %v671, 16
      %v1579 = vpop.permute.xlu0 %1578
      %1580 = vrot.lane.b32.xlu0 %v672, 16
      %v1581 = vpop.permute.xlu0 %1580
      %1582 = vrot.lane.b32.xlu0 %v673, 16
      %v1583 = vpop.permute.xlu0 %1582
      %1584 = vrot.lane.b32.xlu0 %v674, 16
      %v1585 = vpop.permute.xlu0 %1584
      %1586 = vrot.lane.b32.xlu0 %v675, 16
      %v1587 = vpop.permute.xlu0 %1586
      %1588 = vrot.lane.b32.xlu0 %v676, 16
      %v1589 = vpop.permute.xlu0 %1588
      %1590 = vrot.lane.b32.xlu0 %v677, 16
      %v1591 = vpop.permute.xlu0 %1590
      %1592 = vrot.lane.b32.xlu0 %v678, 16
      %v1593 = vpop.permute.xlu0 %1592
      %1594 = vrot.lane.b32.xlu0 %v679, 16
      %v1595 = vpop.permute.xlu0 %1594
      %1596 = vrot.lane.b32.xlu0 %v680, 16
      %v1597 = vpop.permute.xlu0 %1596
      %1598 = vrot.lane.b32.xlu0 %v681, 16
      %v1599 = vpop.permute.xlu0 %1598
      %1600 = vrot.lane.b32.xlu0 %v682, 16
      %v1601 = vpop.permute.xlu0 %1600
      %1602 = vrot.lane.b32.xlu0 %v683, 16
      %v1603 = vpop.permute.xlu0 %1602
      %1604 = vrot.lane.b32.xlu0 %v684, 16
      %v1605 = vpop.permute.xlu0 %1604
      %1606 = vrot.lane.b32.xlu0 %v685, 16
      %v1607 = vpop.permute.xlu0 %1606
      %1608 = vrot.lane.b32.xlu0 %v686, 16
      %v1609 = vpop.permute.xlu0 %1608
      %1674 = vrot.lane.b32.xlu0 %v1054, 20
      %v1675 = vpop.permute.xlu0 %1674
      %1676 = vrot.lane.b32.xlu0 %v1055, 20
      %v1677 = vpop.permute.xlu0 %1676
      %1678 = vrot.lane.b32.xlu0 %v1056, 20
      %v1679 = vpop.permute.xlu0 %1678
      %1680 = vrot.lane.b32.xlu0 %v1057, 20
      %v1681 = vpop.permute.xlu0 %1680
      %1682 = vrot.lane.b32.xlu0 %v1058, 20
      %v1683 = vpop.permute.xlu0 %1682
      %1684 = vrot.lane.b32.xlu0 %v1059, 20
      %v1685 = vpop.permute.xlu0 %1684
      %1686 = vrot.lane.b32.xlu0 %v1060, 20
      %v1687 = vpop.permute.xlu0 %1686
      %1688 = vrot.lane.b32.xlu0 %v1061, 20
      %v1689 = vpop.permute.xlu0 %1688
      %1690 = vrot.lane.b32.xlu0 %v1062, 20
      %v1691 = vpop.permute.xlu0 %1690
      %1692 = vrot.lane.b32.xlu0 %v1063, 20
      %v1693 = vpop.permute.xlu0 %1692
      %1694 = vrot.lane.b32.xlu0 %v1064, 20
      %v1695 = vpop.permute.xlu0 %1694
      %1696 = vrot.lane.b32.xlu0 %v1065, 20
      %v1697 = vpop.permute.xlu0 %1696
      %1698 = vrot.lane.b32.xlu0 %v1066, 20
      %v1699 = vpop.permute.xlu0 %1698
      %1700 = vrot.lane.b32.xlu0 %v1067, 20
      %v1701 = vpop.permute.xlu0 %1700
      %1702 = vrot.lane.b32.xlu0 %v1068, 20
      %v1703 = vpop.permute.xlu0 %1702
      %1704 = vrot.lane.b32.xlu0 %v1069, 20
      %v1705 = vpop.permute.xlu0 %1704
      %1706 = vrot.lane.b32.xlu0 %v1070, 20
      %v1707 = vpop.permute.xlu0 %1706
      %1708 = vrot.lane.b32.xlu0 %v1071, 20
      %v1709 = vpop.permute.xlu0 %1708
      %1710 = vrot.lane.b32.xlu0 %v1072, 20
      %v1711 = vpop.permute.xlu0 %1710
      %1712 = vrot.lane.b32.xlu0 %v1073, 20
      %v1713 = vpop.permute.xlu0 %1712
      %1714 = vrot.lane.b32.xlu0 %v1074, 20
      %v1715 = vpop.permute.xlu0 %1714
      %1716 = vrot.lane.b32.xlu0 %v1075, 20
      %v1717 = vpop.permute.xlu0 %1716
      %1718 = vrot.lane.b32.xlu0 %v1076, 20
      %v1719 = vpop.permute.xlu0 %1718
      %1720 = vrot.lane.b32.xlu0 %v1077, 20
      %v1721 = vpop.permute.xlu0 %1720
      %1722 = vrot.lane.b32.xlu0 %v1078, 20
      %v1723 = vpop.permute.xlu0 %1722
      %1724 = vrot.lane.b32.xlu0 %v1079, 20
      %v1725 = vpop.permute.xlu0 %1724
      %1726 = vrot.lane.b32.xlu0 %v1080, 20
      %v1727 = vpop.permute.xlu0 %1726
      %1728 = vrot.lane.b32.xlu0 %v1081, 20
      %v1729 = vpop.permute.xlu0 %1728
      %1730 = vrot.lane.b32.xlu0 %v1082, 20
      %v1731 = vpop.permute.xlu0 %1730
      %1732 = vrot.lane.b32.xlu0 %v1083, 20
      %v1733 = vpop.permute.xlu0 %1732
      %1734 = vrot.lane.b32.xlu0 %v1084, 20
      %v1735 = vpop.permute.xlu0 %1734
      %1736 = vrot.lane.b32.xlu0 %v1085, 20
      %v1737 = vpop.permute.xlu0 %1736
      %1802 = vrot.lane.b32.xlu0 %v1096, 24
      %v1803 = vpop.permute.xlu0 %1802
      %1804 = vrot.lane.b32.xlu0 %v1097, 24
      %v1805 = vpop.permute.xlu0 %1804
      %1806 = vrot.lane.b32.xlu0 %v1098, 24
      %v1807 = vpop.permute.xlu0 %1806
      %1808 = vrot.lane.b32.xlu0 %v1099, 24
      %v1809 = vpop.permute.xlu0 %1808
      %1810 = vrot.lane.b32.xlu0 %v1100, 24
      %v1811 = vpop.permute.xlu0 %1810
      %1812 = vrot.lane.b32.xlu0 %v1101, 24
      %v1813 = vpop.permute.xlu0 %1812
      %1814 = vrot.lane.b32.xlu0 %v1102, 24
      %v1815 = vpop.permute.xlu0 %1814
      %1816 = vrot.lane.b32.xlu0 %v1103, 24
      %v1817 = vpop.permute.xlu0 %1816
      %1818 = vrot.lane.b32.xlu0 %v1104, 24
      %v1819 = vpop.permute.xlu0 %1818
      %1820 = vrot.lane.b32.xlu0 %v1105, 24
      %v1821 = vpop.permute.xlu0 %1820
      %1822 = vrot.lane.b32.xlu0 %v1106, 24
      %v1823 = vpop.permute.xlu0 %1822
      %1824 = vrot.lane.b32.xlu0 %v1107, 24
      %v1825 = vpop.permute.xlu0 %1824
      %1826 = vrot.lane.b32.xlu0 %v1108, 24
      %v1827 = vpop.permute.xlu0 %1826
      %1828 = vrot.lane.b32.xlu0 %v1109, 24
      %v1829 = vpop.permute.xlu0 %1828
      %1830 = vrot.lane.b32.xlu0 %v1110, 24
      %v1831 = vpop.permute.xlu0 %1830
      %1832 = vrot.lane.b32.xlu0 %v1111, 24
      %v1833 = vpop.permute.xlu0 %1832
      %1834 = vrot.lane.b32.xlu0 %v1112, 24
      %v1835 = vpop.permute.xlu0 %1834
      %1836 = vrot.lane.b32.xlu0 %v1113, 24
      %v1837 = vpop.permute.xlu0 %1836
      %1838 = vrot.lane.b32.xlu0 %v1114, 24
      %v1839 = vpop.permute.xlu0 %1838
      %1840 = vrot.lane.b32.xlu0 %v1115, 24
      %v1841 = vpop.permute.xlu0 %1840
      %1842 = vrot.lane.b32.xlu0 %v1116, 24
      %v1843 = vpop.permute.xlu0 %1842
      %1844 = vrot.lane.b32.xlu0 %v1117, 24
      %v1845 = vpop.permute.xlu0 %1844
      %1846 = vrot.lane.b32.xlu0 %v1118, 24
      %v1847 = vpop.permute.xlu0 %1846
      %1848 = vrot.lane.b32.xlu0 %v1119, 24
      %v1849 = vpop.permute.xlu0 %1848
      %1850 = vrot.lane.b32.xlu0 %v1120, 24
      %v1851 = vpop.permute.xlu0 %1850
      %1852 = vrot.lane.b32.xlu0 %v1121, 24
      %v1853 = vpop.permute.xlu0 %1852
      %1854 = vrot.lane.b32.xlu0 %v1122, 24
      %v1855 = vpop.permute.xlu0 %1854
      %1856 = vrot.lane.b32.xlu0 %v1123, 24
      %v1857 = vpop.permute.xlu0 %1856
      %1858 = vrot.lane.b32.xlu0 %v1124, 24
      %v1859 = vpop.permute.xlu0 %1858
      %1860 = vrot.lane.b32.xlu0 %v1125, 24
      %v1861 = vpop.permute.xlu0 %1860
      %1862 = vrot.lane.b32.xlu0 %v1126, 24
      %v1863 = vpop.permute.xlu0 %1862
      %1864 = vrot.lane.b32.xlu0 %v1127, 24
      %v1865 = vpop.permute.xlu0 %1864
      %1900 = vrot.lane.b32.xlu0 %v657, 28
      %v1901 = vpop.permute.xlu0 %1900
      %1902 = vrot.lane.b32.xlu0 %v658, 28
      %v1903 = vpop.permute.xlu0 %1902
      %1904 = vrot.lane.b32.xlu0 %v659, 28
      %v1905 = vpop.permute.xlu0 %1904
      %1906 = vrot.lane.b32.xlu0 %v660, 28
      %v1907 = vpop.permute.xlu0 %1906
      %1908 = vrot.lane.b32.xlu0 %v661, 28
      %v1909 = vpop.permute.xlu0 %1908
      %1910 = vrot.lane.b32.xlu0 %v662, 28
      %v1911 = vpop.permute.xlu0 %1910
      %1912 = vrot.lane.b32.xlu0 %v663, 28
      %v1913 = vpop.permute.xlu0 %1912
      %1914 = vrot.lane.b32.xlu0 %v664, 28
      %v1915 = vpop.permute.xlu0 %1914
      %1916 = vrot.lane.b32.xlu0 %v665, 28
      %v1917 = vpop.permute.xlu0 %1916
      %1918 = vrot.lane.b32.xlu0 %v666, 28
      %v1919 = vpop.permute.xlu0 %1918
      %1920 = vrot.lane.b32.xlu0 %v667, 28
      %v1921 = vpop.permute.xlu0 %1920
      %1922 = vrot.lane.b32.xlu0 %v668, 28
      %v1923 = vpop.permute.xlu0 %1922
      %1924 = vrot.lane.b32.xlu0 %v669, 28
      %v1925 = vpop.permute.xlu0 %1924
      %1926 = vrot.lane.b32.xlu0 %v670, 28
      %v1927 = vpop.permute.xlu0 %1926
      %1928 = vrot.lane.b32.xlu0 %v671, 28
      %v1929 = vpop.permute.xlu0 %1928
      %1930 = vrot.lane.b32.xlu0 %v672, 28
      %v1931 = vpop.permute.xlu0 %1930
      %1932 = vrot.lane.b32.xlu0 %v673, 28
      %v1933 = vpop.permute.xlu0 %1932
      %1934 = vrot.lane.b32.xlu0 %v674, 28
      %v1935 = vpop.permute.xlu0 %1934
      %1936 = vrot.lane.b32.xlu0 %v675, 28
      %v1937 = vpop.permute.xlu0 %1936
      %1938 = vrot.lane.b32.xlu0 %v676, 28
      %v1939 = vpop.permute.xlu0 %1938
      %1940 = vrot.lane.b32.xlu0 %v677, 28
      %v1941 = vpop.permute.xlu0 %1940
      %1942 = vrot.lane.b32.xlu0 %v678, 28
      %v1943 = vpop.permute.xlu0 %1942
      %1944 = vrot.lane.b32.xlu0 %v679, 28
      %v1945 = vpop.permute.xlu0 %1944
      %1946 = vrot.lane.b32.xlu0 %v680, 28
      %v1947 = vpop.permute.xlu0 %1946
      %1948 = vrot.lane.b32.xlu0 %v681, 28
      %v1949 = vpop.permute.xlu0 %1948
      %1950 = vrot.lane.b32.xlu0 %v682, 28
      %v1951 = vpop.permute.xlu0 %1950
      %1952 = vrot.lane.b32.xlu0 %v683, 28
      %v1953 = vpop.permute.xlu0 %1952
      %1954 = vrot.lane.b32.xlu0 %v684, 28
      %v1955 = vpop.permute.xlu0 %1954
      %1956 = vrot.lane.b32.xlu0 %v685, 28
      %v1957 = vpop.permute.xlu0 %1956
      %1958 = vrot.lane.b32.xlu0 %v686, 28
      %v1959 = vpop.permute.xlu0 %1958
      %1960 = vrot.lane.b32.xlu0 %v688, 28
      %v1961 = vpop.permute.xlu0 %1960
      %1962 = vrot.lane.b32.xlu0 %v689, 28
      %v1963 = vpop.permute.xlu0 %1962
      %2028 = vrot.lane.b32.xlu0 %v1128, 32
      %v2029 = vpop.permute.xlu0 %2028
      %2030 = vrot.lane.b32.xlu0 %v1129, 32
      %v2031 = vpop.permute.xlu0 %2030
      %2032 = vrot.lane.b32.xlu0 %v1130, 32
      %v2033 = vpop.permute.xlu0 %2032
      %2034 = vrot.lane.b32.xlu0 %v1131, 32
      %v2035 = vpop.permute.xlu0 %2034
      %2036 = vrot.lane.b32.xlu0 %v1132, 32
      %v2037 = vpop.permute.xlu0 %2036
      %2038 = vrot.lane.b32.xlu0 %v1133, 32
      %v2039 = vpop.permute.xlu0 %2038
      %2040 = vrot.lane.b32.xlu0 %v1134, 32
      %v2041 = vpop.permute.xlu0 %2040
      %2042 = vrot.lane.b32.xlu0 %v1135, 32
      %v2043 = vpop.permute.xlu0 %2042
      %2044 = vrot.lane.b32.xlu0 %v1136, 32
      %v2045 = vpop.permute.xlu0 %2044
      %2046 = vrot.lane.b32.xlu0 %v1137, 32
      %v2047 = vpop.permute.xlu0 %2046
      %2048 = vrot.lane.b32.xlu0 %v1138, 32
      %v2049 = vpop.permute.xlu0 %2048
      %2050 = vrot.lane.b32.xlu0 %v1139, 32
      %v2051 = vpop.permute.xlu0 %2050
      %2052 = vrot.lane.b32.xlu0 %v1140, 32
      %v2053 = vpop.permute.xlu0 %2052
      %2054 = vrot.lane.b32.xlu0 %v1141, 32
      %v2055 = vpop.permute.xlu0 %2054
      %2056 = vrot.lane.b32.xlu0 %v1142, 32
      %v2057 = vpop.permute.xlu0 %2056
      %2058 = vrot.lane.b32.xlu0 %v1143, 32
      %v2059 = vpop.permute.xlu0 %2058
      %2060 = vrot.lane.b32.xlu0 %v1144, 32
      %v2061 = vpop.permute.xlu0 %2060
      %2062 = vrot.lane.b32.xlu0 %v1145, 32
      %v2063 = vpop.permute.xlu0 %2062
      %2064 = vrot.lane.b32.xlu0 %v1146, 32
      %v2065 = vpop.permute.xlu0 %2064
      %2066 = vrot.lane.b32.xlu0 %v1147, 32
      %v2067 = vpop.permute.xlu0 %2066
      %2068 = vrot.lane.b32.xlu0 %v1148, 32
      %v2069 = vpop.permute.xlu0 %2068
      %2070 = vrot.lane.b32.xlu0 %v1149, 32
      %v2071 = vpop.permute.xlu0 %2070
      %2072 = vrot.lane.b32.xlu0 %v1150, 32
      %v2073 = vpop.permute.xlu0 %2072
      %2074 = vrot.lane.b32.xlu0 %v1151, 32
      %v2075 = vpop.permute.xlu0 %2074
      %2076 = vrot.lane.b32.xlu0 %v1152, 32
      %v2077 = vpop.permute.xlu0 %2076
      %2078 = vrot.lane.b32.xlu0 %v1153, 32
      %v2079 = vpop.permute.xlu0 %2078
      %2080 = vrot.lane.b32.xlu0 %v1154, 32
      %v2081 = vpop.permute.xlu0 %2080
      %2082 = vrot.lane.b32.xlu0 %v1155, 32
      %v2083 = vpop.permute.xlu0 %2082
      %2084 = vrot.lane.b32.xlu0 %v1156, 32
      %v2085 = vpop.permute.xlu0 %2084
      %2086 = vrot.lane.b32.xlu0 %v1157, 32
      %v2087 = vpop.permute.xlu0 %2086
      %2088 = vrot.lane.b32.xlu0 %v1158, 32
      %v2089 = vpop.permute.xlu0 %2088
      %2090 = vrot.lane.b32.xlu0 %v1159, 32
      %v2091 = vpop.permute.xlu0 %2090
      %vm2124 = vcmask 31744
      %v2125 = vsel %vm2124, %v884, %v1193
      %v2126 = vsel %vm2124, %v885, %v1195
      %v2127 = vsel %vm2124, %v886, %v1197
      %v2128 = vsel %vm2124, %v887, %v1199
      %v2129 = vsel %vm2124, %v888, %v1201
      %v2130 = vsel %vm2124, %v889, %v1203
      %v2131 = vsel %vm2124, %v890, %v1205
      %v2132 = vsel %vm2124, %v891, %v1207
      %v2133 = vsel %vm2124, %v892, %v1209
      %v2134 = vsel %vm2124, %v893, %v1211
      %v2135 = vsel %vm2124, %v894, %v1213
      %v2136 = vsel %vm2124, %v895, %v1215
      %v2137 = vsel %vm2124, %v896, %v1217
      %v2138 = vsel %vm2124, %v897, %v1219
      %v2139 = vsel %vm2124, %v898, %v1221
      %v2140 = vsel %vm2124, %v899, %v1223
      %v2141 = vsel %vm2124, %v900, %v1225
      %v2142 = vsel %vm2124, %v901, %v1227
      %v2143 = vsel %vm2124, %v902, %v1229
      %v2144 = vsel %vm2124, %v903, %v1231
      %v2145 = vsel %vm2124, %v904, %v1233
      %v2146 = vsel %vm2124, %v905, %v1235
      %v2147 = vsel %vm2124, %v906, %v1237
      %v2148 = vsel %vm2124, %v907, %v1239
      %v2149 = vsel %vm2124, %v908, %v1241
      %v2150 = vsel %vm2124, %v909, %v1243
      %v2151 = vsel %vm2124, %v910, %v1245
      %v2152 = vsel %vm2124, %v911, %v1247
      %v2153 = vsel %vm2124, %v912, %v1249
      %v2154 = vsel %vm2124, %v913, %v1251
      %v2155 = vsel %vm2124, %v914, %v1253
      %v2156 = vsel %vm2124, %v915, %v1255
      %vm2157 = vcmask 64512
      %v2158 = vsel %vm2157, %v2125, %v1321
      %v2159 = vsel %vm2157, %v2126, %v1323
      %v2160 = vsel %vm2157, %v2127, %v1325
      %v2161 = vsel %vm2157, %v2128, %v1327
      %v2162 = vsel %vm2157, %v2129, %v1329
      %v2163 = vsel %vm2157, %v2130, %v1331
      %v2164 = vsel %vm2157, %v2131, %v1333
      %v2165 = vsel %vm2157, %v2132, %v1335
      %v2166 = vsel %vm2157, %v2133, %v1337
      %v2167 = vsel %vm2157, %v2134, %v1339
      %v2168 = vsel %vm2157, %v2135, %v1341
      %v2169 = vsel %vm2157, %v2136, %v1343
      %v2170 = vsel %vm2157, %v2137, %v1345
      %v2171 = vsel %vm2157, %v2138, %v1347
      %v2172 = vsel %vm2157, %v2139, %v1349
      %v2173 = vsel %vm2157, %v2140, %v1351
      %v2174 = vsel %vm2157, %v2141, %v1353
      %v2175 = vsel %vm2157, %v2142, %v1355
      %v2176 = vsel %vm2157, %v2143, %v1357
      %v2177 = vsel %vm2157, %v2144, %v1359
      %v2178 = vsel %vm2157, %v2145, %v1361
      %v2179 = vsel %vm2157, %v2146, %v1363
      %v2180 = vsel %vm2157, %v2147, %v1365
      %v2181 = vsel %vm2157, %v2148, %v1367
      %v2182 = vsel %vm2157, %v2149, %v1369
      %v2183 = vsel %vm2157, %v2150, %v1371
      %v2184 = vsel %vm2157, %v2151, %v1373
      %v2185 = vsel %vm2157, %v2152, %v1375
      %v2186 = vsel %vm2157, %v2153, %v1377
      %v2187 = vsel %vm2157, %v2154, %v1379
      %v2188 = vsel %vm2157, %v2155, %v1381
      %v2189 = vsel %vm2157, %v2156, %v1383
      %vm2190 = vcmask 97280
      %v2191 = vsel %vm2190, %v2158, %v1449
      %v2192 = vsel %vm2190, %v2159, %v1451
      %v2193 = vsel %vm2190, %v2160, %v1453
      %v2194 = vsel %vm2190, %v2161, %v1455
      %v2195 = vsel %vm2190, %v2162, %v1457
      %v2196 = vsel %vm2190, %v2163, %v1459
      %v2197 = vsel %vm2190, %v2164, %v1461
      %v2198 = vsel %vm2190, %v2165, %v1463
      %v2199 = vsel %vm2190, %v2166, %v1465
      %v2200 = vsel %vm2190, %v2167, %v1467
      %v2201 = vsel %vm2190, %v2168, %v1469
      %v2202 = vsel %vm2190, %v2169, %v1471
      %v2203 = vsel %vm2190, %v2170, %v1473
      %v2204 = vsel %vm2190, %v2171, %v1475
      %v2205 = vsel %vm2190, %v2172, %v1477
      %v2206 = vsel %vm2190, %v2173, %v1479
      %v2207 = vsel %vm2190, %v2174, %v1481
      %v2208 = vsel %vm2190, %v2175, %v1483
      %v2209 = vsel %vm2190, %v2176, %v1485
      %v2210 = vsel %vm2190, %v2177, %v1487
      %v2211 = vsel %vm2190, %v2178, %v1489
      %v2212 = vsel %vm2190, %v2179, %v1491
      %v2213 = vsel %vm2190, %v2180, %v1493
      %v2214 = vsel %vm2190, %v2181, %v1495
      %v2215 = vsel %vm2190, %v2182, %v1497
      %v2216 = vsel %vm2190, %v2183, %v1499
      %v2217 = vsel %vm2190, %v2184, %v1501
      %v2218 = vsel %vm2190, %v2185, %v1503
      %v2219 = vsel %vm2190, %v2186, %v1505
      %v2220 = vsel %vm2190, %v2187, %v1507
      %v2221 = vsel %vm2190, %v2188, %v1509
      %v2222 = vsel %vm2190, %v2189, %v1511
      %vm2223 = vcmask 130048
      %v2224 = vsel %vm2223, %v2191, %v1547
      %v2225 = vsel %vm2223, %v2192, %v1549
      %v2226 = vsel %vm2223, %v2193, %v1551
      %v2227 = vsel %vm2223, %v2194, %v1553
      %v2228 = vsel %vm2223, %v2195, %v1555
      %v2229 = vsel %vm2223, %v2196, %v1557
      %v2230 = vsel %vm2223, %v2197, %v1559
      %v2231 = vsel %vm2223, %v2198, %v1561
      %v2232 = vsel %vm2223, %v2199, %v1563
      %v2233 = vsel %vm2223, %v2200, %v1565
      %v2234 = vsel %vm2223, %v2201, %v1567
      %v2235 = vsel %vm2223, %v2202, %v1569
      %v2236 = vsel %vm2223, %v2203, %v1571
      %v2237 = vsel %vm2223, %v2204, %v1573
      %v2238 = vsel %vm2223, %v2205, %v1575
      %v2239 = vsel %vm2223, %v2206, %v1577
      %v2240 = vsel %vm2223, %v2207, %v1579
      %v2241 = vsel %vm2223, %v2208, %v1581
      %v2242 = vsel %vm2223, %v2209, %v1583
      %v2243 = vsel %vm2223, %v2210, %v1585
      %v2244 = vsel %vm2223, %v2211, %v1587
      %v2245 = vsel %vm2223, %v2212, %v1589
      %v2246 = vsel %vm2223, %v2213, %v1591
      %v2247 = vsel %vm2223, %v2214, %v1593
      %v2248 = vsel %vm2223, %v2215, %v1595
      %v2249 = vsel %vm2223, %v2216, %v1597
      %v2250 = vsel %vm2223, %v2217, %v1599
      %v2251 = vsel %vm2223, %v2218, %v1601
      %v2252 = vsel %vm2223, %v2219, %v1603
      %v2253 = vsel %vm2223, %v2220, %v1605
      %v2254 = vsel %vm2223, %v2221, %v1607
      %v2255 = vsel %vm2223, %v2222, %v1609
      %vm2256 = vcmask 162816
      %v2257 = vsel %vm2256, %v2224, %v1675
      %v2258 = vsel %vm2256, %v2225, %v1677
      %v2259 = vsel %vm2256, %v2226, %v1679
      %v2260 = vsel %vm2256, %v2227, %v1681
      %v2261 = vsel %vm2256, %v2228, %v1683
      %v2262 = vsel %vm2256, %v2229, %v1685
      %v2263 = vsel %vm2256, %v2230, %v1687
      %v2264 = vsel %vm2256, %v2231, %v1689
      %v2265 = vsel %vm2256, %v2232, %v1691
      %v2266 = vsel %vm2256, %v2233, %v1693
      %v2267 = vsel %vm2256, %v2234, %v1695
      %v2268 = vsel %vm2256, %v2235, %v1697
      %v2269 = vsel %vm2256, %v2236, %v1699
      %v2270 = vsel %vm2256, %v2237, %v1701
      %v2271 = vsel %vm2256, %v2238, %v1703
      %v2272 = vsel %vm2256, %v2239, %v1705
      %v2273 = vsel %vm2256, %v2240, %v1707
      %v2274 = vsel %vm2256, %v2241, %v1709
      %v2275 = vsel %vm2256, %v2242, %v1711
      %v2276 = vsel %vm2256, %v2243, %v1713
      %v2277 = vsel %vm2256, %v2244, %v1715
      %v2278 = vsel %vm2256, %v2245, %v1717
      %v2279 = vsel %vm2256, %v2246, %v1719
      %v2280 = vsel %vm2256, %v2247, %v1721
      %v2281 = vsel %vm2256, %v2248, %v1723
      %v2282 = vsel %vm2256, %v2249, %v1725
      %v2283 = vsel %vm2256, %v2250, %v1727
      %v2284 = vsel %vm2256, %v2251, %v1729
      %v2285 = vsel %vm2256, %v2252, %v1731
      %v2286 = vsel %vm2256, %v2253, %v1733
      %v2287 = vsel %vm2256, %v2254, %v1735
      %v2288 = vsel %vm2256, %v2255, %v1737
      %vm2289 = vcmask 195584
      %v2290 = vsel %vm2289, %v2257, %v1803
      %v2291 = vsel %vm2289, %v2258, %v1805
      %v2292 = vsel %vm2289, %v2259, %v1807
      %v2293 = vsel %vm2289, %v2260, %v1809
      %v2294 = vsel %vm2289, %v2261, %v1811
      %v2295 = vsel %vm2289, %v2262, %v1813
      %v2296 = vsel %vm2289, %v2263, %v1815
      %v2297 = vsel %vm2289, %v2264, %v1817
      %v2298 = vsel %vm2289, %v2265, %v1819
      %v2299 = vsel %vm2289, %v2266, %v1821
      %v2300 = vsel %vm2289, %v2267, %v1823
      %v2301 = vsel %vm2289, %v2268, %v1825
      %v2302 = vsel %vm2289, %v2269, %v1827
      %v2303 = vsel %vm2289, %v2270, %v1829
      %v2304 = vsel %vm2289, %v2271, %v1831
      %v2305 = vsel %vm2289, %v2272, %v1833
      %v2306 = vsel %vm2289, %v2273, %v1835
      %v2307 = vsel %vm2289, %v2274, %v1837
      %v2308 = vsel %vm2289, %v2275, %v1839
      %v2309 = vsel %vm2289, %v2276, %v1841
      %v2310 = vsel %vm2289, %v2277, %v1843
      %v2311 = vsel %vm2289, %v2278, %v1845
      %v2312 = vsel %vm2289, %v2279, %v1847
      %v2313 = vsel %vm2289, %v2280, %v1849
      %v2314 = vsel %vm2289, %v2281, %v1851
      %v2315 = vsel %vm2289, %v2282, %v1853
      %v2316 = vsel %vm2289, %v2283, %v1855
      %v2317 = vsel %vm2289, %v2284, %v1857
      %v2318 = vsel %vm2289, %v2285, %v1859
      %v2319 = vsel %vm2289, %v2286, %v1861
      %v2320 = vsel %vm2289, %v2287, %v1863
      %v2321 = vsel %vm2289, %v2288, %v1865
      %vm2322 = vcmask 228352
      %v2323 = vsel %vm2322, %v2290, %v1901
      %v2324 = vsel %vm2322, %v2291, %v1903
      %v2325 = vsel %vm2322, %v2292, %v1905
      %v2326 = vsel %vm2322, %v2293, %v1907
      %v2327 = vsel %vm2322, %v2294, %v1909
      %v2328 = vsel %vm2322, %v2295, %v1911
      %v2329 = vsel %vm2322, %v2296, %v1913
      %v2330 = vsel %vm2322, %v2297, %v1915
      %v2331 = vsel %vm2322, %v2298, %v1917
      %v2332 = vsel %vm2322, %v2299, %v1919
      %v2333 = vsel %vm2322, %v2300, %v1921
      %v2334 = vsel %vm2322, %v2301, %v1923
      %v2335 = vsel %vm2322, %v2302, %v1925
      %v2336 = vsel %vm2322, %v2303, %v1927
      %v2337 = vsel %vm2322, %v2304, %v1929
      %v2338 = vsel %vm2322, %v2305, %v1931
      %v2339 = vsel %vm2322, %v2306, %v1933
      %v2340 = vsel %vm2322, %v2307, %v1935
      %v2341 = vsel %vm2322, %v2308, %v1937
      %v2342 = vsel %vm2322, %v2309, %v1939
      %v2343 = vsel %vm2322, %v2310, %v1941
      %v2344 = vsel %vm2322, %v2311, %v1943
      %v2345 = vsel %vm2322, %v2312, %v1945
      %v2346 = vsel %vm2322, %v2313, %v1947
      %v2347 = vsel %vm2322, %v2314, %v1949
      %v2348 = vsel %vm2322, %v2315, %v1951
      %v2349 = vsel %vm2322, %v2316, %v1953
      %v2350 = vsel %vm2322, %v2317, %v1955
      %v2351 = vsel %vm2322, %v2318, %v1957
      %v2352 = vsel %vm2322, %v2319, %v1959
      %v2353 = vsel %vm2322, %v2320, %v1961
      %v2354 = vsel %vm2322, %v2321, %v1963
      %vm2355 = vcmask 261120
      %v2356 = vsel %vm2355, %v2323, %v2029
      %v2357 = vsel %vm2355, %v2324, %v2031
      %v2358 = vsel %vm2355, %v2325, %v2033
      %v2359 = vsel %vm2355, %v2326, %v2035
      %v2360 = vsel %vm2355, %v2327, %v2037
      %v2361 = vsel %vm2355, %v2328, %v2039
      %v2362 = vsel %vm2355, %v2329, %v2041
      %v2363 = vsel %vm2355, %v2330, %v2043
      %v2364 = vsel %vm2355, %v2331, %v2045
      %v2365 = vsel %vm2355, %v2332, %v2047
      %v2366 = vsel %vm2355, %v2333, %v2049
      %v2367 = vsel %vm2355, %v2334, %v2051
      %v2368 = vsel %vm2355, %v2335, %v2053
      %v2369 = vsel %vm2355, %v2336, %v2055
      %v2370 = vsel %vm2355, %v2337, %v2057
      %v2371 = vsel %vm2355, %v2338, %v2059
      %v2372 = vsel %vm2355, %v2339, %v2061
      %v2373 = vsel %vm2355, %v2340, %v2063
      %v2374 = vsel %vm2355, %v2341, %v2065
      %v2375 = vsel %vm2355, %v2342, %v2067
      %v2376 = vsel %vm2355, %v2343, %v2069
      %v2377 = vsel %vm2355, %v2344, %v2071
      %v2378 = vsel %vm2355, %v2345, %v2073
      %v2379 = vsel %vm2355, %v2346, %v2075
      %v2380 = vsel %vm2355, %v2347, %v2077
      %v2381 = vsel %vm2355, %v2348, %v2079
      %v2382 = vsel %vm2355, %v2349, %v2081
      %v2383 = vsel %vm2355, %v2350, %v2083
      %v2384 = vsel %vm2355, %v2351, %v2085
      %v2385 = vsel %vm2355, %v2352, %v2087
      %v2386 = vsel %vm2355, %v2353, %v2089
      %v2387 = vsel %vm2355, %v2354, %v2091
      %v2388 = vld [vmem:[%s1] sm:$0xff]
      %v2389 = vld [vmem:[%s1 + $0x8] sm:$0xff]
      %v2390 = vld [vmem:[%s1 + $0x10] sm:$0xff]
      %v2391 = vld [vmem:[%s1 + $0x18] sm:$0xff]
      %v2392 = vld [vmem:[%s1 + $0x20] sm:$0xf]
      %vm2393 = vcmask 293888
      %v2395 = vsel %vm2393, %v2356, 0
      %v2398 = vsel %vm2393, %v2357, 0
      %v2401 = vsel %vm2393, %v2358, 0
      %v2404 = vsel %vm2393, %v2359, 0
      %v2407 = vsel %vm2393, %v2360, 0
      %v2410 = vsel %vm2393, %v2361, 0
      %v2413 = vsel %vm2393, %v2362, 0
      %v2416 = vsel %vm2393, %v2363, 0
      %v2419 = vsel %vm2393, %v2364, 0
      %v2422 = vsel %vm2393, %v2365, 0
      %v2425 = vsel %vm2393, %v2366, 0
      %v2428 = vsel %vm2393, %v2367, 0
      %v2431 = vsel %vm2393, %v2368, 0
      %v2434 = vsel %vm2393, %v2369, 0
      %v2437 = vsel %vm2393, %v2370, 0
      %v2440 = vsel %vm2393, %v2371, 0
      %v2443 = vsel %vm2393, %v2372, 0
      %v2446 = vsel %vm2393, %v2373, 0
      %v2449 = vsel %vm2393, %v2374, 0
      %v2452 = vsel %vm2393, %v2375, 0
      %v2455 = vsel %vm2393, %v2376, 0
      %v2458 = vsel %vm2393, %v2377, 0
      %v2461 = vsel %vm2393, %v2378, 0
      %v2464 = vsel %vm2393, %v2379, 0
      %v2467 = vsel %vm2393, %v2380, 0
      %v2470 = vsel %vm2393, %v2381, 0
      %v2473 = vsel %vm2393, %v2382, 0
      %v2476 = vsel %vm2393, %v2383, 0
      %v2479 = vsel %vm2393, %v2384, 0
      %v2482 = vsel %vm2393, %v2385, 0
      %v2485 = vsel %vm2393, %v2386, 0
      %v2488 = vsel %vm2393, %v2387, 0
      %vm2490 = vcmask 1043456
      %v2492 = vsel %vm2490, %v2392, 0
      %2494 = vmatprep.subr.mxu0 0.0
      %2495 = vmatpush1.msra.mxu0 %v2388
      %2496 = vmatprep.subr.mxu0 0.0
      %2497 = vmatpush1.msra.mxu0 %v2389
      %2498 = vmatprep.subr.mxu0 0.0
      %2499 = vmatpush1.msra.mxu0 %v2390
      %2500 = vmatprep.subr.mxu0 0.0
      %2501 = vmatpush1.msra.mxu0 %v2391
      %2502 = vmatprep.subr.mxu0 0.0
      %2503 = vmatpush1.msra.mxu0 %v2492
      %2504 = vmatprep.subr.mxu0 0.0
      %2505 = vmatpush1.msra.mxu0 0.0
      %2506 = vmatprep.subr.mxu0 0.0
      %2507 = vmatpush1.msra.mxu0 0.0
      %2508 = vmatprep.subr.mxu0 0.0
      %2509 = vmatpush1.msra.mxu0 0.0
      %2510 = vmatprep.subr.mxu0 0.0
      %2511 = vmatpush1.msra.mxu0 0.0
      %2512 = vmatprep.subr.mxu0 0.0
      %2513 = vmatpush1.msra.mxu0 0.0
      %2514 = vmatprep.subr.mxu0 0.0
      %2515 = vmatpush1.msra.mxu0 0.0
      %2516 = vmatprep.subr.mxu0 0.0
      %2517 = vmatpush1.msra.mxu0 0.0
      %2518 = vmatprep.subr.mxu0 0.0
      %2519 = vmatpush1.msra.mxu0 0.0
      %2520 = vmatprep.subr.mxu0 0.0
      %2521 = vmatpush1.msra.mxu0 0.0
      %2522 = vmatprep.subr.mxu0 0.0
      %2523 = vmatpush1.msra.mxu0 0.0
      %2524 = vmatprep.subr.mxu0 0.0
      %2525 = vmatpush1.msra.mxu0 0.0
      %2526 = vmatprep.subr.mxu0 0.0
      %2527 = vmatpush1.msra.mxu0 0.0
      %2528 = vmatprep.subr.mxu0 0.0
      %2529 = vmatpush1.msra.mxu0 0.0
      %2530 = vmatprep.subr.mxu0 0.0
      %2531 = vmatpush1.msra.mxu0 0.0
      %2532 = vmatprep.subr.mxu0 0.0
      %2533 = vmatpush1.msra.mxu0 0.0
      %2534 = vmatprep.subr.mxu0 0.0
      %2535 = vmatpush1.msra.mxu0 0.0
      %2536 = vmatprep.subr.mxu0 0.0
      %2537 = vmatpush1.msra.mxu0 0.0
      %2538 = vmatprep.subr.mxu0 0.0
      %2539 = vmatpush1.msra.mxu0 0.0
      %2540 = vmatprep.subr.mxu0 0.0
      %2541 = vmatpush1.msra.mxu0 0.0
      %2542 = vmatprep.subr.mxu0 0.0
      %2543 = vmatpush1.msra.mxu0 0.0
      %2544 = vmatprep.subr.mxu0 0.0
      %2545 = vmatpush1.msra.mxu0 0.0
      %2546 = vmatprep.subr.mxu0 0.0
      %2547 = vmatpush1.msra.mxu0 0.0
      %2548 = vmatprep.subr.mxu0 0.0
      %2549 = vmatpush1.msra.mxu0 0.0
      %2550 = vmatprep.subr.mxu0 0.0
      %2551 = vmatpush1.msra.mxu0 0.0
      %2552 = vmatprep.subr.mxu0 0.0
      %2553 = vmatpush1.msra.mxu0 0.0
      %2554 = vmatprep.subr.mxu0 0.0
      %2555 = vmatpush1.msra.mxu0 0.0
      %2556 = vmatprep.subr.mxu0 0.0
      %2557 = vmatpush1.msra.mxu0 0.0
      %2558 = vmatprep.mubr.f32.mxu0 0.0
      %2559 = vmatmul.mubr.f32.gmra.mrb[0].mxu0 %v2395
      %v2560 = vpop.f32.mrb[0].mxu0
      %v2561 = vadd.f32 0.0, %v2560
      %v2562 = vpop.f32.mrb[0].mxu0
      %2563 = vmatprep.mubr.f32.mxu0 0.0
      %2564 = vmatmul.mubr.f32.gmra.mrb[0].mxu0 %v2398
      %v2565 = vpop.f32.mrb[0].mxu0
      %v2566 = vadd.f32 0.0, %v2565
      %v2567 = vpop.f32.mrb[0].mxu0
      %2568 = vmatprep.mubr.f32.mxu0 0.0
      %2569 = vmatmul.mubr.f32.gmra.mrb[0].mxu0 %v2401
      %v2570 = vpop.f32.mrb[0].mxu0
      %v2571 = vadd.f32 0.0, %v2570
      %v2572 = vpop.f32.mrb[0].mxu0
      %2573 = vmatprep.mubr.f32.mxu0 0.0
      %2574 = vmatmul.mubr.f32.gmra.mrb[0].mxu0 %v2404
      %v2575 = vpop.f32.mrb[0].mxu0
      %v2576 = vadd.f32 0.0, %v2575
      %v2577 = vpop.f32.mrb[0].mxu0
      %2578 = vmatprep.mubr.f32.mxu0 0.0
      %2579 = vmatmul.mubr.f32.gmra.mrb[0].mxu0 %v2407
      %v2580 = vpop.f32.mrb[0].mxu0
      %v2581 = vadd.f32 0.0, %v2580
      %v2582 = vpop.f32.mrb[0].mxu0
      %2583 = vmatprep.mubr.f32.mxu0 0.0
      %2584 = vmatmul.mubr.f32.gmra.mrb[0].mxu0 %v2410
      %v2585 = vpop.f32.mrb[0].mxu0
      %v2586 = vadd.f32 0.0, %v2585
      %v2587 = vpop.f32.mrb[0].mxu0
      %2588 = vmatprep.mubr.f32.mxu0 0.0
      %2589 = vmatmul.mubr.f32.gmra.mrb[0].mxu0 %v2413
      %v2590 = vpop.f32.mrb[0].mxu0
      %v2591 = vadd.f32 0.0, %v2590
      %v2592 = vpop.f32.mrb[0].mxu0
      %2593 = vmatprep.mubr.f32.mxu0 0.0
      %2594 = vmatmul.mubr.f32.gmra.mrb[0].mxu0 %v2416
      %v2595 = vpop.f32.mrb[0].mxu0
      %v2596 = vadd.f32 0.0, %v2595
      %v2597 = vpop.f32.mrb[0].mxu0
      %2598 = vmatprep.mubr.f32.mxu0 0.0
      %2599 = vmatmul.mubr.f32.gmra.mrb[0].mxu0 %v2419
      %v2600 = vpop.f32.mrb[0].mxu0
      %v2601 = vadd.f32 0.0, %v2600
      %v2602 = vpop.f32.mrb[0].mxu0
      %2603 = vmatprep.mubr.f32.mxu0 0.0
      %2604 = vmatmul.mubr.f32.gmra.mrb[0].mxu0 %v2422
      %v2605 = vpop.f32.mrb[0].mxu0
      %v2606 = vadd.f32 0.0, %v2605
      %v2607 = vpop.f32.mrb[0].mxu0
      %2608 = vmatprep.mubr.f32.mxu0 0.0
      %2609 = vmatmul.mubr.f32.gmra.mrb[0].mxu0 %v2425
      %v2610 = vpop.f32.mrb[0].mxu0
      %v2611 = vadd.f32 0.0, %v2610
      %v2612 = vpop.f32.mrb[0].mxu0
      %2613 = vmatprep.mubr.f32.mxu0 0.0
      %2614 = vmatmul.mubr.f32.gmra.mrb[0].mxu0 %v2428
      %v2615 = vpop.f32.mrb[0].mxu0
      %v2616 = vadd.f32 0.0, %v2615
      %v2617 = vpop.f32.mrb[0].mxu0
      %2618 = vmatprep.mubr.f32.mxu0 0.0
      %2619 = vmatmul.mubr.f32.gmra.mrb[0].mxu0 %v2431
      %v2620 = vpop.f32.mrb[0].mxu0
      %v2621 = vadd.f32 0.0, %v2620
      %v2622 = vpop.f32.mrb[0].mxu0
      %2623 = vmatprep.mubr.f32.mxu0 0.0
      %2624 = vmatmul.mubr.f32.gmra.mrb[0].mxu0 %v2434
      %v2625 = vpop.f32.mrb[0].mxu0
      %v2626 = vadd.f32 0.0, %v2625
      %v2627 = vpop.f32.mrb[0].mxu0
      %2628 = vmatprep.mubr.f32.mxu0 0.0
      %2629 = vmatmul.mubr.f32.gmra.mrb[0].mxu0 %v2437
      %v2630 = vpop.f32.mrb[0].mxu0
      %v2631 = vadd.f32 0.0, %v2630
      %v2632 = vpop.f32.mrb[0].mxu0
      %2633 = vmatprep.mubr.f32.mxu0 0.0
      %2634 = vmatmul.mubr.f32.gmra.mrb[0].mxu0 %v2440
      %v2635 = vpop.f32.mrb[0].mxu0
      %v2636 = vadd.f32 0.0, %v2635
      %v2637 = vpop.f32.mrb[0].mxu0
      %2638 = vmatprep.mubr.f32.mxu0 0.0
      %2639 = vmatmul.mubr.f32.gmra.mrb[0].mxu0 %v2443
      %v2640 = vpop.f32.mrb[0].mxu0
      %v2641 = vadd.f32 0.0, %v2640
      %v2642 = vpop.f32.mrb[0].mxu0
      %2643 = vmatprep.mubr.f32.mxu0 0.0
      %2644 = vmatmul.mubr.f32.gmra.mrb[0].mxu0 %v2446
      %v2645 = vpop.f32.mrb[0].mxu0
      %v2646 = vadd.f32 0.0, %v2645
      %v2647 = vpop.f32.mrb[0].mxu0
      %2648 = vmatprep.mubr.f32.mxu0 0.0
      %2649 = vmatmul.mubr.f32.gmra.mrb[0].mxu0 %v2449
      %v2650 = vpop.f32.mrb[0].mxu0
      %v2651 = vadd.f32 0.0, %v2650
      %v2652 = vpop.f32.mrb[0].mxu0
      %2653 = vmatprep.mubr.f32.mxu0 0.0
      %2654 = vmatmul.mubr.f32.gmra.mrb[0].mxu0 %v2452
      %v2655 = vpop.f32.mrb[0].mxu0
      %v2656 = vadd.f32 0.0, %v2655
      %v2657 = vpop.f32.mrb[0].mxu0
      %2658 = vmatprep.mubr.f32.mxu0 0.0
      %2659 = vmatmul.mubr.f32.gmra.mrb[0].mxu0 %v2455
      %v2660 = vpop.f32.mrb[0].mxu0
      %v2661 = vadd.f32 0.0, %v2660
      %v2662 = vpop.f32.mrb[0].mxu0
      %2663 = vmatprep.mubr.f32.mxu0 0.0
      %2664 = vmatmul.mubr.f32.gmra.mrb[0].mxu0 %v2458
      %v2665 = vpop.f32.mrb[0].mxu0
      %v2666 = vadd.f32 0.0, %v2665
      %v2667 = vpop.f32.mrb[0].mxu0
      %2668 = vmatprep.mubr.f32.mxu0 0.0
      %2669 = vmatmul.mubr.f32.gmra.mrb[0].mxu0 %v2461
      %v2670 = vpop.f32.mrb[0].mxu0
      %v2671 = vadd.f32 0.0, %v2670
      %v2672 = vpop.f32.mrb[0].mxu0
      %2673 = vmatprep.mubr.f32.mxu0 0.0
      %2674 = vmatmul.mubr.f32.gmra.mrb[0].mxu0 %v2464
      %v2675 = vpop.f32.mrb[0].mxu0
      %v2676 = vadd.f32 0.0, %v2675
      %v2677 = vpop.f32.mrb[0].mxu0
      %2678 = vmatprep.mubr.f32.mxu0 0.0
      %2679 = vmatmul.mubr.f32.gmra.mrb[0].mxu0 %v2467
      %v2680 = vpop.f32.mrb[0].mxu0
      %v2681 = vadd.f32 0.0, %v2680
      %v2682 = vpop.f32.mrb[0].mxu0
      %2683 = vmatprep.mubr.f32.mxu0 0.0
      %2684 = vmatmul.mubr.f32.gmra.mrb[0].mxu0 %v2470
      %v2685 = vpop.f32.mrb[0].mxu0
      %v2686 = vadd.f32 0.0, %v2685
      %v2687 = vpop.f32.mrb[0].mxu0
      %2688 = vmatprep.mubr.f32.mxu0 0.0
      %2689 = vmatmul.mubr.f32.gmra.mrb[0].mxu0 %v2473
      %v2690 = vpop.f32.mrb[0].mxu0
      %v2691 = vadd.f32 0.0, %v2690
      %v2692 = vpop.f32.mrb[0].mxu0
      %2693 = vmatprep.mubr.f32.mxu0 0.0
      %2694 = vmatmul.mubr.f32.gmra.mrb[0].mxu0 %v2476
      %v2695 = vpop.f32.mrb[0].mxu0
      %v2696 = vadd.f32 0.0, %v2695
      %v2697 = vpop.f32.mrb[0].mxu0
      %2698 = vmatprep.mubr.f32.mxu0 0.0
      %2699 = vmatmul.mubr.f32.gmra.mrb[0].mxu0 %v2479
      %v2700 = vpop.f32.mrb[0].mxu0
      %v2701 = vadd.f32 0.0, %v2700
      %v2702 = vpop.f32.mrb[0].mxu0
      %2703 = vmatprep.mubr.f32.mxu0 0.0
      %2704 = vmatmul.mubr.f32.gmra.mrb[0].mxu0 %v2482
      %v2705 = vpop.f32.mrb[0].mxu0
      %v2706 = vadd.f32 0.0, %v2705
      %v2707 = vpop.f32.mrb[0].mxu0
      %2708 = vmatprep.mubr.f32.mxu0 0.0
      %2709 = vmatmul.mubr.f32.gmra.mrb[0].mxu0 %v2485
      %v2710 = vpop.f32.mrb[0].mxu0
      %v2711 = vadd.f32 0.0, %v2710
      %v2712 = vpop.f32.mrb[0].mxu0
      %2713 = vmatprep.mubr.f32.mxu0 0.0
      %2714 = vmatmul.mubr.f32.gmra.mrb[0].mxu0 %v2488
      %v2715 = vpop.f32.mrb[0].mxu0
      %v2716 = vadd.f32 0.0, %v2715
      %v2717 = vpop.f32.mrb[0].mxu0
      %2718 = vdwg.mxu0
      %2719 = vst.msk [vmem:[#allocation2] sm:$0xff] %vm2124, %v2561
      %2720 = vst.msk [vmem:[#allocation2 + $0x8] sm:$0xff] %vm2124, %v2566
      %2721 = vst.msk [vmem:[#allocation2 + $0x10] sm:$0xff] %vm2124, %v2571
      %2722 = vst.msk [vmem:[#allocation2 + $0x18] sm:$0xff] %vm2124, %v2576
      %2723 = vst.msk [vmem:[#allocation2 + $0x20] sm:$0xff] %vm2124, %v2581
      %2724 = vst.msk [vmem:[#allocation2 + $0x28] sm:$0xff] %vm2124, %v2586
      %2725 = vst.msk [vmem:[#allocation2 + $0x30] sm:$0xff] %vm2124, %v2591
      %2726 = vst.msk [vmem:[#allocation2 + $0x38] sm:$0xff] %vm2124, %v2596
      %2727 = vst.msk [vmem:[#allocation2 + $0x40] sm:$0xff] %vm2124, %v2601
      %2728 = vst.msk [vmem:[#allocation2 + $0x48] sm:$0xff] %vm2124, %v2606
      %2729 = vst.msk [vmem:[#allocation2 + $0x50] sm:$0xff] %vm2124, %v2611
      %2730 = vst.msk [vmem:[#allocation2 + $0x58] sm:$0xff] %vm2124, %v2616
      %2731 = vst.msk [vmem:[#allocation2 + $0x60] sm:$0xff] %vm2124, %v2621
      %2732 = vst.msk [vmem:[#allocation2 + $0x68] sm:$0xff] %vm2124, %v2626
      %2733 = vst.msk [vmem:[#allocation2 + $0x70] sm:$0xff] %vm2124, %v2631
      %2734 = vst.msk [vmem:[#allocation2 + $0x78] sm:$0xff] %vm2124, %v2636
      %2735 = vst.msk [vmem:[#allocation2 + $0x80] sm:$0xff] %vm2124, %v2641
      %2736 = vst.msk [vmem:[#allocation2 + $0x88] sm:$0xff] %vm2124, %v2646
      %2737 = vst.msk [vmem:[#allocation2 + $0x90] sm:$0xff] %vm2124, %v2651
      %2738 = vst.msk [vmem:[#allocation2 + $0x98] sm:$0xff] %vm2124, %v2656
      %2739 = vst.msk [vmem:[#allocation2 + $0xa0] sm:$0xff] %vm2124, %v2661
      %2740 = vst.msk [vmem:[#allocation2 + $0xa8] sm:$0xff] %vm2124, %v2666
      %2741 = vst.msk [vmem:[#allocation2 + $0xb0] sm:$0xff] %vm2124, %v2671
      %2742 = vst.msk [vmem:[#allocation2 + $0xb8] sm:$0xff] %vm2124, %v2676
      %2743 = vst.msk [vmem:[#allocation2 + $0xc0] sm:$0xff] %vm2124, %v2681
      %2744 = vst.msk [vmem:[#allocation2 + $0xc8] sm:$0xff] %vm2124, %v2686
      %2745 = vst.msk [vmem:[#allocation2 + $0xd0] sm:$0xff] %vm2124, %v2691
      %2746 = vst.msk [vmem:[#allocation2 + $0xd8] sm:$0xff] %vm2124, %v2696
      %2747 = vst.msk [vmem:[#allocation2 + $0xe0] sm:$0xff] %vm2124, %v2701
      %2748 = vst.msk [vmem:[#allocation2 + $0xe8] sm:$0xff] %vm2124, %v2706
      %2749 = vst.msk [vmem:[#allocation2 + $0xf0] sm:$0xff] %vm2124, %v2711
      %2750 = vst.msk [vmem:[#allocation2 + $0xf8] sm:$0xff] %vm2124, %v2716
      %v2751 = vsel %vm2124, %v2561, 0.0
      %v2752 = vsel %vm2124, %v2566, 0.0
      %v2753 = vadd.f32 %v2751, %v2752
      %v2754 = vsel %vm2124, %v2571, 0.0
      %v2755 = vadd.f32 %v2753, %v2754
      %v2756 = vsel %vm2124, %v2576, 0.0
      %v2757 = vadd.f32 %v2755, %v2756
      %v2758 = vsel %vm2124, %v2581, 0.0
      %v2759 = vadd.f32 %v2757, %v2758
      %v2760 = vsel %vm2124, %v2586, 0.0
      %v2761 = vadd.f32 %v2759, %v2760
      %v2762 = vsel %vm2124, %v2591, 0.0
      %v2763 = vadd.f32 %v2761, %v2762
      %v2764 = vsel %vm2124, %v2596, 0.0
      %v2765 = vadd.f32 %v2763, %v2764
      %v2766 = vsel %vm2124, %v2601, 0.0
      %v2767 = vadd.f32 %v2765, %v2766
      %v2768 = vsel %vm2124, %v2606, 0.0
      %v2769 = vadd.f32 %v2767, %v2768
      %v2770 = vsel %vm2124, %v2611, 0.0
      %v2771 = vadd.f32 %v2769, %v2770
      %v2772 = vsel %vm2124, %v2616, 0.0
      %v2773 = vadd.f32 %v2771, %v2772
      %v2774 = vsel %vm2124, %v2621, 0.0
      %v2775 = vadd.f32 %v2773, %v2774
      %v2776 = vsel %vm2124, %v2626, 0.0
      %v2777 = vadd.f32 %v2775, %v2776
      %v2778 = vsel %vm2124, %v2631, 0.0
      %v2779 = vadd.f32 %v2777, %v2778
      %v2780 = vsel %vm2124, %v2636, 0.0
      %v2781 = vadd.f32 %v2779, %v2780
      %v2782 = vsel %vm2124, %v2641, 0.0
      %v2783 = vadd.f32 %v2781, %v2782
      %v2784 = vsel %vm2124, %v2646, 0.0
      %v2785 = vadd.f32 %v2783, %v2784
      %v2786 = vsel %vm2124, %v2651, 0.0
      %v2787 = vadd.f32 %v2785, %v2786
      %v2788 = vsel %vm2124, %v2656, 0.0
      %v2789 = vadd.f32 %v2787, %v2788
      %v2790 = vsel %vm2124, %v2661, 0.0
      %v2791 = vadd.f32 %v2789, %v2790
      %v2792 = vsel %vm2124, %v2666, 0.0
      %v2793 = vadd.f32 %v2791, %v2792
      %v2794 = vsel %vm2124, %v2671, 0.0
      %v2795 = vadd.f32 %v2793, %v2794
      %v2796 = vsel %vm2124, %v2676, 0.0
      %v2797 = vadd.f32 %v2795, %v2796
      %v2798 = vsel %vm2124, %v2681, 0.0
      %v2799 = vadd.f32 %v2797, %v2798
      %v2800 = vsel %vm2124, %v2686, 0.0
      %v2801 = vadd.f32 %v2799, %v2800
      %v2802 = vsel %vm2124, %v2691, 0.0
      %v2803 = vadd.f32 %v2801, %v2802
      %v2804 = vsel %vm2124, %v2696, 0.0
      %v2805 = vadd.f32 %v2803, %v2804
      %v2806 = vsel %vm2124, %v2701, 0.0
      %v2807 = vadd.f32 %v2805, %v2806
      %v2808 = vsel %vm2124, %v2706, 0.0
      %v2809 = vadd.f32 %v2807, %v2808
      %v2810 = vsel %vm2124, %v2711, 0.0
      %v2811 = vadd.f32 %v2809, %v2810
      %v2812 = vsel %vm2124, %v2716, 0.0
      %v2813 = vadd.f32 %v2811, %v2812
      %v2814 = vrot.slane %v2813, 4
      %v2815 = vadd.f32 %v2813, %v2814
      %v2816 = vrot.slane %v2815, 2
      %v2817 = vadd.f32 %v2815, %v2816
      %v2818 = vrot.slane %v2817, 1
      %v2819 = vadd.f32 %v2817, %v2818
      %v2820 = vadd.f32 %v2819, 0.0
      %v2821 = vmul.f32 %v2561, %v2561
      %v2822 = vmul.f32 %v2566, %v2566
      %v2823 = vmul.f32 %v2571, %v2571
      %v2824 = vmul.f32 %v2576, %v2576
      %v2825 = vmul.f32 %v2581, %v2581
      %v2826 = vmul.f32 %v2586, %v2586
      %v2827 = vmul.f32 %v2591, %v2591
      %v2828 = vmul.f32 %v2596, %v2596
      %v2829 = vmul.f32 %v2601, %v2601
      %v2830 = vmul.f32 %v2606, %v2606
      %v2831 = vmul.f32 %v2611, %v2611
      %v2832 = vmul.f32 %v2616, %v2616
      %v2833 = vmul.f32 %v2621, %v2621
      %v2834 = vmul.f32 %v2626, %v2626
      %v2835 = vmul.f32 %v2631, %v2631
      %v2836 = vmul.f32 %v2636, %v2636
      %v2837 = vmul.f32 %v2641, %v2641
      %v2838 = vmul.f32 %v2646, %v2646
      %v2839 = vmul.f32 %v2651, %v2651
      %v2840 = vmul.f32 %v2656, %v2656
      %v2841 = vmul.f32 %v2661, %v2661
      %v2842 = vmul.f32 %v2666, %v2666
      %v2843 = vmul.f32 %v2671, %v2671
      %v2844 = vmul.f32 %v2676, %v2676
      %v2845 = vmul.f32 %v2681, %v2681
      %v2846 = vmul.f32 %v2686, %v2686
      %v2847 = vmul.f32 %v2691, %v2691
      %v2848 = vmul.f32 %v2696, %v2696
      %v2849 = vmul.f32 %v2701, %v2701
      %v2850 = vmul.f32 %v2706, %v2706
      %v2851 = vmul.f32 %v2711, %v2711
      %v2852 = vmul.f32 %v2716, %v2716
      %v2853 = vsel %vm2124, %v2821, 0.0
      %v2854 = vsel %vm2124, %v2822, 0.0
      %v2855 = vadd.f32 %v2853, %v2854
      %v2856 = vsel %vm2124, %v2823, 0.0
      %v2857 = vadd.f32 %v2855, %v2856
      %v2858 = vsel %vm2124, %v2824, 0.0
      %v2859 = vadd.f32 %v2857, %v2858
      %v2860 = vsel %vm2124, %v2825, 0.0
      %v2861 = vadd.f32 %v2859, %v2860
      %v2862 = vsel %vm2124, %v2826, 0.0
      %v2863 = vadd.f32 %v2861, %v2862
      %v2864 = vsel %vm2124, %v2827, 0.0
      %v2865 = vadd.f32 %v2863, %v2864
      %v2866 = vsel %vm2124, %v2828, 0.0
      %v2867 = vadd.f32 %v2865, %v2866
      %v2868 = vsel %vm2124, %v2829, 0.0
      %v2869 = vadd.f32 %v2867, %v2868
      %v2870 = vsel %vm2124, %v2830, 0.0
      %v2871 = vadd.f32 %v2869, %v2870
      %v2872 = vsel %vm2124, %v2831, 0.0
      %v2873 = vadd.f32 %v2871, %v2872
      %v2874 = vsel %vm2124, %v2832, 0.0
      %v2875 = vadd.f32 %v2873, %v2874
      %v2876 = vsel %vm2124, %v2833, 0.0
      %v2877 = vadd.f32 %v2875, %v2876
      %v2878 = vsel %vm2124, %v2834, 0.0
      %v2879 = vadd.f32 %v2877, %v2878
      %v2880 = vsel %vm2124, %v2835, 0.0
      %v2881 = vadd.f32 %v2879, %v2880
      %v2882 = vsel %vm2124, %v2836, 0.0
      %v2883 = vadd.f32 %v2881, %v2882
      %v2884 = vsel %vm2124, %v2837, 0.0
      %v2885 = vadd.f32 %v2883, %v2884
      %v2886 = vsel %vm2124, %v2838, 0.0
      %v2887 = vadd.f32 %v2885, %v2886
      %v2888 = vsel %vm2124, %v2839, 0.0
      %v2889 = vadd.f32 %v2887, %v2888
      %v2890 = vsel %vm2124, %v2840, 0.0
      %v2891 = vadd.f32 %v2889, %v2890
      %v2892 = vsel %vm2124, %v2841, 0.0
      %v2893 = vadd.f32 %v2891, %v2892
      %v2894 = vsel %vm2124, %v2842, 0.0
      %v2895 = vadd.f32 %v2893, %v2894
      %v2896 = vsel %vm2124, %v2843, 0.0
      %v2897 = vadd.f32 %v2895, %v2896
      %v2898 = vsel %vm2124, %v2844, 0.0
      %v2899 = vadd.f32 %v2897, %v2898
      %v2900 = vsel %vm2124, %v2845, 0.0
      %v2901 = vadd.f32 %v2899, %v2900
      %v2902 = vsel %vm2124, %v2846, 0.0
      %v2903 = vadd.f32 %v2901, %v2902
      %v2904 = vsel %vm2124, %v2847, 0.0
      %v2905 = vadd.f32 %v2903, %v2904
      %v2906 = vsel %vm2124, %v2848, 0.0
      %v2907 = vadd.f32 %v2905, %v2906
      %v2908 = vsel %vm2124, %v2849, 0.0
      %v2909 = vadd.f32 %v2907, %v2908
      %v2910 = vsel %vm2124, %v2850, 0.0
      %v2911 = vadd.f32 %v2909, %v2910
      %v2912 = vsel %vm2124, %v2851, 0.0
      %v2913 = vadd.f32 %v2911, %v2912
      %v2914 = vsel %vm2124, %v2852, 0.0
      %v2915 = vadd.f32 %v2913, %v2914
      %v2916 = vrot.slane %v2915, 4
      %v2917 = vadd.f32 %v2915, %v2916
      %v2918 = vrot.slane %v2917, 2
      %v2919 = vadd.f32 %v2917, %v2918
      %v2920 = vrot.slane %v2919, 1
      %v2921 = vadd.f32 %v2919, %v2920
      %v2922 = vadd.f32 %v2921, 0.0
      %v2923 = vrcp.pop 256.0
      %v2924 = vmul.f32 %v2820, %v2923
      %v2925 = vmul.f32 %v2922, %v2923
      %v2926 = vmul.f32 %v2924, %v2924
      %v2927 = vsub.f32 %v2925, %v2926
      %v2928 = vmax.f32 %v2927, 0.0
      %v2929 = vadd.f32 %v2928, 1e-05
      %v2930 = vrsqrt.pop %v2929
      %s2931 = scalar_lea.vmem [#allocation2], 16
      %v2932 = vld [vmem:[%s2931] sm:$0xff]
      %v2933 = vld [vmem:[%s2931 + $0x8] sm:$0xff]
      %v2934 = vld [vmem:[#allocation2] sm:$0xff]
      %v2935 = vld [vmem:[#allocation2 + $0x8] sm:$0xff]
      %v2936 = vld [vmem:[#allocation2 + $0x10] sm:$0xff]
      %v2937 = vld [vmem:[#allocation2 + $0x18] sm:$0xff]
      %v2938 = vld [vmem:[#allocation2 + $0x20] sm:$0xff]
      %v2939 = vld [vmem:[#allocation2 + $0x28] sm:$0xff]
      %v2940 = vld [vmem:[#allocation2 + $0x30] sm:$0xff]
      %v2941 = vld [vmem:[#allocation2 + $0x38] sm:$0xff]
      %v2942 = vld [vmem:[#allocation2 + $0x40] sm:$0xff]
      %v2943 = vld [vmem:[#allocation2 + $0x48] sm:$0xff]
      %v2944 = vld [vmem:[#allocation2 + $0x50] sm:$0xff]
      %v2945 = vld [vmem:[#allocation2 + $0x58] sm:$0xff]
      %v2946 = vld [vmem:[#allocation2 + $0x60] sm:$0xff]
      %v2947 = vld [vmem:[#allocation2 + $0x68] sm:$0xff]
      %v2948 = vld [vmem:[#allocation2 + $0x70] sm:$0xff]
      %v2949 = vld [vmem:[#allocation2 + $0x78] sm:$0xff]
      %v2950 = vld [vmem:[#allocation2 + $0x80] sm:$0xff]
      %v2951 = vld [vmem:[#allocation2 + $0x88] sm:$0xff]
      %v2952 = vld [vmem:[#allocation2 + $0x90] sm:$0xff]
      %v2953 = vld [vmem:[#allocation2 + $0x98] sm:$0xff]
      %v2954 = vld [vmem:[#allocation2 + $0xa0] sm:$0xff]
      %v2955 = vld [vmem:[#allocation2 + $0xa8] sm:$0xff]
      %v2956 = vld [vmem:[#allocation2 + $0xb0] sm:$0xff]
      %v2957 = vld [vmem:[#allocation2 + $0xb8] sm:$0xff]
      %v2958 = vld [vmem:[#allocation2 + $0xc0] sm:$0xff]
      %v2959 = vld [vmem:[#allocation2 + $0xc8] sm:$0xff]
      %v2960 = vld [vmem:[#allocation2 + $0xd0] sm:$0xff]
      %v2961 = vld [vmem:[#allocation2 + $0xd8] sm:$0xff]
      %v2962 = vld [vmem:[#allocation2 + $0xe0] sm:$0xff]
      %v2963 = vld [vmem:[#allocation2 + $0xe8] sm:$0xff]
      %v2964 = vld [vmem:[#allocation2 + $0xf0] sm:$0xff]
      %v2965 = vld [vmem:[#allocation2 + $0xf8] sm:$0xff]
      %s2966 = scalar_lea.vmem [#allocation2], 224
      %v2967 = vld [vmem:[%s2966] sm:$0xff]
      %v2968 = vld [vmem:[%s2966 + $0x8] sm:$0xff]
      %v2969 = vsub.f32 %v2932, %v2924
      %v2970 = vsub.f32 %v2933, %v2924
      %v2971 = vsub.f32 %v2934, %v2924
      %v2972 = vsub.f32 %v2935, %v2924
      %v2973 = vsub.f32 %v2936, %v2924
      %v2974 = vsub.f32 %v2937, %v2924
      %v2975 = vsub.f32 %v2938, %v2924
      %v2976 = vsub.f32 %v2939, %v2924
      %v2977 = vsub.f32 %v2940, %v2924
      %v2978 = vsub.f32 %v2941, %v2924
      %v2979 = vsub.f32 %v2942, %v2924
      %v2980 = vsub.f32 %v2943, %v2924
      %v2981 = vsub.f32 %v2944, %v2924
      %v2982 = vsub.f32 %v2945, %v2924
      %v2983 = vsub.f32 %v2946, %v2924
      %v2984 = vsub.f32 %v2947, %v2924
      %v2985 = vsub.f32 %v2948, %v2924
      %v2986 = vsub.f32 %v2949, %v2924
      %v2987 = vsub.f32 %v2950, %v2924
      %v2988 = vsub.f32 %v2951, %v2924
      %v2989 = vsub.f32 %v2952, %v2924
      %v2990 = vsub.f32 %v2953, %v2924
      %v2991 = vsub.f32 %v2954, %v2924
      %v2992 = vsub.f32 %v2955, %v2924
      %v2993 = vsub.f32 %v2956, %v2924
      %v2994 = vsub.f32 %v2957, %v2924
      %v2995 = vsub.f32 %v2958, %v2924
      %v2996 = vsub.f32 %v2959, %v2924
      %v2997 = vsub.f32 %v2960, %v2924
      %v2998 = vsub.f32 %v2961, %v2924
      %v2999 = vsub.f32 %v2962, %v2924
      %v3000 = vsub.f32 %v2963, %v2924
      %v3001 = vsub.f32 %v2964, %v2924
      %v3002 = vsub.f32 %v2965, %v2924
      %v3003 = vsub.f32 %v2967, %v2924
      %v3004 = vsub.f32 %v2968, %v2924
      %v3005 = vmul.f32 %v2969, %v2930
      %v3006 = vmul.f32 %v2970, %v2930
      %v3007 = vmul.f32 %v2971, %v2930
      %v3008 = vmul.f32 %v2972, %v2930
      %v3009 = vmul.f32 %v2973, %v2930
      %v3010 = vmul.f32 %v2974, %v2930
      %v3011 = vmul.f32 %v2975, %v2930
      %v3012 = vmul.f32 %v2976, %v2930
      %v3013 = vmul.f32 %v2977, %v2930
      %v3014 = vmul.f32 %v2978, %v2930
      %v3015 = vmul.f32 %v2979, %v2930
      %v3016 = vmul.f32 %v2980, %v2930
      %v3017 = vmul.f32 %v2981, %v2930
      %v3018 = vmul.f32 %v2982, %v2930
      %v3019 = vmul.f32 %v2983, %v2930
      %v3020 = vmul.f32 %v2984, %v2930
      %v3021 = vmul.f32 %v2985, %v2930
      %v3022 = vmul.f32 %v2986, %v2930
      %v3023 = vmul.f32 %v2987, %v2930
      %v3024 = vmul.f32 %v2988, %v2930
      %v3025 = vmul.f32 %v2989, %v2930
      %v3026 = vmul.f32 %v2990, %v2930
      %v3027 = vmul.f32 %v2991, %v2930
      %v3028 = vmul.f32 %v2992, %v2930
      %v3029 = vmul.f32 %v2993, %v2930
      %v3030 = vmul.f32 %v2994, %v2930
      %v3031 = vmul.f32 %v2995, %v2930
      %v3032 = vmul.f32 %v2996, %v2930
      %v3033 = vmul.f32 %v2997, %v2930
      %v3034 = vmul.f32 %v2998, %v2930
      %v3035 = vmul.f32 %v2999, %v2930
      %v3036 = vmul.f32 %v3000, %v2930
      %v3037 = vmul.f32 %v3001, %v2930
      %v3038 = vmul.f32 %v3002, %v2930
      %v3039 = vmul.f32 %v3003, %v2930
      %v3040 = vmul.f32 %v3004, %v2930
      %v3041 = vmax.f32 %v3005, 0.0
      %v3042 = vmax.f32 %v3006, 0.0
      %v3043 = vmax.f32 %v3007, 0.0
      %v3044 = vmax.f32 %v3008, 0.0
      %v3045 = vmax.f32 %v3009, 0.0
      %v3046 = vmax.f32 %v3010, 0.0
      %v3047 = vmax.f32 %v3011, 0.0
      %v3048 = vmax.f32 %v3012, 0.0
      %v3049 = vmax.f32 %v3013, 0.0
      %v3050 = vmax.f32 %v3014, 0.0
      %v3051 = vmax.f32 %v3015, 0.0
      %v3052 = vmax.f32 %v3016, 0.0
      %v3053 = vmax.f32 %v3017, 0.0
      %v3054 = vmax.f32 %v3018, 0.0
      %v3055 = vmax.f32 %v3019, 0.0
      %v3056 = vmax.f32 %v3020, 0.0
      %v3057 = vmax.f32 %v3021, 0.0
      %v3058 = vmax.f32 %v3022, 0.0
      %v3059 = vmax.f32 %v3023, 0.0
      %v3060 = vmax.f32 %v3024, 0.0
      %v3061 = vmax.f32 %v3025, 0.0
      %v3062 = vmax.f32 %v3026, 0.0
      %v3063 = vmax.f32 %v3027, 0.0
      %v3064 = vmax.f32 %v3028, 0.0
      %v3065 = vmax.f32 %v3029, 0.0
      %v3066 = vmax.f32 %v3030, 0.0
      %v3067 = vmax.f32 %v3031, 0.0
      %v3068 = vmax.f32 %v3032, 0.0
      %v3069 = vmax.f32 %v3033, 0.0
      %v3070 = vmax.f32 %v3034, 0.0
      %v3071 = vmax.f32 %v3035, 0.0
      %v3072 = vmax.f32 %v3036, 0.0
      %v3073 = vmax.f32 %v3037, 0.0
      %v3074 = vmax.f32 %v3038, 0.0
      %v3075 = vmax.f32 %v3039, 0.0
      %v3076 = vmax.f32 %v3040, 0.0
      %v3077 = vrot.slane %v3041, 7
      %v3078 = vrot.slane %v3042, 7
      %v3079 = vrot.slane %v3043, 7
      %v3080 = vrot.slane %v3044, 7
      %v3081 = vrot.slane %v3045, 7
      %v3082 = vrot.slane %v3046, 7
      %v3083 = vrot.slane %v3047, 7
      %v3084 = vrot.slane %v3048, 7
      %v3085 = vrot.slane %v3049, 7
      %v3086 = vrot.slane %v3050, 7
      %v3087 = vrot.slane %v3051, 7
      %v3088 = vrot.slane %v3052, 7
      %v3089 = vrot.slane %v3053, 7
      %v3090 = vrot.slane %v3054, 7
      %v3091 = vrot.slane %v3055, 7
      %v3092 = vrot.slane %v3056, 7
      %v3093 = vrot.slane %v3057, 7
      %v3094 = vrot.slane %v3058, 7
      %v3095 = vrot.slane %v3059, 7
      %v3096 = vrot.slane %v3060, 7
      %v3097 = vrot.slane %v3061, 7
      %v3098 = vrot.slane %v3062, 7
      %v3099 = vrot.slane %v3063, 7
      %v3100 = vrot.slane %v3064, 7
      %v3101 = vrot.slane %v3065, 7
      %v3102 = vrot.slane %v3066, 7
      %v3103 = vrot.slane %v3067, 7
      %v3104 = vrot.slane %v3068, 7
      %v3105 = vrot.slane %v3069, 7
      %v3106 = vrot.slane %v3070, 7
      %v3107 = vrot.slane %v3071, 7
      %v3108 = vrot.slane %v3072, 7
      %v3109 = vsel %vm722, %v3107, %v3108
      %v3110 = vsel %vm722, %v3106, %v3107
      %v3111 = vsel %vm722, %v3105, %v3106
      %v3112 = vsel %vm722, %v3104, %v3105
      %v3113 = vsel %vm722, %v3103, %v3104
      %v3114 = vsel %vm722, %v3102, %v3103
      %v3115 = vsel %vm722, %v3101, %v3102
      %v3116 = vsel %vm722, %v3100, %v3101
      %v3117 = vsel %vm722, %v3099, %v3100
      %v3118 = vsel %vm722, %v3098, %v3099
      %v3119 = vsel %vm722, %v3097, %v3098
      %v3120 = vsel %vm722, %v3096, %v3097
      %v3121 = vsel %vm722, %v3095, %v3096
      %v3122 = vsel %vm722, %v3094, %v3095
      %v3123 = vsel %vm722, %v3093, %v3094
      %v3124 = vsel %vm722, %v3092, %v3093
      %v3125 = vsel %vm722, %v3091, %v3092
      %v3126 = vsel %vm722, %v3090, %v3091
      %v3127 = vsel %vm722, %v3089, %v3090
      %v3128 = vsel %vm722, %v3088, %v3089
      %v3129 = vsel %vm722, %v3087, %v3088
      %v3130 = vsel %vm722, %v3086, %v3087
      %v3131 = vsel %vm722, %v3085, %v3086
      %v3132 = vsel %vm722, %v3084, %v3085
      %v3133 = vsel %vm722, %v3083, %v3084
      %v3134 = vsel %vm722, %v3082, %v3083
      %v3135 = vsel %vm722, %v3081, %v3082
      %v3136 = vsel %vm722, %v3080, %v3081
      %v3137 = vsel %vm722, %v3079, %v3080
      %v3138 = vsel %vm722, %v3078, %v3079
      %v3139 = vsel %vm722, %v3077, %v3078
      %v3140 = vsel %vm722, %v3108, %v3077
      %v3141 = vrot.slane %v3041, 1
      %v3142 = vrot.slane %v3042, 1
      %v3143 = vrot.slane %v3043, 1
      %v3144 = vrot.slane %v3044, 1
      %v3145 = vrot.slane %v3045, 1
      %v3146 = vrot.slane %v3046, 1
      %v3147 = vrot.slane %v3047, 1
      %v3148 = vrot.slane %v3048, 1
      %v3149 = vrot.slane %v3049, 1
      %v3150 = vrot.slane %v3050, 1
      %v3151 = vrot.slane %v3051, 1
      %v3152 = vrot.slane %v3052, 1
      %v3153 = vrot.slane %v3053, 1
      %v3154 = vrot.slane %v3054, 1
      %v3155 = vrot.slane %v3055, 1
      %v3156 = vrot.slane %v3056, 1
      %v3157 = vrot.slane %v3057, 1
      %v3158 = vrot.slane %v3058, 1
      %v3159 = vrot.slane %v3059, 1
      %v3160 = vrot.slane %v3060, 1
      %v3161 = vrot.slane %v3061, 1
      %v3162 = vrot.slane %v3062, 1
      %v3163 = vrot.slane %v3063, 1
      %v3164 = vrot.slane %v3064, 1
      %v3165 = vrot.slane %v3065, 1
      %v3166 = vrot.slane %v3066, 1
      %v3167 = vrot.slane %v3067, 1
      %v3168 = vrot.slane %v3068, 1
      %v3169 = vrot.slane %v3069, 1
      %v3170 = vrot.slane %v3070, 1
      %v3171 = vrot.slane %v3071, 1
      %v3172 = vrot.slane %v3072, 1
      %v3173 = vsel %vm787, %v3171, %v3172
      %v3174 = vsel %vm787, %v3170, %v3171
      %v3175 = vsel %vm787, %v3169, %v3170
      %v3176 = vsel %vm787, %v3168, %v3169
      %v3177 = vsel %vm787, %v3167, %v3168
      %v3178 = vsel %vm787, %v3166, %v3167
      %v3179 = vsel %vm787, %v3165, %v3166
      %v3180 = vsel %vm787, %v3164, %v3165
      %v3181 = vsel %vm787, %v3163, %v3164
      %v3182 = vsel %vm787, %v3162, %v3163
      %v3183 = vsel %vm787, %v3161, %v3162
      %v3184 = vsel %vm787, %v3160, %v3161
      %v3185 = vsel %vm787, %v3159, %v3160
      %v3186 = vsel %vm787, %v3158, %v3159
      %v3187 = vsel %vm787, %v3157, %v3158
      %v3188 = vsel %vm787, %v3156, %v3157
      %v3189 = vsel %vm787, %v3155, %v3156
      %v3190 = vsel %vm787, %v3154, %v3155
      %v3191 = vsel %vm787, %v3153, %v3154
      %v3192 = vsel %vm787, %v3152, %v3153
      %v3193 = vsel %vm787, %v3151, %v3152
      %v3194 = vsel %vm787, %v3150, %v3151
      %v3195 = vsel %vm787, %v3149, %v3150
      %v3196 = vsel %vm787, %v3148, %v3149
      %v3197 = vsel %vm787, %v3147, %v3148
      %v3198 = vsel %vm787, %v3146, %v3147
      %v3199 = vsel %vm787, %v3145, %v3146
      %v3200 = vsel %vm787, %v3144, %v3145
      %v3201 = vsel %vm787, %v3143, %v3144
      %v3202 = vsel %vm787, %v3142, %v3143
      %v3203 = vsel %vm787, %v3141, %v3142
      %v3204 = vsel %vm787, %v3172, %v3141
      %v3205 = vsel %vm852, %v3203, %v3140
      %v3206 = vsel %vm853, %v3202, %v3139
      %v3207 = vsel %vm854, %v3201, %v3138
      %v3208 = vsel %vm855, %v3200, %v3137
      %v3209 = vsel %vm856, %v3199, %v3136
      %v3210 = vsel %vm857, %v3198, %v3135
      %v3211 = vsel %vm858, %v3197, %v3134
      %v3212 = vsel %vm859, %v3196, %v3133
      %v3213 = vsel %vm860, %v3195, %v3132
      %v3214 = vsel %vm861, %v3194, %v3131
      %v3215 = vsel %vm862, %v3193, %v3130
      %v3216 = vsel %vm863, %v3192, %v3129
      %v3217 = vsel %vm864, %v3191, %v3128
      %v3218 = vsel %vm865, %v3190, %v3127
      %v3219 = vsel %vm866, %v3189, %v3126
      %v3220 = vsel %vm867, %v3188, %v3125
      %v3221 = vsel %vm868, %v3187, %v3124
      %v3222 = vsel %vm869, %v3186, %v3123
      %v3223 = vsel %vm870, %v3185, %v3122
      %v3224 = vsel %vm871, %v3184, %v3121
      %v3225 = vsel %vm872, %v3183, %v3120
      %v3226 = vsel %vm873, %v3182, %v3119
      %v3227 = vsel %vm874, %v3181, %v3118
      %v3228 = vsel %vm875, %v3180, %v3117
      %v3229 = vsel %vm876, %v3179, %v3116
      %v3230 = vsel %vm877, %v3178, %v3115
      %v3231 = vsel %vm878, %v3177, %v3114
      %v3232 = vsel %vm879, %v3176, %v3113
      %v3233 = vsel %vm880, %v3175, %v3112
      %v3234 = vsel %vm881, %v3174, %v3111
      %v3235 = vsel %vm882, %v3173, %v3110
      %v3236 = vsel %vm883, %v3204, %v3109
      %v3237 = vsel %vm948, %v3140, %v3203
      %v3238 = vsel %vm949, %v3139, %v3202
      %v3239 = vsel %vm950, %v3138, %v3201
      %v3240 = vsel %vm951, %v3137, %v3200
      %v3241 = vsel %vm952, %v3136, %v3199
      %v3242 = vsel %vm953, %v3135, %v3198
      %v3243 = vsel %vm954, %v3134, %v3197
      %v3244 = vsel %vm955, %v3133, %v3196
      %v3245 = vsel %vm956, %v3132, %v3195
      %v3246 = vsel %vm957, %v3131, %v3194
      %v3247 = vsel %vm958, %v3130, %v3193
      %v3248 = vsel %vm959, %v3129, %v3192
      %v3249 = vsel %vm960, %v3128, %v3191
      %v3250 = vsel %vm961, %v3127, %v3190
      %v3251 = vsel %vm962, %v3126, %v3189
      %v3252 = vsel %vm963, %v3125, %v3188
      %v3253 = vsel %vm964, %v3124, %v3187
      %v3254 = vsel %vm965, %v3123, %v3186
      %v3255 = vsel %vm966, %v3122, %v3185
      %v3256 = vsel %vm967, %v3121, %v3184
      %v3257 = vsel %vm968, %v3120, %v3183
      %v3258 = vsel %vm969, %v3119, %v3182
      %v3259 = vsel %vm970, %v3118, %v3181
      %v3260 = vsel %vm971, %v3117, %v3180
      %v3261 = vsel %vm972, %v3116, %v3179
      %v3262 = vsel %vm973, %v3115, %v3178
      %v3263 = vsel %vm974, %v3114, %v3177
      %v3264 = vsel %vm975, %v3113, %v3176
      %v3265 = vsel %vm976, %v3112, %v3175
      %v3266 = vsel %vm977, %v3111, %v3174
      %v3267 = vsel %vm978, %v3110, %v3173
      %v3268 = vsel %vm979, %v3109, %v3204
      %v3269 = vrot.slane %v3073, 7
      %v3270 = vrot.slane %v3074, 7
      %v3271 = vsel %vm722, %v3269, %v3270
      %v3272 = vsel %vm722, %v3108, %v3269
      %v3273 = vsel %vm722, %v3270, %v3079
      %v3274 = vrot.slane %v3073, 1
      %v3275 = vrot.slane %v3074, 1
      %v3276 = vsel %vm787, %v3274, %v3275
      %v3277 = vsel %vm787, %v3172, %v3274
      %v3278 = vsel %vm787, %v3275, %v3143
      %v3279 = vsel %vm852, %v3201, %v3273
      %v3280 = vsel %vm853, %v3200, %v3137
      %v3281 = vsel %vm854, %v3199, %v3136
      %v3282 = vsel %vm855, %v3198, %v3135
      %v3283 = vsel %vm856, %v3197, %v3134
      %v3284 = vsel %vm857, %v3196, %v3133
      %v3285 = vsel %vm858, %v3195, %v3132
      %v3286 = vsel %vm859, %v3194, %v3131
      %v3287 = vsel %vm860, %v3193, %v3130
      %v3288 = vsel %vm861, %v3192, %v3129
      %v3289 = vsel %vm862, %v3191, %v3128
      %v3290 = vsel %vm863, %v3190, %v3127
      %v3291 = vsel %vm864, %v3189, %v3126
      %v3292 = vsel %vm865, %v3188, %v3125
      %v3293 = vsel %vm866, %v3187, %v3124
      %v3294 = vsel %vm867, %v3186, %v3123
      %v3295 = vsel %vm868, %v3185, %v3122
      %v3296 = vsel %vm869, %v3184, %v3121
      %v3297 = vsel %vm870, %v3183, %v3120
      %v3298 = vsel %vm871, %v3182, %v3119
      %v3299 = vsel %vm872, %v3181, %v3118
      %v3300 = vsel %vm873, %v3180, %v3117
      %v3301 = vsel %vm874, %v3179, %v3116
      %v3302 = vsel %vm875, %v3178, %v3115
      %v3303 = vsel %vm876, %v3177, %v3114
      %v3304 = vsel %vm877, %v3176, %v3113
      %v3305 = vsel %vm878, %v3175, %v3112
      %v3306 = vsel %vm879, %v3174, %v3111
      %v3307 = vsel %vm880, %v3173, %v3110
      %v3308 = vsel %vm881, %v3277, %v3109
      %v3309 = vsel %vm882, %v3276, %v3272
      %v3310 = vsel %vm883, %v3278, %v3271
      %v3311 = vsel %vm948, %v3273, %v3201
      %v3312 = vsel %vm949, %v3137, %v3200
      %v3313 = vsel %vm950, %v3136, %v3199
      %v3314 = vsel %vm951, %v3135, %v3198
      %v3315 = vsel %vm952, %v3134, %v3197
      %v3316 = vsel %vm953, %v3133, %v3196
      %v3317 = vsel %vm954, %v3132, %v3195
      %v3318 = vsel %vm955, %v3131, %v3194
      %v3319 = vsel %vm956, %v3130, %v3193
      %v3320 = vsel %vm957, %v3129, %v3192
      %v3321 = vsel %vm958, %v3128, %v3191
      %v3322 = vsel %vm959, %v3127, %v3190
      %v3323 = vsel %vm960, %v3126, %v3189
      %v3324 = vsel %vm961, %v3125, %v3188
      %v3325 = vsel %vm962, %v3124, %v3187
      %v3326 = vsel %vm963, %v3123, %v3186
      %v3327 = vsel %vm964, %v3122, %v3185
      %v3328 = vsel %vm965, %v3121, %v3184
      %v3329 = vsel %vm966, %v3120, %v3183
      %v3330 = vsel %vm967, %v3119, %v3182
      %v3331 = vsel %vm968, %v3118, %v3181
      %v3332 = vsel %vm969, %v3117, %v3180
      %v3333 = vsel %vm970, %v3116, %v3179
      %v3334 = vsel %vm971, %v3115, %v3178
      %v3335 = vsel %vm972, %v3114, %v3177
      %v3336 = vsel %vm973, %v3113, %v3176
      %v3337 = vsel %vm974, %v3112, %v3175
      %v3338 = vsel %vm975, %v3111, %v3174
      %v3339 = vsel %vm976, %v3110, %v3173
      %v3340 = vsel %vm977, %v3109, %v3277
      %v3341 = vsel %vm978, %v3272, %v3276
      %v3342 = vsel %vm979, %v3271, %v3278
      %v3343 = vrot.slane %v3075, 7
      %v3344 = vrot.slane %v3076, 7
      %v3345 = vsel %vm722, %v3343, %v3344
      %v3346 = vsel %vm722, %v3270, %v3343
      %v3347 = vsel %vm722, %v3344, %v3081
      %v3348 = vrot.slane %v3075, 1
      %v3349 = vrot.slane %v3076, 1
      %v3350 = vsel %vm787, %v3348, %v3349
      %v3351 = vsel %vm787, %v3275, %v3348
      %v3352 = vsel %vm787, %v3349, %v3145
      %v3353 = vsel %vm852, %v3199, %v3347
      %v3354 = vsel %vm853, %v3198, %v3135
      %v3355 = vsel %vm854, %v3197, %v3134
      %v3356 = vsel %vm855, %v3196, %v3133
      %v3357 = vsel %vm856, %v3195, %v3132
      %v3358 = vsel %vm857, %v3194, %v3131
      %v3359 = vsel %vm858, %v3193, %v3130
      %v3360 = vsel %vm859, %v3192, %v3129
      %v3361 = vsel %vm860, %v3191, %v3128
      %v3362 = vsel %vm861, %v3190, %v3127
      %v3363 = vsel %vm862, %v3189, %v3126
      %v3364 = vsel %vm863, %v3188, %v3125
      %v3365 = vsel %vm864, %v3187, %v3124
      %v3366 = vsel %vm865, %v3186, %v3123
      %v3367 = vsel %vm866, %v3185, %v3122
      %v3368 = vsel %vm867, %v3184, %v3121
      %v3369 = vsel %vm868, %v3183, %v3120
      %v3370 = vsel %vm869, %v3182, %v3119
      %v3371 = vsel %vm870, %v3181, %v3118
      %v3372 = vsel %vm871, %v3180, %v3117
      %v3373 = vsel %vm872, %v3179, %v3116
      %v3374 = vsel %vm873, %v3178, %v3115
      %v3375 = vsel %vm874, %v3177, %v3114
      %v3376 = vsel %vm875, %v3176, %v3113
      %v3377 = vsel %vm876, %v3175, %v3112
      %v3378 = vsel %vm877, %v3174, %v3111
      %v3379 = vsel %vm878, %v3173, %v3110
      %v3380 = vsel %vm879, %v3277, %v3109
      %v3381 = vsel %vm880, %v3276, %v3272
      %v3382 = vsel %vm881, %v3351, %v3271
      %v3383 = vsel %vm882, %v3350, %v3346
      %v3384 = vsel %vm883, %v3352, %v3345
      %v3385 = vsel %vm948, %v3347, %v3199
      %v3386 = vsel %vm949, %v3135, %v3198
      %v3387 = vsel %vm950, %v3134, %v3197
      %v3388 = vsel %vm951, %v3133, %v3196
      %v3389 = vsel %vm952, %v3132, %v3195
      %v3390 = vsel %vm953, %v3131, %v3194
      %v3391 = vsel %vm954, %v3130, %v3193
      %v3392 = vsel %vm955, %v3129, %v3192
      %v3393 = vsel %vm956, %v3128, %v3191
      %v3394 = vsel %vm957, %v3127, %v3190
      %v3395 = vsel %vm958, %v3126, %v3189
      %v3396 = vsel %vm959, %v3125, %v3188
      %v3397 = vsel %vm960, %v3124, %v3187
      %v3398 = vsel %vm961, %v3123, %v3186
      %v3399 = vsel %vm962, %v3122, %v3185
      %v3400 = vsel %vm963, %v3121, %v3184
      %v3401 = vsel %vm964, %v3120, %v3183
      %v3402 = vsel %vm965, %v3119, %v3182
      %v3403 = vsel %vm966, %v3118, %v3181
      %v3404 = vsel %vm967, %v3117, %v3180
      %v3405 = vsel %vm968, %v3116, %v3179
      %v3406 = vsel %vm969, %v3115, %v3178
      %v3407 = vsel %vm970, %v3114, %v3177
      %v3408 = vsel %vm971, %v3113, %v3176
      %v3409 = vsel %vm972, %v3112, %v3175
      %v3410 = vsel %vm973, %v3111, %v3174
      %v3411 = vsel %vm974, %v3110, %v3173
      %v3412 = vsel %vm975, %v3109, %v3277
      %v3413 = vsel %vm976, %v3272, %v3276
      %v3414 = vsel %vm977, %v3271, %v3351
      %v3415 = vsel %vm978, %v3346, %v3350
      %v3416 = vsel %vm979, %v3345, %v3352
      %3449 = vrot.lane.b32.xlu0 %v3041, 4
      %v3450 = vpop.permute.xlu0 %3449
      %3451 = vrot.lane.b32.xlu0 %v3042, 4
      %v3452 = vpop.permute.xlu0 %3451
      %3453 = vrot.lane.b32.xlu0 %v3043, 4
      %v3454 = vpop.permute.xlu0 %3453
      %3455 = vrot.lane.b32.xlu0 %v3044, 4
      %v3456 = vpop.permute.xlu0 %3455
      %3457 = vrot.lane.b32.xlu0 %v3045, 4
      %v3458 = vpop.permute.xlu0 %3457
      %3459 = vrot.lane.b32.xlu0 %v3046, 4
      %v3460 = vpop.permute.xlu0 %3459
      %3461 = vrot.lane.b32.xlu0 %v3047, 4
      %v3462 = vpop.permute.xlu0 %3461
      %3463 = vrot.lane.b32.xlu0 %v3048, 4
      %v3464 = vpop.permute.xlu0 %3463
      %3465 = vrot.lane.b32.xlu0 %v3049, 4
      %v3466 = vpop.permute.xlu0 %3465
      %3467 = vrot.lane.b32.xlu0 %v3050, 4
      %v3468 = vpop.permute.xlu0 %3467
      %3469 = vrot.lane.b32.xlu0 %v3051, 4
      %v3470 = vpop.permute.xlu0 %3469
      %3471 = vrot.lane.b32.xlu0 %v3052, 4
      %v3472 = vpop.permute.xlu0 %3471
      %3473 = vrot.lane.b32.xlu0 %v3053, 4
      %v3474 = vpop.permute.xlu0 %3473
      %3475 = vrot.lane.b32.xlu0 %v3054, 4
      %v3476 = vpop.permute.xlu0 %3475
      %3477 = vrot.lane.b32.xlu0 %v3055, 4
      %v3478 = vpop.permute.xlu0 %3477
      %3479 = vrot.lane.b32.xlu0 %v3056, 4
      %v3480 = vpop.permute.xlu0 %3479
      %3481 = vrot.lane.b32.xlu0 %v3057, 4
      %v3482 = vpop.permute.xlu0 %3481
      %3483 = vrot.lane.b32.xlu0 %v3058, 4
      %v3484 = vpop.permute.xlu0 %3483
      %3485 = vrot.lane.b32.xlu0 %v3059, 4
      %v3486 = vpop.permute.xlu0 %3485
      %3487 = vrot.lane.b32.xlu0 %v3060, 4
      %v3488 = vpop.permute.xlu0 %3487
      %3489 = vrot.lane.b32.xlu0 %v3061, 4
      %v3490 = vpop.permute.xlu0 %3489
      %3491 = vrot.lane.b32.xlu0 %v3062, 4
      %v3492 = vpop.permute.xlu0 %3491
      %3493 = vrot.lane.b32.xlu0 %v3063, 4
      %v3494 = vpop.permute.xlu0 %3493
      %3495 = vrot.lane.b32.xlu0 %v3064, 4
      %v3496 = vpop.permute.xlu0 %3495
      %3497 = vrot.lane.b32.xlu0 %v3065, 4
      %v3498 = vpop.permute.xlu0 %3497
      %3499 = vrot.lane.b32.xlu0 %v3066, 4
      %v3500 = vpop.permute.xlu0 %3499
      %3501 = vrot.lane.b32.xlu0 %v3067, 4
      %v3502 = vpop.permute.xlu0 %3501
      %3503 = vrot.lane.b32.xlu0 %v3068, 4
      %v3504 = vpop.permute.xlu0 %3503
      %3505 = vrot.lane.b32.xlu0 %v3069, 4
      %v3506 = vpop.permute.xlu0 %3505
      %3507 = vrot.lane.b32.xlu0 %v3070, 4
      %v3508 = vpop.permute.xlu0 %3507
      %3509 = vrot.lane.b32.xlu0 %v3071, 4
      %v3510 = vpop.permute.xlu0 %3509
      %3511 = vrot.lane.b32.xlu0 %v3072, 4
      %v3512 = vpop.permute.xlu0 %3511
      %3577 = vrot.lane.b32.xlu0 %v3237, 8
      %v3578 = vpop.permute.xlu0 %3577
      %3579 = vrot.lane.b32.xlu0 %v3238, 8
      %v3580 = vpop.permute.xlu0 %3579
      %3581 = vrot.lane.b32.xlu0 %v3239, 8
      %v3582 = vpop.permute.xlu0 %3581
      %3583 = vrot.lane.b32.xlu0 %v3240, 8
      %v3584 = vpop.permute.xlu0 %3583
      %3585 = vrot.lane.b32.xlu0 %v3241, 8
      %v3586 = vpop.permute.xlu0 %3585
      %3587 = vrot.lane.b32.xlu0 %v3242, 8
      %v3588 = vpop.permute.xlu0 %3587
      %3589 = vrot.lane.b32.xlu0 %v3243, 8
      %v3590 = vpop.permute.xlu0 %3589
      %3591 = vrot.lane.b32.xlu0 %v3244, 8
      %v3592 = vpop.permute.xlu0 %3591
      %3593 = vrot.lane.b32.xlu0 %v3245, 8
      %v3594 = vpop.permute.xlu0 %3593
      %3595 = vrot.lane.b32.xlu0 %v3246, 8
      %v3596 = vpop.permute.xlu0 %3595
      %3597 = vrot.lane.b32.xlu0 %v3247, 8
      %v3598 = vpop.permute.xlu0 %3597
      %3599 = vrot.lane.b32.xlu0 %v3248, 8
      %v3600 = vpop.permute.xlu0 %3599
      %3601 = vrot.lane.b32.xlu0 %v3249, 8
      %v3602 = vpop.permute.xlu0 %3601
      %3603 = vrot.lane.b32.xlu0 %v3250, 8
      %v3604 = vpop.permute.xlu0 %3603
      %3605 = vrot.lane.b32.xlu0 %v3251, 8
      %v3606 = vpop.permute.xlu0 %3605
      %3607 = vrot.lane.b32.xlu0 %v3252, 8
      %v3608 = vpop.permute.xlu0 %3607
      %3609 = vrot.lane.b32.xlu0 %v3253, 8
      %v3610 = vpop.permute.xlu0 %3609
      %3611 = vrot.lane.b32.xlu0 %v3254, 8
      %v3612 = vpop.permute.xlu0 %3611
      %3613 = vrot.lane.b32.xlu0 %v3255, 8
      %v3614 = vpop.permute.xlu0 %3613
      %3615 = vrot.lane.b32.xlu0 %v3256, 8
      %v3616 = vpop.permute.xlu0 %3615
      %3617 = vrot.lane.b32.xlu0 %v3257, 8
      %v3618 = vpop.permute.xlu0 %3617
      %3619 = vrot.lane.b32.xlu0 %v3258, 8
      %v3620 = vpop.permute.xlu0 %3619
      %3621 = vrot.lane.b32.xlu0 %v3259, 8
      %v3622 = vpop.permute.xlu0 %3621
      %3623 = vrot.lane.b32.xlu0 %v3260, 8
      %v3624 = vpop.permute.xlu0 %3623
      %3625 = vrot.lane.b32.xlu0 %v3261, 8
      %v3626 = vpop.permute.xlu0 %3625
      %3627 = vrot.lane.b32.xlu0 %v3262, 8
      %v3628 = vpop.permute.xlu0 %3627
      %3629 = vrot.lane.b32.xlu0 %v3263, 8
      %v3630 = vpop.permute.xlu0 %3629
      %3631 = vrot.lane.b32.xlu0 %v3264, 8
      %v3632 = vpop.permute.xlu0 %3631
      %3633 = vrot.lane.b32.xlu0 %v3265, 8
      %v3634 = vpop.permute.xlu0 %3633
      %3635 = vrot.lane.b32.xlu0 %v3266, 8
      %v3636 = vpop.permute.xlu0 %3635
      %3637 = vrot.lane.b32.xlu0 %v3267, 8
      %v3638 = vpop.permute.xlu0 %3637
      %3639 = vrot.lane.b32.xlu0 %v3268, 8
      %v3640 = vpop.permute.xlu0 %3639
      %3705 = vrot.lane.b32.xlu0 %v3279, 12
      %v3706 = vpop.permute.xlu0 %3705
      %3707 = vrot.lane.b32.xlu0 %v3280, 12
      %v3708 = vpop.permute.xlu0 %3707
      %3709 = vrot.lane.b32.xlu0 %v3281, 12
      %v3710 = vpop.permute.xlu0 %3709
      %3711 = vrot.lane.b32.xlu0 %v3282, 12
      %v3712 = vpop.permute.xlu0 %3711
      %3713 = vrot.lane.b32.xlu0 %v3283, 12
      %v3714 = vpop.permute.xlu0 %3713
      %3715 = vrot.lane.b32.xlu0 %v3284, 12
      %v3716 = vpop.permute.xlu0 %3715
      %3717 = vrot.lane.b32.xlu0 %v3285, 12
      %v3718 = vpop.permute.xlu0 %3717
      %3719 = vrot.lane.b32.xlu0 %v3286, 12
      %v3720 = vpop.permute.xlu0 %3719
      %3721 = vrot.lane.b32.xlu0 %v3287, 12
      %v3722 = vpop.permute.xlu0 %3721
      %3723 = vrot.lane.b32.xlu0 %v3288, 12
      %v3724 = vpop.permute.xlu0 %3723
      %3725 = vrot.lane.b32.xlu0 %v3289, 12
      %v3726 = vpop.permute.xlu0 %3725
      %3727 = vrot.lane.b32.xlu0 %v3290, 12
      %v3728 = vpop.permute.xlu0 %3727
      %3729 = vrot.lane.b32.xlu0 %v3291, 12
      %v3730 = vpop.permute.xlu0 %3729
      %3731 = vrot.lane.b32.xlu0 %v3292, 12
      %v3732 = vpop.permute.xlu0 %3731
      %3733 = vrot.lane.b32.xlu0 %v3293, 12
      %v3734 = vpop.permute.xlu0 %3733
      %3735 = vrot.lane.b32.xlu0 %v3294, 12
      %v3736 = vpop.permute.xlu0 %3735
      %3737 = vrot.lane.b32.xlu0 %v3295, 12
      %v3738 = vpop.permute.xlu0 %3737
      %3739 = vrot.lane.b32.xlu0 %v3296, 12
      %v3740 = vpop.permute.xlu0 %3739
      %3741 = vrot.lane.b32.xlu0 %v3297, 12
      %v3742 = vpop.permute.xlu0 %3741
      %3743 = vrot.lane.b32.xlu0 %v3298, 12
      %v3744 = vpop.permute.xlu0 %3743
      %3745 = vrot.lane.b32.xlu0 %v3299, 12
      %v3746 = vpop.permute.xlu0 %3745
      %3747 = vrot.lane.b32.xlu0 %v3300, 12
      %v3748 = vpop.permute.xlu0 %3747
      %3749 = vrot.lane.b32.xlu0 %v3301, 12
      %v3750 = vpop.permute.xlu0 %3749
      %3751 = vrot.lane.b32.xlu0 %v3302, 12
      %v3752 = vpop.permute.xlu0 %3751
      %3753 = vrot.lane.b32.xlu0 %v3303, 12
      %v3754 = vpop.permute.xlu0 %3753
      %3755 = vrot.lane.b32.xlu0 %v3304, 12
      %v3756 = vpop.permute.xlu0 %3755
      %3757 = vrot.lane.b32.xlu0 %v3305, 12
      %v3758 = vpop.permute.xlu0 %3757
      %3759 = vrot.lane.b32.xlu0 %v3306, 12
      %v3760 = vpop.permute.xlu0 %3759
      %3761 = vrot.lane.b32.xlu0 %v3307, 12
      %v3762 = vpop.permute.xlu0 %3761
      %3763 = vrot.lane.b32.xlu0 %v3308, 12
      %v3764 = vpop.permute.xlu0 %3763
      %3765 = vrot.lane.b32.xlu0 %v3309, 12
      %v3766 = vpop.permute.xlu0 %3765
      %3767 = vrot.lane.b32.xlu0 %v3310, 12
      %v3768 = vpop.permute.xlu0 %3767
      %3803 = vrot.lane.b32.xlu0 %v3043, 16
      %v3804 = vpop.permute.xlu0 %3803
      %3805 = vrot.lane.b32.xlu0 %v3044, 16
      %v3806 = vpop.permute.xlu0 %3805
      %3807 = vrot.lane.b32.xlu0 %v3045, 16
      %v3808 = vpop.permute.xlu0 %3807
      %3809 = vrot.lane.b32.xlu0 %v3046, 16
      %v3810 = vpop.permute.xlu0 %3809
      %3811 = vrot.lane.b32.xlu0 %v3047, 16
      %v3812 = vpop.permute.xlu0 %3811
      %3813 = vrot.lane.b32.xlu0 %v3048, 16
      %v3814 = vpop.permute.xlu0 %3813
      %3815 = vrot.lane.b32.xlu0 %v3049, 16
      %v3816 = vpop.permute.xlu0 %3815
      %3817 = vrot.lane.b32.xlu0 %v3050, 16
      %v3818 = vpop.permute.xlu0 %3817
      %3819 = vrot.lane.b32.xlu0 %v3051, 16
      %v3820 = vpop.permute.xlu0 %3819
      %3821 = vrot.lane.b32.xlu0 %v3052, 16
      %v3822 = vpop.permute.xlu0 %3821
      %3823 = vrot.lane.b32.xlu0 %v3053, 16
      %v3824 = vpop.permute.xlu0 %3823
      %3825 = vrot.lane.b32.xlu0 %v3054, 16
      %v3826 = vpop.permute.xlu0 %3825
      %3827 = vrot.lane.b32.xlu0 %v3055, 16
      %v3828 = vpop.permute.xlu0 %3827
      %3829 = vrot.lane.b32.xlu0 %v3056, 16
      %v3830 = vpop.permute.xlu0 %3829
      %3831 = vrot.lane.b32.xlu0 %v3057, 16
      %v3832 = vpop.permute.xlu0 %3831
      %3833 = vrot.lane.b32.xlu0 %v3058, 16
      %v3834 = vpop.permute.xlu0 %3833
      %3835 = vrot.lane.b32.xlu0 %v3059, 16
      %v3836 = vpop.permute.xlu0 %3835
      %3837 = vrot.lane.b32.xlu0 %v3060, 16
      %v3838 = vpop.permute.xlu0 %3837
      %3839 = vrot.lane.b32.xlu0 %v3061, 16
      %v3840 = vpop.permute.xlu0 %3839
      %3841 = vrot.lane.b32.xlu0 %v3062, 16
      %v3842 = vpop.permute.xlu0 %3841
      %3843 = vrot.lane.b32.xlu0 %v3063, 16
      %v3844 = vpop.permute.xlu0 %3843
      %3845 = vrot.lane.b32.xlu0 %v3064, 16
      %v3846 = vpop.permute.xlu0 %3845
      %3847 = vrot.lane.b32.xlu0 %v3065, 16
      %v3848 = vpop.permute.xlu0 %3847
      %3849 = vrot.lane.b32.xlu0 %v3066, 16
      %v3850 = vpop.permute.xlu0 %3849
      %3851 = vrot.lane.b32.xlu0 %v3067, 16
      %v3852 = vpop.permute.xlu0 %3851
      %3853 = vrot.lane.b32.xlu0 %v3068, 16
      %v3854 = vpop.permute.xlu0 %3853
      %3855 = vrot.lane.b32.xlu0 %v3069, 16
      %v3856 = vpop.permute.xlu0 %3855
      %3857 = vrot.lane.b32.xlu0 %v3070, 16
      %v3858 = vpop.permute.xlu0 %3857
      %3859 = vrot.lane.b32.xlu0 %v3071, 16
      %v3860 = vpop.permute.xlu0 %3859
      %3861 = vrot.lane.b32.xlu0 %v3072, 16
      %v3862 = vpop.permute.xlu0 %3861
      %3863 = vrot.lane.b32.xlu0 %v3073, 16
      %v3864 = vpop.permute.xlu0 %3863
      %3865 = vrot.lane.b32.xlu0 %v3074, 16
      %v3866 = vpop.permute.xlu0 %3865
      %3931 = vrot.lane.b32.xlu0 %v3311, 20
      %v3932 = vpop.permute.xlu0 %3931
      %3933 = vrot.lane.b32.xlu0 %v3312, 20
      %v3934 = vpop.permute.xlu0 %3933
      %3935 = vrot.lane.b32.xlu0 %v3313, 20
      %v3936 = vpop.permute.xlu0 %3935
      %3937 = vrot.lane.b32.xlu0 %v3314, 20
      %v3938 = vpop.permute.xlu0 %3937
      %3939 = vrot.lane.b32.xlu0 %v3315, 20
      %v3940 = vpop.permute.xlu0 %3939
      %3941 = vrot.lane.b32.xlu0 %v3316, 20
      %v3942 = vpop.permute.xlu0 %3941
      %3943 = vrot.lane.b32.xlu0 %v3317, 20
      %v3944 = vpop.permute.xlu0 %3943
      %3945 = vrot.lane.b32.xlu0 %v3318, 20
      %v3946 = vpop.permute.xlu0 %3945
      %3947 = vrot.lane.b32.xlu0 %v3319, 20
      %v3948 = vpop.permute.xlu0 %3947
      %3949 = vrot.lane.b32.xlu0 %v3320, 20
      %v3950 = vpop.permute.xlu0 %3949
      %3951 = vrot.lane.b32.xlu0 %v3321, 20
      %v3952 = vpop.permute.xlu0 %3951
      %3953 = vrot.lane.b32.xlu0 %v3322, 20
      %v3954 = vpop.permute.xlu0 %3953
      %3955 = vrot.lane.b32.xlu0 %v3323, 20
      %v3956 = vpop.permute.xlu0 %3955
      %3957 = vrot.lane.b32.xlu0 %v3324, 20
      %v3958 = vpop.permute.xlu0 %3957
      %3959 = vrot.lane.b32.xlu0 %v3325, 20
      %v3960 = vpop.permute.xlu0 %3959
      %3961 = vrot.lane.b32.xlu0 %v3326, 20
      %v3962 = vpop.permute.xlu0 %3961
      %3963 = vrot.lane.b32.xlu0 %v3327, 20
      %v3964 = vpop.permute.xlu0 %3963
      %3965 = vrot.lane.b32.xlu0 %v3328, 20
      %v3966 = vpop.permute.xlu0 %3965
      %3967 = vrot.lane.b32.xlu0 %v3329, 20
      %v3968 = vpop.permute.xlu0 %3967
      %3969 = vrot.lane.b32.xlu0 %v3330, 20
      %v3970 = vpop.permute.xlu0 %3969
      %3971 = vrot.lane.b32.xlu0 %v3331, 20
      %v3972 = vpop.permute.xlu0 %3971
      %3973 = vrot.lane.b32.xlu0 %v3332, 20
      %v3974 = vpop.permute.xlu0 %3973
      %3975 = vrot.lane.b32.xlu0 %v3333, 20
      %v3976 = vpop.permute.xlu0 %3975
      %3977 = vrot.lane.b32.xlu0 %v3334, 20
      %v3978 = vpop.permute.xlu0 %3977
      %3979 = vrot.lane.b32.xlu0 %v3335, 20
      %v3980 = vpop.permute.xlu0 %3979
      %3981 = vrot.lane.b32.xlu0 %v3336, 20
      %v3982 = vpop.permute.xlu0 %3981
      %3983 = vrot.lane.b32.xlu0 %v3337, 20
      %v3984 = vpop.permute.xlu0 %3983
      %3985 = vrot.lane.b32.xlu0 %v3338, 20
      %v3986 = vpop.permute.xlu0 %3985
      %3987 = vrot.lane.b32.xlu0 %v3339, 20
      %v3988 = vpop.permute.xlu0 %3987
      %3989 = vrot.lane.b32.xlu0 %v3340, 20
      %v3990 = vpop.permute.xlu0 %3989
      %3991 = vrot.lane.b32.xlu0 %v3341, 20
      %v3992 = vpop.permute.xlu0 %3991
      %3993 = vrot.lane.b32.xlu0 %v3342, 20
      %v3994 = vpop.permute.xlu0 %3993
      %4059 = vrot.lane.b32.xlu0 %v3353, 24
      %v4060 = vpop.permute.xlu0 %4059
      %4061 = vrot.lane.b32.xlu0 %v3354, 24
      %v4062 = vpop.permute.xlu0 %4061
      %4063 = vrot.lane.b32.xlu0 %v3355, 24
      %v4064 = vpop.permute.xlu0 %4063
      %4065 = vrot.lane.b32.xlu0 %v3356, 24
      %v4066 = vpop.permute.xlu0 %4065
      %4067 = vrot.lane.b32.xlu0 %v3357, 24
      %v4068 = vpop.permute.xlu0 %4067
      %4069 = vrot.lane.b32.xlu0 %v3358, 24
      %v4070 = vpop.permute.xlu0 %4069
      %4071 = vrot.lane.b32.xlu0 %v3359, 24
      %v4072 = vpop.permute.xlu0 %4071
      %4073 = vrot.lane.b32.xlu0 %v3360, 24
      %v4074 = vpop.permute.xlu0 %4073
      %4075 = vrot.lane.b32.xlu0 %v3361, 24
      %v4076 = vpop.permute.xlu0 %4075
      %4077 = vrot.lane.b32.xlu0 %v3362, 24
      %v4078 = vpop.permute.xlu0 %4077
      %4079 = vrot.lane.b32.xlu0 %v3363, 24
      %v4080 = vpop.permute.xlu0 %4079
      %4081 = vrot.lane.b32.xlu0 %v3364, 24
      %v4082 = vpop.permute.xlu0 %4081
      %4083 = vrot.lane.b32.xlu0 %v3365, 24
      %v4084 = vpop.permute.xlu0 %4083
      %4085 = vrot.lane.b32.xlu0 %v3366, 24
      %v4086 = vpop.permute.xlu0 %4085
      %4087 = vrot.lane.b32.xlu0 %v3367, 24
      %v4088 = vpop.permute.xlu0 %4087
      %4089 = vrot.lane.b32.xlu0 %v3368, 24
      %v4090 = vpop.permute.xlu0 %4089
      %4091 = vrot.lane.b32.xlu0 %v3369, 24
      %v4092 = vpop.permute.xlu0 %4091
      %4093 = vrot.lane.b32.xlu0 %v3370, 24
      %v4094 = vpop.permute.xlu0 %4093
      %4095 = vrot.lane.b32.xlu0 %v3371, 24
      %v4096 = vpop.permute.xlu0 %4095
      %4097 = vrot.lane.b32.xlu0 %v3372, 24
      %v4098 = vpop.permute.xlu0 %4097
      %4099 = vrot.lane.b32.xlu0 %v3373, 24
      %v4100 = vpop.permute.xlu0 %4099
      %4101 = vrot.lane.b32.xlu0 %v3374, 24
      %v4102 = vpop.permute.xlu0 %4101
      %4103 = vrot.lane.b32.xlu0 %v3375, 24
      %v4104 = vpop.permute.xlu0 %4103
      %4105 = vrot.lane.b32.xlu0 %v3376, 24
      %v4106 = vpop.permute.xlu0 %4105
      %4107 = vrot.lane.b32.xlu0 %v3377, 24
      %v4108 = vpop.permute.xlu0 %4107
      %4109 = vrot.lane.b32.xlu0 %v3378, 24
      %v4110 = vpop.permute.xlu0 %4109
      %4111 = vrot.lane.b32.xlu0 %v3379, 24
      %v4112 = vpop.permute.xlu0 %4111
      %4113 = vrot.lane.b32.xlu0 %v3380, 24
      %v4114 = vpop.permute.xlu0 %4113
      %4115 = vrot.lane.b32.xlu0 %v3381, 24
      %v4116 = vpop.permute.xlu0 %4115
      %4117 = vrot.lane.b32.xlu0 %v3382, 24
      %v4118 = vpop.permute.xlu0 %4117
      %4119 = vrot.lane.b32.xlu0 %v3383, 24
      %v4120 = vpop.permute.xlu0 %4119
      %4121 = vrot.lane.b32.xlu0 %v3384, 24
      %v4122 = vpop.permute.xlu0 %4121
      %4157 = vrot.lane.b32.xlu0 %v3045, 28
      %v4158 = vpop.permute.xlu0 %4157
      %4159 = vrot.lane.b32.xlu0 %v3046, 28
      %v4160 = vpop.permute.xlu0 %4159
      %4161 = vrot.lane.b32.xlu0 %v3047, 28
      %v4162 = vpop.permute.xlu0 %4161
      %4163 = vrot.lane.b32.xlu0 %v3048, 28
      %v4164 = vpop.permute.xlu0 %4163
      %4165 = vrot.lane.b32.xlu0 %v3049, 28
      %v4166 = vpop.permute.xlu0 %4165
      %4167 = vrot.lane.b32.xlu0 %v3050, 28
      %v4168 = vpop.permute.xlu0 %4167
      %4169 = vrot.lane.b32.xlu0 %v3051, 28
      %v4170 = vpop.permute.xlu0 %4169
      %4171 = vrot.lane.b32.xlu0 %v3052, 28
      %v4172 = vpop.permute.xlu0 %4171
      %4173 = vrot.lane.b32.xlu0 %v3053, 28
      %v4174 = vpop.permute.xlu0 %4173
      %4175 = vrot.lane.b32.xlu0 %v3054, 28
      %v4176 = vpop.permute.xlu0 %4175
      %4177 = vrot.lane.b32.xlu0 %v3055, 28
      %v4178 = vpop.permute.xlu0 %4177
      %4179 = vrot.lane.b32.xlu0 %v3056, 28
      %v4180 = vpop.permute.xlu0 %4179
      %4181 = vrot.lane.b32.xlu0 %v3057, 28
      %v4182 = vpop.permute.xlu0 %4181
      %4183 = vrot.lane.b32.xlu0 %v3058, 28
      %v4184 = vpop.permute.xlu0 %4183
      %4185 = vrot.lane.b32.xlu0 %v3059, 28
      %v4186 = vpop.permute.xlu0 %4185
      %4187 = vrot.lane.b32.xlu0 %v3060, 28
      %v4188 = vpop.permute.xlu0 %4187
      %4189 = vrot.lane.b32.xlu0 %v3061, 28
      %v4190 = vpop.permute.xlu0 %4189
      %4191 = vrot.lane.b32.xlu0 %v3062, 28
      %v4192 = vpop.permute.xlu0 %4191
      %4193 = vrot.lane.b32.xlu0 %v3063, 28
      %v4194 = vpop.permute.xlu0 %4193
      %4195 = vrot.lane.b32.xlu0 %v3064, 28
      %v4196 = vpop.permute.xlu0 %4195
      %4197 = vrot.lane.b32.xlu0 %v3065, 28
      %v4198 = vpop.permute.xlu0 %4197
      %4199 = vrot.lane.b32.xlu0 %v3066, 28
      %v4200 = vpop.permute.xlu0 %4199
      %4201 = vrot.lane.b32.xlu0 %v3067, 28
      %v4202 = vpop.permute.xlu0 %4201
      %4203 = vrot.lane.b32.xlu0 %v3068, 28
      %v4204 = vpop.permute.xlu0 %4203
      %4205 = vrot.lane.b32.xlu0 %v3069, 28
      %v4206 = vpop.permute.xlu0 %4205
      %4207 = vrot.lane.b32.xlu0 %v3070, 28
      %v4208 = vpop.permute.xlu0 %4207
      %4209 = vrot.lane.b32.xlu0 %v3071, 28
      %v4210 = vpop.permute.xlu0 %4209
      %4211 = vrot.lane.b32.xlu0 %v3072, 28
      %v4212 = vpop.permute.xlu0 %4211
      %4213 = vrot.lane.b32.xlu0 %v3073, 28
      %v4214 = vpop.permute.xlu0 %4213
      %4215 = vrot.lane.b32.xlu0 %v3074, 28
      %v4216 = vpop.permute.xlu0 %4215
      %4217 = vrot.lane.b32.xlu0 %v3075, 28
      %v4218 = vpop.permute.xlu0 %4217
      %4219 = vrot.lane.b32.xlu0 %v3076, 28
      %v4220 = vpop.permute.xlu0 %4219
      %4285 = vrot.lane.b32.xlu0 %v3385, 32
      %v4286 = vpop.permute.xlu0 %4285
      %4287 = vrot.lane.b32.xlu0 %v3386, 32
      %v4288 = vpop.permute.xlu0 %4287
      %4289 = vrot.lane.b32.xlu0 %v3387, 32
      %v4290 = vpop.permute.xlu0 %4289
      %4291 = vrot.lane.b32.xlu0 %v3388, 32
      %v4292 = vpop.permute.xlu0 %4291
      %4293 = vrot.lane.b32.xlu0 %v3389, 32
      %v4294 = vpop.permute.xlu0 %4293
      %4295 = vrot.lane.b32.xlu0 %v3390, 32
      %v4296 = vpop.permute.xlu0 %4295
      %4297 = vrot.lane.b32.xlu0 %v3391, 32
      %v4298 = vpop.permute.xlu0 %4297
      %4299 = vrot.lane.b32.xlu0 %v3392, 32
      %v4300 = vpop.permute.xlu0 %4299
      %4301 = vrot.lane.b32.xlu0 %v3393, 32
      %v4302 = vpop.permute.xlu0 %4301
      %4303 = vrot.lane.b32.xlu0 %v3394, 32
      %v4304 = vpop.permute.xlu0 %4303
      %4305 = vrot.lane.b32.xlu0 %v3395, 32
      %v4306 = vpop.permute.xlu0 %4305
      %4307 = vrot.lane.b32.xlu0 %v3396, 32
      %v4308 = vpop.permute.xlu0 %4307
      %4309 = vrot.lane.b32.xlu0 %v3397, 32
      %v4310 = vpop.permute.xlu0 %4309
      %4311 = vrot.lane.b32.xlu0 %v3398, 32
      %v4312 = vpop.permute.xlu0 %4311
      %4313 = vrot.lane.b32.xlu0 %v3399, 32
      %v4314 = vpop.permute.xlu0 %4313
      %4315 = vrot.lane.b32.xlu0 %v3400, 32
      %v4316 = vpop.permute.xlu0 %4315
      %4317 = vrot.lane.b32.xlu0 %v3401, 32
      %v4318 = vpop.permute.xlu0 %4317
      %4319 = vrot.lane.b32.xlu0 %v3402, 32
      %v4320 = vpop.permute.xlu0 %4319
      %4321 = vrot.lane.b32.xlu0 %v3403, 32
      %v4322 = vpop.permute.xlu0 %4321
      %4323 = vrot.lane.b32.xlu0 %v3404, 32
      %v4324 = vpop.permute.xlu0 %4323
      %4325 = vrot.lane.b32.xlu0 %v3405, 32
      %v4326 = vpop.permute.xlu0 %4325
      %4327 = vrot.lane.b32.xlu0 %v3406, 32
      %v4328 = vpop.permute.xlu0 %4327
      %4329 = vrot.lane.b32.xlu0 %v3407, 32
      %v4330 = vpop.permute.xlu0 %4329
      %4331 = vrot.lane.b32.xlu0 %v3408, 32
      %v4332 = vpop.permute.xlu0 %4331
      %4333 = vrot.lane.b32.xlu0 %v3409, 32
      %v4334 = vpop.permute.xlu0 %4333
      %4335 = vrot.lane.b32.xlu0 %v3410, 32
      %v4336 = vpop.permute.xlu0 %4335
      %4337 = vrot.lane.b32.xlu0 %v3411, 32
      %v4338 = vpop.permute.xlu0 %4337
      %4339 = vrot.lane.b32.xlu0 %v3412, 32
      %v4340 = vpop.permute.xlu0 %4339
      %4341 = vrot.lane.b32.xlu0 %v3413, 32
      %v4342 = vpop.permute.xlu0 %4341
      %4343 = vrot.lane.b32.xlu0 %v3414, 32
      %v4344 = vpop.permute.xlu0 %4343
      %4345 = vrot.lane.b32.xlu0 %v3415, 32
      %v4346 = vpop.permute.xlu0 %4345
      %4347 = vrot.lane.b32.xlu0 %v3416, 32
      %v4348 = vpop.permute.xlu0 %4347
      %v4381 = vsel %vm2124, %v3205, %v3450
      %v4382 = vsel %vm2124, %v3206, %v3452
      %v4383 = vsel %vm2124, %v3207, %v3454
      %v4384 = vsel %vm2124, %v3208, %v3456
      %v4385 = vsel %vm2124, %v3209, %v3458
      %v4386 = vsel %vm2124, %v3210, %v3460
      %v4387 = vsel %vm2124, %v3211, %v3462
      %v4388 = vsel %vm2124, %v3212, %v3464
      %v4389 = vsel %vm2124, %v3213, %v3466
      %v4390 = vsel %vm2124, %v3214, %v3468
      %v4391 = vsel %vm2124, %v3215, %v3470
      %v4392 = vsel %vm2124, %v3216, %v3472
      %v4393 = vsel %vm2124, %v3217, %v3474
      %v4394 = vsel %vm2124, %v3218, %v3476
      %v4395 = vsel %vm2124, %v3219, %v3478
      %v4396 = vsel %vm2124, %v3220, %v3480
      %v4397 = vsel %vm2124, %v3221, %v3482
      %v4398 = vsel %vm2124, %v3222, %v3484
      %v4399 = vsel %vm2124, %v3223, %v3486
      %v4400 = vsel %vm2124, %v3224, %v3488
      %v4401 = vsel %vm2124, %v3225, %v3490
      %v4402 = vsel %vm2124, %v3226, %v3492
      %v4403 = vsel %vm2124, %v3227, %v3494
      %v4404 = vsel %vm2124, %v3228, %v3496
      %v4405 = vsel %vm2124, %v3229, %v3498
      %v4406 = vsel %vm2124, %v3230, %v3500
      %v4407 = vsel %vm2124, %v3231, %v3502
      %v4408 = vsel %vm2124, %v3232, %v3504
      %v4409 = vsel %vm2124, %v3233, %v3506
      %v4410 = vsel %vm2124, %v3234, %v3508
      %v4411 = vsel %vm2124, %v3235, %v3510
      %v4412 = vsel %vm2124, %v3236, %v3512
      %v4413 = vsel %vm2157, %v4381, %v3578
      %v4414 = vsel %vm2157, %v4382, %v3580
      %v4415 = vsel %vm2157, %v4383, %v3582
      %v4416 = vsel %vm2157, %v4384, %v3584
      %v4417 = vsel %vm2157, %v4385, %v3586
      %v4418 = vsel %vm2157, %v4386, %v3588
      %v4419 = vsel %vm2157, %v4387, %v3590
      %v4420 = vsel %vm2157, %v4388, %v3592
      %v4421 = vsel %vm2157, %v4389, %v3594
      %v4422 = vsel %vm2157, %v4390, %v3596
      %v4423 = vsel %vm2157, %v4391, %v3598
      %v4424 = vsel %vm2157, %v4392, %v3600
      %v4425 = vsel %vm2157, %v4393, %v3602
      %v4426 = vsel %vm2157, %v4394, %v3604
      %v4427 = vsel %vm2157, %v4395, %v3606
      %v4428 = vsel %vm2157, %v4396, %v3608
      %v4429 = vsel %vm2157, %v4397, %v3610
      %v4430 = vsel %vm2157, %v4398, %v3612
      %v4431 = vsel %vm2157, %v4399, %v3614
      %v4432 = vsel %vm2157, %v4400, %v3616
      %v4433 = vsel %vm2157, %v4401, %v3618
      %v4434 = vsel %vm2157, %v4402, %v3620
      %v4435 = vsel %vm2157, %v4403, %v3622
      %v4436 = vsel %vm2157, %v4404, %v3624
      %v4437 = vsel %vm2157, %v4405, %v3626
      %v4438 = vsel %vm2157, %v4406, %v3628
      %v4439 = vsel %vm2157, %v4407, %v3630
      %v4440 = vsel %vm2157, %v4408, %v3632
      %v4441 = vsel %vm2157, %v4409, %v3634
      %v4442 = vsel %vm2157, %v4410, %v3636
      %v4443 = vsel %vm2157, %v4411, %v3638
      %v4444 = vsel %vm2157, %v4412, %v3640
      %v4445 = vsel %vm2190, %v4413, %v3706
      %v4446 = vsel %vm2190, %v4414, %v3708
      %v4447 = vsel %vm2190, %v4415, %v3710
      %v4448 = vsel %vm2190, %v4416, %v3712
      %v4449 = vsel %vm2190, %v4417, %v3714
      %v4450 = vsel %vm2190, %v4418, %v3716
      %v4451 = vsel %vm2190, %v4419, %v3718
      %v4452 = vsel %vm2190, %v4420, %v3720
      %v4453 = vsel %vm2190, %v4421, %v3722
      %v4454 = vsel %vm2190, %v4422, %v3724
      %v4455 = vsel %vm2190, %v4423, %v3726
      %v4456 = vsel %vm2190, %v4424, %v3728
      %v4457 = vsel %vm2190, %v4425, %v3730
      %v4458 = vsel %vm2190, %v4426, %v3732
      %v4459 = vsel %vm2190, %v4427, %v3734
      %v4460 = vsel %vm2190, %v4428, %v3736
      %v4461 = vsel %vm2190, %v4429, %v3738
      %v4462 = vsel %vm2190, %v4430, %v3740
      %v4463 = vsel %vm2190, %v4431, %v3742
      %v4464 = vsel %vm2190, %v4432, %v3744
      %v4465 = vsel %vm2190, %v4433, %v3746
      %v4466 = vsel %vm2190, %v4434, %v3748
      %v4467 = vsel %vm2190, %v4435, %v3750
      %v4468 = vsel %vm2190, %v4436, %v3752
      %v4469 = vsel %vm2190, %v4437, %v3754
      %v4470 = vsel %vm2190, %v4438, %v3756
      %v4471 = vsel %vm2190, %v4439, %v3758
      %v4472 = vsel %vm2190, %v4440, %v3760
      %v4473 = vsel %vm2190, %v4441, %v3762
      %v4474 = vsel %vm2190, %v4442, %v3764
      %v4475 = vsel %vm2190, %v4443, %v3766
      %v4476 = vsel %vm2190, %v4444, %v3768
      %v4477 = vsel %vm2223, %v4445, %v3804
      %v4478 = vsel %vm2223, %v4446, %v3806
      %v4479 = vsel %vm2223, %v4447, %v3808
      %v4480 = vsel %vm2223, %v4448, %v3810
      %v4481 = vsel %vm2223, %v4449, %v3812
      %v4482 = vsel %vm2223, %v4450, %v3814
      %v4483 = vsel %vm2223, %v4451, %v3816
      %v4484 = vsel %vm2223, %v4452, %v3818
      %v4485 = vsel %vm2223, %v4453, %v3820
      %v4486 = vsel %vm2223, %v4454, %v3822
      %v4487 = vsel %vm2223, %v4455, %v3824
      %v4488 = vsel %vm2223, %v4456, %v3826
      %v4489 = vsel %vm2223, %v4457, %v3828
      %v4490 = vsel %vm2223, %v4458, %v3830
      %v4491 = vsel %vm2223, %v4459, %v3832
      %v4492 = vsel %vm2223, %v4460, %v3834
      %v4493 = vsel %vm2223, %v4461, %v3836
      %v4494 = vsel %vm2223, %v4462, %v3838
      %v4495 = vsel %vm2223, %v4463, %v3840
      %v4496 = vsel %vm2223, %v4464, %v3842
      %v4497 = vsel %vm2223, %v4465, %v3844
      %v4498 = vsel %vm2223, %v4466, %v3846
      %v4499 = vsel %vm2223, %v4467, %v3848
      %v4500 = vsel %vm2223, %v4468, %v3850
      %v4501 = vsel %vm2223, %v4469, %v3852
      %v4502 = vsel %vm2223, %v4470, %v3854
      %v4503 = vsel %vm2223, %v4471, %v3856
      %v4504 = vsel %vm2223, %v4472, %v3858
      %v4505 = vsel %vm2223, %v4473, %v3860
      %v4506 = vsel %vm2223, %v4474, %v3862
      %v4507 = vsel %vm2223, %v4475, %v3864
      %v4508 = vsel %vm2223, %v4476, %v3866
      %v4509 = vsel %vm2256, %v4477, %v3932
      %v4510 = vsel %vm2256, %v4478, %v3934
      %v4511 = vsel %vm2256, %v4479, %v3936
      %v4512 = vsel %vm2256, %v4480, %v3938
      %v4513 = vsel %vm2256, %v4481, %v3940
      %v4514 = vsel %vm2256, %v4482, %v3942
      %v4515 = vsel %vm2256, %v4483, %v3944
      %v4516 = vsel %vm2256, %v4484, %v3946
      %v4517 = vsel %vm2256, %v4485, %v3948
      %v4518 = vsel %vm2256, %v4486, %v3950
      %v4519 = vsel %vm2256, %v4487, %v3952
      %v4520 = vsel %vm2256, %v4488, %v3954
      %v4521 = vsel %vm2256, %v4489, %v3956
      %v4522 = vsel %vm2256, %v4490, %v3958
      %v4523 = vsel %vm2256, %v4491, %v3960
      %v4524 = vsel %vm2256, %v4492, %v3962
      %v4525 = vsel %vm2256, %v4493, %v3964
      %v4526 = vsel %vm2256, %v4494, %v3966
      %v4527 = vsel %vm2256, %v4495, %v3968
      %v4528 = vsel %vm2256, %v4496, %v3970
      %v4529 = vsel %vm2256, %v4497, %v3972
      %v4530 = vsel %vm2256, %v4498, %v3974
      %v4531 = vsel %vm2256, %v4499, %v3976
      %v4532 = vsel %vm2256, %v4500, %v3978
      %v4533 = vsel %vm2256, %v4501, %v3980
      %v4534 = vsel %vm2256, %v4502, %v3982
      %v4535 = vsel %vm2256, %v4503, %v3984
      %v4536 = vsel %vm2256, %v4504, %v3986
      %v4537 = vsel %vm2256, %v4505, %v3988
      %v4538 = vsel %vm2256, %v4506, %v3990
      %v4539 = vsel %vm2256, %v4507, %v3992
      %v4540 = vsel %vm2256, %v4508, %v3994
      %v4541 = vsel %vm2289, %v4509, %v4060
      %v4542 = vsel %vm2289, %v4510, %v4062
      %v4543 = vsel %vm2289, %v4511, %v4064
      %v4544 = vsel %vm2289, %v4512, %v4066
      %v4545 = vsel %vm2289, %v4513, %v4068
      %v4546 = vsel %vm2289, %v4514, %v4070
      %v4547 = vsel %vm2289, %v4515, %v4072
      %v4548 = vsel %vm2289, %v4516, %v4074
      %v4549 = vsel %vm2289, %v4517, %v4076
      %v4550 = vsel %vm2289, %v4518, %v4078
      %v4551 = vsel %vm2289, %v4519, %v4080
      %v4552 = vsel %vm2289, %v4520, %v4082
      %v4553 = vsel %vm2289, %v4521, %v4084
      %v4554 = vsel %vm2289, %v4522, %v4086
      %v4555 = vsel %vm2289, %v4523, %v4088
      %v4556 = vsel %vm2289, %v4524, %v4090
      %v4557 = vsel %vm2289, %v4525, %v4092
      %v4558 = vsel %vm2289, %v4526, %v4094
      %v4559 = vsel %vm2289, %v4527, %v4096
      %v4560 = vsel %vm2289, %v4528, %v4098
      %v4561 = vsel %vm2289, %v4529, %v4100
      %v4562 = vsel %vm2289, %v4530, %v4102
      %v4563 = vsel %vm2289, %v4531, %v4104
      %v4564 = vsel %vm2289, %v4532, %v4106
      %v4565 = vsel %vm2289, %v4533, %v4108
      %v4566 = vsel %vm2289, %v4534, %v4110
      %v4567 = vsel %vm2289, %v4535, %v4112
      %v4568 = vsel %vm2289, %v4536, %v4114
      %v4569 = vsel %vm2289, %v4537, %v4116
      %v4570 = vsel %vm2289, %v4538, %v4118
      %v4571 = vsel %vm2289, %v4539, %v4120
      %v4572 = vsel %vm2289, %v4540, %v4122
      %v4573 = vsel %vm2322, %v4541, %v4158
      %v4574 = vsel %vm2322, %v4542, %v4160
      %v4575 = vsel %vm2322, %v4543, %v4162
      %v4576 = vsel %vm2322, %v4544, %v4164
      %v4577 = vsel %vm2322, %v4545, %v4166
      %v4578 = vsel %vm2322, %v4546, %v4168
      %v4579 = vsel %vm2322, %v4547, %v4170
      %v4580 = vsel %vm2322, %v4548, %v4172
      %v4581 = vsel %vm2322, %v4549, %v4174
      %v4582 = vsel %vm2322, %v4550, %v4176
      %v4583 = vsel %vm2322, %v4551, %v4178
      %v4584 = vsel %vm2322, %v4552, %v4180
      %v4585 = vsel %vm2322, %v4553, %v4182
      %v4586 = vsel %vm2322, %v4554, %v4184
      %v4587 = vsel %vm2322, %v4555, %v4186
      %v4588 = vsel %vm2322, %v4556, %v4188
      %v4589 = vsel %vm2322, %v4557, %v4190
      %v4590 = vsel %vm2322, %v4558, %v4192
      %v4591 = vsel %vm2322, %v4559, %v4194
      %v4592 = vsel %vm2322, %v4560, %v4196
      %v4593 = vsel %vm2322, %v4561, %v4198
      %v4594 = vsel %vm2322, %v4562, %v4200
      %v4595 = vsel %vm2322, %v4563, %v4202
      %v4596 = vsel %vm2322, %v4564, %v4204
      %v4597 = vsel %vm2322, %v4565, %v4206
      %v4598 = vsel %vm2322, %v4566, %v4208
      %v4599 = vsel %vm2322, %v4567, %v4210
      %v4600 = vsel %vm2322, %v4568, %v4212
      %v4601 = vsel %vm2322, %v4569, %v4214
      %v4602 = vsel %vm2322, %v4570, %v4216
      %v4603 = vsel %vm2322, %v4571, %v4218
      %v4604 = vsel %vm2322, %v4572, %v4220
      %v4605 = vsel %vm2355, %v4573, %v4286
      %v4606 = vsel %vm2355, %v4574, %v4288
      %v4607 = vsel %vm2355, %v4575, %v4290
      %v4608 = vsel %vm2355, %v4576, %v4292
      %v4609 = vsel %vm2355, %v4577, %v4294
      %v4610 = vsel %vm2355, %v4578, %v4296
      %v4611 = vsel %vm2355, %v4579, %v4298
      %v4612 = vsel %vm2355, %v4580, %v4300
      %v4613 = vsel %vm2355, %v4581, %v4302
      %v4614 = vsel %vm2355, %v4582, %v4304
      %v4615 = vsel %vm2355, %v4583, %v4306
      %v4616 = vsel %vm2355, %v4584, %v4308
      %v4617 = vsel %vm2355, %v4585, %v4310
      %v4618 = vsel %vm2355, %v4586, %v4312
      %v4619 = vsel %vm2355, %v4587, %v4314
      %v4620 = vsel %vm2355, %v4588, %v4316
      %v4621 = vsel %vm2355, %v4589, %v4318
      %v4622 = vsel %vm2355, %v4590, %v4320
      %v4623 = vsel %vm2355, %v4591, %v4322
      %v4624 = vsel %vm2355, %v4592, %v4324
      %v4625 = vsel %vm2355, %v4593, %v4326
      %v4626 = vsel %vm2355, %v4594, %v4328
      %v4627 = vsel %vm2355, %v4595, %v4330
      %v4628 = vsel %vm2355, %v4596, %v4332
      %v4629 = vsel %vm2355, %v4597, %v4334
      %v4630 = vsel %vm2355, %v4598, %v4336
      %v4631 = vsel %vm2355, %v4599, %v4338
      %v4632 = vsel %vm2355, %v4600, %v4340
      %v4633 = vsel %vm2355, %v4601, %v4342
      %v4634 = vsel %vm2355, %v4602, %v4344
      %v4635 = vsel %vm2355, %v4603, %v4346
      %v4636 = vsel %vm2355, %v4604, %v4348
      %v4637 = vld [vmem:[%s2] sm:$0xff]
      %v4638 = vld [vmem:[%s2 + $0x8] sm:$0xff]
      %v4639 = vld [vmem:[%s2 + $0x10] sm:$0xff]
      %v4640 = vld [vmem:[%s2 + $0x18] sm:$0xff]
      %v4641 = vld [vmem:[%s2 + $0x20] sm:$0xf]
      %v4643 = vsel %vm2393, %v4605, 0
      %v4646 = vsel %vm2393, %v4606, 0
      %v4649 = vsel %vm2393, %v4607, 0
      %v4652 = vsel %vm2393, %v4608, 0
      %v4655 = vsel %vm2393, %v4609, 0
      %v4658 = vsel %vm2393, %v4610, 0
      %v4661 = vsel %vm2393, %v4611, 0
      %v4664 = vsel %vm2393, %v4612, 0
      %v4667 = vsel %vm2393, %v4613, 0
      %v4670 = vsel %vm2393, %v4614, 0
      %v4673 = vsel %vm2393, %v4615, 0
      %v4676 = vsel %vm2393, %v4616, 0
      %v4679 = vsel %vm2393, %v4617, 0
      %v4682 = vsel %vm2393, %v4618, 0
      %v4685 = vsel %vm2393, %v4619, 0
      %v4688 = vsel %vm2393, %v4620, 0
      %v4691 = vsel %vm2393, %v4621, 0
      %v4694 = vsel %vm2393, %v4622, 0
      %v4697 = vsel %vm2393, %v4623, 0
      %v4700 = vsel %vm2393, %v4624, 0
      %v4703 = vsel %vm2393, %v4625, 0
      %v4706 = vsel %vm2393, %v4626, 0
      %v4709 = vsel %vm2393, %v4627, 0
      %v4712 = vsel %vm2393, %v4628, 0
      %v4715 = vsel %vm2393, %v4629, 0
      %v4718 = vsel %vm2393, %v4630, 0
      %v4721 = vsel %vm2393, %v4631, 0
      %v4724 = vsel %vm2393, %v4632, 0
      %v4727 = vsel %vm2393, %v4633, 0
      %v4730 = vsel %vm2393, %v4634, 0
      %v4733 = vsel %vm2393, %v4635, 0
      %v4736 = vsel %vm2393, %v4636, 0
      %v4739 = vsel %vm2490, %v4641, 0
      %4741 = vmatprep.subr.mxu0 0.0
      %4742 = vmatpush1.msra.mxu0 %v4637
      %4743 = vmatprep.subr.mxu0 0.0
      %4744 = vmatpush1.msra.mxu0 %v4638
      %4745 = vmatprep.subr.mxu0 0.0
      %4746 = vmatpush1.msra.mxu0 %v4639
      %4747 = vmatprep.subr.mxu0 0.0
      %4748 = vmatpush1.msra.mxu0 %v4640
      %4749 = vmatprep.subr.mxu0 0.0
      %4750 = vmatpush1.msra.mxu0 %v4739
      %4751 = vmatprep.subr.mxu0 0.0
      %4752 = vmatpush1.msra.mxu0 0.0
      %4753 = vmatprep.subr.mxu0 0.0
      %4754 = vmatpush1.msra.mxu0 0.0
      %4755 = vmatprep.subr.mxu0 0.0
      %4756 = vmatpush1.msra.mxu0 0.0
      %4757 = vmatprep.subr.mxu0 0.0
      %4758 = vmatpush1.msra.mxu0 0.0
      %4759 = vmatprep.subr.mxu0 0.0
      %4760 = vmatpush1.msra.mxu0 0.0
      %4761 = vmatprep.subr.mxu0 0.0
      %4762 = vmatpush1.msra.mxu0 0.0
      %4763 = vmatprep.subr.mxu0 0.0
      %4764 = vmatpush1.msra.mxu0 0.0
      %4765 = vmatprep.subr.mxu0 0.0
      %4766 = vmatpush1.msra.mxu0 0.0
      %4767 = vmatprep.subr.mxu0 0.0
      %4768 = vmatpush1.msra.mxu0 0.0
      %4769 = vmatprep.subr.mxu0 0.0
      %4770 = vmatpush1.msra.mxu0 0.0
      %4771 = vmatprep.subr.mxu0 0.0
      %4772 = vmatpush1.msra.mxu0 0.0
      %4773 = vmatprep.subr.mxu0 0.0
      %4774 = vmatpush1.msra.mxu0 0.0
      %4775 = vmatprep.subr.mxu0 0.0
      %4776 = vmatpush1.msra.mxu0 0.0
      %4777 = vmatprep.subr.mxu0 0.0
      %4778 = vmatpush1.msra.mxu0 0.0
      %4779 = vmatprep.subr.mxu0 0.0
      %4780 = vmatpush1.msra.mxu0 0.0
      %4781 = vmatprep.subr.mxu0 0.0
      %4782 = vmatpush1.msra.mxu0 0.0
      %4783 = vmatprep.subr.mxu0 0.0
      %4784 = vmatpush1.msra.mxu0 0.0
      %4785 = vmatprep.subr.mxu0 0.0
      %4786 = vmatpush1.msra.mxu0 0.0
      %4787 = vmatprep.subr.mxu0 0.0
      %4788 = vmatpush1.msra.mxu0 0.0
      %4789 = vmatprep.subr.mxu0 0.0
      %4790 = vmatpush1.msra.mxu0 0.0
      %4791 = vmatprep.subr.mxu0 0.0
      %4792 = vmatpush1.msra.mxu0 0.0
      %4793 = vmatprep.subr.mxu0 0.0
      %4794 = vmatpush1.msra.mxu0 0.0
      %4795 = vmatprep.subr.mxu0 0.0
      %4796 = vmatpush1.msra.mxu0 0.0
      %4797 = vmatprep.subr.mxu0 0.0
      %4798 = vmatpush1.msra.mxu0 0.0
      %4799 = vmatprep.subr.mxu0 0.0
      %4800 = vmatpush1.msra.mxu0 0.0
      %4801 = vmatprep.subr.mxu0 0.0
      %4802 = vmatpush1.msra.mxu0 0.0
      %4803 = vmatprep.subr.mxu0 0.0
      %4804 = vmatpush1.msra.mxu0 0.0
      %4805 = vmatprep.mubr.f32.mxu0 0.0
      %4806 = vmatmul.mubr.f32.gmra.mrb[0].mxu0 %v4643
      %v4807 = vpop.f32.mrb[0].mxu0
      %v4808 = vadd.f32 0.0, %v4807
      %v4809 = vpop.f32.mrb[0].mxu0
      %4810 = vmatprep.mubr.f32.mxu0 0.0
      %4811 = vmatmul.mubr.f32.gmra.mrb[0].mxu0 %v4646
      %v4812 = vpop.f32.mrb[0].mxu0
      %v4813 = vadd.f32 0.0, %v4812
      %v4814 = vpop.f32.mrb[0].mxu0
      %4815 = vmatprep.mubr.f32.mxu0 0.0
      %4816 = vmatmul.mubr.f32.gmra.mrb[0].mxu0 %v4649
      %v4817 = vpop.f32.mrb[0].mxu0
      %v4818 = vadd.f32 0.0, %v4817
      %v4819 = vpop.f32.mrb[0].mxu0
      %4820 = vmatprep.mubr.f32.mxu0 0.0
      %4821 = vmatmul.mubr.f32.gmra.mrb[0].mxu0 %v4652
      %v4822 = vpop.f32.mrb[0].mxu0
      %v4823 = vadd.f32 0.0, %v4822
      %v4824 = vpop.f32.mrb[0].mxu0
      %4825 = vmatprep.mubr.f32.mxu0 0.0
      %4826 = vmatmul.mubr.f32.gmra.mrb[0].mxu0 %v4655
      %v4827 = vpop.f32.mrb[0].mxu0
      %v4828 = vadd.f32 0.0, %v4827
      %v4829 = vpop.f32.mrb[0].mxu0
      %4830 = vmatprep.mubr.f32.mxu0 0.0
      %4831 = vmatmul.mubr.f32.gmra.mrb[0].mxu0 %v4658
      %v4832 = vpop.f32.mrb[0].mxu0
      %v4833 = vadd.f32 0.0, %v4832
      %v4834 = vpop.f32.mrb[0].mxu0
      %4835 = vmatprep.mubr.f32.mxu0 0.0
      %4836 = vmatmul.mubr.f32.gmra.mrb[0].mxu0 %v4661
      %v4837 = vpop.f32.mrb[0].mxu0
      %v4838 = vadd.f32 0.0, %v4837
      %v4839 = vpop.f32.mrb[0].mxu0
      %4840 = vmatprep.mubr.f32.mxu0 0.0
      %4841 = vmatmul.mubr.f32.gmra.mrb[0].mxu0 %v4664
      %v4842 = vpop.f32.mrb[0].mxu0
      %v4843 = vadd.f32 0.0, %v4842
      %v4844 = vpop.f32.mrb[0].mxu0
      %4845 = vmatprep.mubr.f32.mxu0 0.0
      %4846 = vmatmul.mubr.f32.gmra.mrb[0].mxu0 %v4667
      %v4847 = vpop.f32.mrb[0].mxu0
      %v4848 = vadd.f32 0.0, %v4847
      %v4849 = vpop.f32.mrb[0].mxu0
      %4850 = vmatprep.mubr.f32.mxu0 0.0
      %4851 = vmatmul.mubr.f32.gmra.mrb[0].mxu0 %v4670
      %v4852 = vpop.f32.mrb[0].mxu0
      %v4853 = vadd.f32 0.0, %v4852
      %v4854 = vpop.f32.mrb[0].mxu0
      %4855 = vmatprep.mubr.f32.mxu0 0.0
      %4856 = vmatmul.mubr.f32.gmra.mrb[0].mxu0 %v4673
      %v4857 = vpop.f32.mrb[0].mxu0
      %v4858 = vadd.f32 0.0, %v4857
      %v4859 = vpop.f32.mrb[0].mxu0
      %4860 = vmatprep.mubr.f32.mxu0 0.0
      %4861 = vmatmul.mubr.f32.gmra.mrb[0].mxu0 %v4676
      %v4862 = vpop.f32.mrb[0].mxu0
      %v4863 = vadd.f32 0.0, %v4862
      %v4864 = vpop.f32.mrb[0].mxu0
      %4865 = vmatprep.mubr.f32.mxu0 0.0
      %4866 = vmatmul.mubr.f32.gmra.mrb[0].mxu0 %v4679
      %v4867 = vpop.f32.mrb[0].mxu0
      %v4868 = vadd.f32 0.0, %v4867
      %v4869 = vpop.f32.mrb[0].mxu0
      %4870 = vmatprep.mubr.f32.mxu0 0.0
      %4871 = vmatmul.mubr.f32.gmra.mrb[0].mxu0 %v4682
      %v4872 = vpop.f32.mrb[0].mxu0
      %v4873 = vadd.f32 0.0, %v4872
      %v4874 = vpop.f32.mrb[0].mxu0
      %4875 = vmatprep.mubr.f32.mxu0 0.0
      %4876 = vmatmul.mubr.f32.gmra.mrb[0].mxu0 %v4685
      %v4877 = vpop.f32.mrb[0].mxu0
      %v4878 = vadd.f32 0.0, %v4877
      %v4879 = vpop.f32.mrb[0].mxu0
      %4880 = vmatprep.mubr.f32.mxu0 0.0
      %4881 = vmatmul.mubr.f32.gmra.mrb[0].mxu0 %v4688
      %v4882 = vpop.f32.mrb[0].mxu0
      %v4883 = vadd.f32 0.0, %v4882
      %v4884 = vpop.f32.mrb[0].mxu0
      %4885 = vmatprep.mubr.f32.mxu0 0.0
      %4886 = vmatmul.mubr.f32.gmra.mrb[0].mxu0 %v4691
      %v4887 = vpop.f32.mrb[0].mxu0
      %v4888 = vadd.f32 0.0, %v4887
      %v4889 = vpop.f32.mrb[0].mxu0
      %4890 = vmatprep.mubr.f32.mxu0 0.0
      %4891 = vmatmul.mubr.f32.gmra.mrb[0].mxu0 %v4694
      %v4892 = vpop.f32.mrb[0].mxu0
      %v4893 = vadd.f32 0.0, %v4892
      %v4894 = vpop.f32.mrb[0].mxu0
      %4895 = vmatprep.mubr.f32.mxu0 0.0
      %4896 = vmatmul.mubr.f32.gmra.mrb[0].mxu0 %v4697
      %v4897 = vpop.f32.mrb[0].mxu0
      %v4898 = vadd.f32 0.0, %v4897
      %v4899 = vpop.f32.mrb[0].mxu0
      %4900 = vmatprep.mubr.f32.mxu0 0.0
      %4901 = vmatmul.mubr.f32.gmra.mrb[0].mxu0 %v4700
      %v4902 = vpop.f32.mrb[0].mxu0
      %v4903 = vadd.f32 0.0, %v4902
      %v4904 = vpop.f32.mrb[0].mxu0
      %4905 = vmatprep.mubr.f32.mxu0 0.0
      %4906 = vmatmul.mubr.f32.gmra.mrb[0].mxu0 %v4703
      %v4907 = vpop.f32.mrb[0].mxu0
      %v4908 = vadd.f32 0.0, %v4907
      %v4909 = vpop.f32.mrb[0].mxu0
      %4910 = vmatprep.mubr.f32.mxu0 0.0
      %4911 = vmatmul.mubr.f32.gmra.mrb[0].mxu0 %v4706
      %v4912 = vpop.f32.mrb[0].mxu0
      %v4913 = vadd.f32 0.0, %v4912
      %v4914 = vpop.f32.mrb[0].mxu0
      %4915 = vmatprep.mubr.f32.mxu0 0.0
      %4916 = vmatmul.mubr.f32.gmra.mrb[0].mxu0 %v4709
      %v4917 = vpop.f32.mrb[0].mxu0
      %v4918 = vadd.f32 0.0, %v4917
      %v4919 = vpop.f32.mrb[0].mxu0
      %4920 = vmatprep.mubr.f32.mxu0 0.0
      %4921 = vmatmul.mubr.f32.gmra.mrb[0].mxu0 %v4712
      %v4922 = vpop.f32.mrb[0].mxu0
      %v4923 = vadd.f32 0.0, %v4922
      %v4924 = vpop.f32.mrb[0].mxu0
      %4925 = vmatprep.mubr.f32.mxu0 0.0
      %4926 = vmatmul.mubr.f32.gmra.mrb[0].mxu0 %v4715
      %v4927 = vpop.f32.mrb[0].mxu0
      %v4928 = vadd.f32 0.0, %v4927
      %v4929 = vpop.f32.mrb[0].mxu0
      %4930 = vmatprep.mubr.f32.mxu0 0.0
      %4931 = vmatmul.mubr.f32.gmra.mrb[0].mxu0 %v4718
      %v4932 = vpop.f32.mrb[0].mxu0
      %v4933 = vadd.f32 0.0, %v4932
      %v4934 = vpop.f32.mrb[0].mxu0
      %4935 = vmatprep.mubr.f32.mxu0 0.0
      %4936 = vmatmul.mubr.f32.gmra.mrb[0].mxu0 %v4721
      %v4937 = vpop.f32.mrb[0].mxu0
      %v4938 = vadd.f32 0.0, %v4937
      %v4939 = vpop.f32.mrb[0].mxu0
      %4940 = vmatprep.mubr.f32.mxu0 0.0
      %4941 = vmatmul.mubr.f32.gmra.mrb[0].mxu0 %v4724
      %v4942 = vpop.f32.mrb[0].mxu0
      %v4943 = vadd.f32 0.0, %v4942
      %v4944 = vpop.f32.mrb[0].mxu0
      %4945 = vmatprep.mubr.f32.mxu0 0.0
      %4946 = vmatmul.mubr.f32.gmra.mrb[0].mxu0 %v4727
      %v4947 = vpop.f32.mrb[0].mxu0
      %v4948 = vadd.f32 0.0, %v4947
      %v4949 = vpop.f32.mrb[0].mxu0
      %4950 = vmatprep.mubr.f32.mxu0 0.0
      %4951 = vmatmul.mubr.f32.gmra.mrb[0].mxu0 %v4730
      %v4952 = vpop.f32.mrb[0].mxu0
      %v4953 = vadd.f32 0.0, %v4952
      %v4954 = vpop.f32.mrb[0].mxu0
      %4955 = vmatprep.mubr.f32.mxu0 0.0
      %4956 = vmatmul.mubr.f32.gmra.mrb[0].mxu0 %v4733
      %v4957 = vpop.f32.mrb[0].mxu0
      %v4958 = vadd.f32 0.0, %v4957
      %v4959 = vpop.f32.mrb[0].mxu0
      %4960 = vmatprep.mubr.f32.mxu0 0.0
      %4961 = vmatmul.mubr.f32.gmra.mrb[0].mxu0 %v4736
      %v4962 = vpop.f32.mrb[0].mxu0
      %v4963 = vadd.f32 0.0, %v4962
      %v4964 = vpop.f32.mrb[0].mxu0
      %4965 = vdwg.mxu0
      %4966 = vst.msk [vmem:[#allocation3] sm:$0xff] %vm2124, %v4808
      %4967 = vst.msk [vmem:[#allocation3 + $0x8] sm:$0xff] %vm2124, %v4813
      %4968 = vst.msk [vmem:[#allocation3 + $0x10] sm:$0xff] %vm2124, %v4818
      %4969 = vst.msk [vmem:[#allocation3 + $0x18] sm:$0xff] %vm2124, %v4823
      %4970 = vst.msk [vmem:[#allocation3 + $0x20] sm:$0xff] %vm2124, %v4828
      %4971 = vst.msk [vmem:[#allocation3 + $0x28] sm:$0xff] %vm2124, %v4833
      %4972 = vst.msk [vmem:[#allocation3 + $0x30] sm:$0xff] %vm2124, %v4838
      %4973 = vst.msk [vmem:[#allocation3 + $0x38] sm:$0xff] %vm2124, %v4843
      %4974 = vst.msk [vmem:[#allocation3 + $0x40] sm:$0xff] %vm2124, %v4848
      %4975 = vst.msk [vmem:[#allocation3 + $0x48] sm:$0xff] %vm2124, %v4853
      %4976 = vst.msk [vmem:[#allocation3 + $0x50] sm:$0xff] %vm2124, %v4858
      %4977 = vst.msk [vmem:[#allocation3 + $0x58] sm:$0xff] %vm2124, %v4863
      %4978 = vst.msk [vmem:[#allocation3 + $0x60] sm:$0xff] %vm2124, %v4868
      %4979 = vst.msk [vmem:[#allocation3 + $0x68] sm:$0xff] %vm2124, %v4873
      %4980 = vst.msk [vmem:[#allocation3 + $0x70] sm:$0xff] %vm2124, %v4878
      %4981 = vst.msk [vmem:[#allocation3 + $0x78] sm:$0xff] %vm2124, %v4883
      %4982 = vst.msk [vmem:[#allocation3 + $0x80] sm:$0xff] %vm2124, %v4888
      %4983 = vst.msk [vmem:[#allocation3 + $0x88] sm:$0xff] %vm2124, %v4893
      %4984 = vst.msk [vmem:[#allocation3 + $0x90] sm:$0xff] %vm2124, %v4898
      %4985 = vst.msk [vmem:[#allocation3 + $0x98] sm:$0xff] %vm2124, %v4903
      %4986 = vst.msk [vmem:[#allocation3 + $0xa0] sm:$0xff] %vm2124, %v4908
      %4987 = vst.msk [vmem:[#allocation3 + $0xa8] sm:$0xff] %vm2124, %v4913
      %4988 = vst.msk [vmem:[#allocation3 + $0xb0] sm:$0xff] %vm2124, %v4918
      %4989 = vst.msk [vmem:[#allocation3 + $0xb8] sm:$0xff] %vm2124, %v4923
      %4990 = vst.msk [vmem:[#allocation3 + $0xc0] sm:$0xff] %vm2124, %v4928
      %4991 = vst.msk [vmem:[#allocation3 + $0xc8] sm:$0xff] %vm2124, %v4933
      %4992 = vst.msk [vmem:[#allocation3 + $0xd0] sm:$0xff] %vm2124, %v4938
      %4993 = vst.msk [vmem:[#allocation3 + $0xd8] sm:$0xff] %vm2124, %v4943
      %4994 = vst.msk [vmem:[#allocation3 + $0xe0] sm:$0xff] %vm2124, %v4948
      %4995 = vst.msk [vmem:[#allocation3 + $0xe8] sm:$0xff] %vm2124, %v4953
      %4996 = vst.msk [vmem:[#allocation3 + $0xf0] sm:$0xff] %vm2124, %v4958
      %4997 = vst.msk [vmem:[#allocation3 + $0xf8] sm:$0xff] %vm2124, %v4963
      %v4998 = vsel %vm2124, %v4808, 0.0
      %v4999 = vsel %vm2124, %v4813, 0.0
      %v5000 = vadd.f32 %v4998, %v4999
      %v5001 = vsel %vm2124, %v4818, 0.0
      %v5002 = vadd.f32 %v5000, %v5001
      %v5003 = vsel %vm2124, %v4823, 0.0
      %v5004 = vadd.f32 %v5002, %v5003
      %v5005 = vsel %vm2124, %v4828, 0.0
      %v5006 = vadd.f32 %v5004, %v5005
      %v5007 = vsel %vm2124, %v4833, 0.0
      %v5008 = vadd.f32 %v5006, %v5007
      %v5009 = vsel %vm2124, %v4838, 0.0
      %v5010 = vadd.f32 %v5008, %v5009
      %v5011 = vsel %vm2124, %v4843, 0.0
      %v5012 = vadd.f32 %v5010, %v5011
      %v5013 = vsel %vm2124, %v4848, 0.0
      %v5014 = vadd.f32 %v5012, %v5013
      %v5015 = vsel %vm2124, %v4853, 0.0
      %v5016 = vadd.f32 %v5014, %v5015
      %v5017 = vsel %vm2124, %v4858, 0.0
      %v5018 = vadd.f32 %v5016, %v5017
      %v5019 = vsel %vm2124, %v4863, 0.0
      %v5020 = vadd.f32 %v5018, %v5019
      %v5021 = vsel %vm2124, %v4868, 0.0
      %v5022 = vadd.f32 %v5020, %v5021
      %v5023 = vsel %vm2124, %v4873, 0.0
      %v5024 = vadd.f32 %v5022, %v5023
      %v5025 = vsel %vm2124, %v4878, 0.0
      %v5026 = vadd.f32 %v5024, %v5025
      %v5027 = vsel %vm2124, %v4883, 0.0
      %v5028 = vadd.f32 %v5026, %v5027
      %v5029 = vsel %vm2124, %v4888, 0.0
      %v5030 = vadd.f32 %v5028, %v5029
      %v5031 = vsel %vm2124, %v4893, 0.0
      %v5032 = vadd.f32 %v5030, %v5031
      %v5033 = vsel %vm2124, %v4898, 0.0
      %v5034 = vadd.f32 %v5032, %v5033
      %v5035 = vsel %vm2124, %v4903, 0.0
      %v5036 = vadd.f32 %v5034, %v5035
      %v5037 = vsel %vm2124, %v4908, 0.0
      %v5038 = vadd.f32 %v5036, %v5037
      %v5039 = vsel %vm2124, %v4913, 0.0
      %v5040 = vadd.f32 %v5038, %v5039
      %v5041 = vsel %vm2124, %v4918, 0.0
      %v5042 = vadd.f32 %v5040, %v5041
      %v5043 = vsel %vm2124, %v4923, 0.0
      %v5044 = vadd.f32 %v5042, %v5043
      %v5045 = vsel %vm2124, %v4928, 0.0
      %v5046 = vadd.f32 %v5044, %v5045
      %v5047 = vsel %vm2124, %v4933, 0.0
      %v5048 = vadd.f32 %v5046, %v5047
      %v5049 = vsel %vm2124, %v4938, 0.0
      %v5050 = vadd.f32 %v5048, %v5049
      %v5051 = vsel %vm2124, %v4943, 0.0
      %v5052 = vadd.f32 %v5050, %v5051
      %v5053 = vsel %vm2124, %v4948, 0.0
      %v5054 = vadd.f32 %v5052, %v5053
      %v5055 = vsel %vm2124, %v4953, 0.0
      %v5056 = vadd.f32 %v5054, %v5055
      %v5057 = vsel %vm2124, %v4958, 0.0
      %v5058 = vadd.f32 %v5056, %v5057
      %v5059 = vsel %vm2124, %v4963, 0.0
      %v5060 = vadd.f32 %v5058, %v5059
      %v5061 = vrot.slane %v5060, 4
      %v5062 = vadd.f32 %v5060, %v5061
      %v5063 = vrot.slane %v5062, 2
      %v5064 = vadd.f32 %v5062, %v5063
      %v5065 = vrot.slane %v5064, 1
      %v5066 = vadd.f32 %v5064, %v5065
      %v5067 = vadd.f32 %v5066, 0.0
      %v5068 = vmul.f32 %v4808, %v4808
      %v5069 = vmul.f32 %v4813, %v4813
      %v5070 = vmul.f32 %v4818, %v4818
      %v5071 = vmul.f32 %v4823, %v4823
      %v5072 = vmul.f32 %v4828, %v4828
      %v5073 = vmul.f32 %v4833, %v4833
      %v5074 = vmul.f32 %v4838, %v4838
      %v5075 = vmul.f32 %v4843, %v4843
      %v5076 = vmul.f32 %v4848, %v4848
      %v5077 = vmul.f32 %v4853, %v4853
      %v5078 = vmul.f32 %v4858, %v4858
      %v5079 = vmul.f32 %v4863, %v4863
      %v5080 = vmul.f32 %v4868, %v4868
      %v5081 = vmul.f32 %v4873, %v4873
      %v5082 = vmul.f32 %v4878, %v4878
      %v5083 = vmul.f32 %v4883, %v4883
      %v5084 = vmul.f32 %v4888, %v4888
      %v5085 = vmul.f32 %v4893, %v4893
      %v5086 = vmul.f32 %v4898, %v4898
      %v5087 = vmul.f32 %v4903, %v4903
      %v5088 = vmul.f32 %v4908, %v4908
      %v5089 = vmul.f32 %v4913, %v4913
      %v5090 = vmul.f32 %v4918, %v4918
      %v5091 = vmul.f32 %v4923, %v4923
      %v5092 = vmul.f32 %v4928, %v4928
      %v5093 = vmul.f32 %v4933, %v4933
      %v5094 = vmul.f32 %v4938, %v4938
      %v5095 = vmul.f32 %v4943, %v4943
      %v5096 = vmul.f32 %v4948, %v4948
      %v5097 = vmul.f32 %v4953, %v4953
      %v5098 = vmul.f32 %v4958, %v4958
      %v5099 = vmul.f32 %v4963, %v4963
      %v5100 = vsel %vm2124, %v5068, 0.0
      %v5101 = vsel %vm2124, %v5069, 0.0
      %v5102 = vadd.f32 %v5100, %v5101
      %v5103 = vsel %vm2124, %v5070, 0.0
      %v5104 = vadd.f32 %v5102, %v5103
      %v5105 = vsel %vm2124, %v5071, 0.0
      %v5106 = vadd.f32 %v5104, %v5105
      %v5107 = vsel %vm2124, %v5072, 0.0
      %v5108 = vadd.f32 %v5106, %v5107
      %v5109 = vsel %vm2124, %v5073, 0.0
      %v5110 = vadd.f32 %v5108, %v5109
      %v5111 = vsel %vm2124, %v5074, 0.0
      %v5112 = vadd.f32 %v5110, %v5111
      %v5113 = vsel %vm2124, %v5075, 0.0
      %v5114 = vadd.f32 %v5112, %v5113
      %v5115 = vsel %vm2124, %v5076, 0.0
      %v5116 = vadd.f32 %v5114, %v5115
      %v5117 = vsel %vm2124, %v5077, 0.0
      %v5118 = vadd.f32 %v5116, %v5117
      %v5119 = vsel %vm2124, %v5078, 0.0
      %v5120 = vadd.f32 %v5118, %v5119
      %v5121 = vsel %vm2124, %v5079, 0.0
      %v5122 = vadd.f32 %v5120, %v5121
      %v5123 = vsel %vm2124, %v5080, 0.0
      %v5124 = vadd.f32 %v5122, %v5123
      %v5125 = vsel %vm2124, %v5081, 0.0
      %v5126 = vadd.f32 %v5124, %v5125
      %v5127 = vsel %vm2124, %v5082, 0.0
      %v5128 = vadd.f32 %v5126, %v5127
      %v5129 = vsel %vm2124, %v5083, 0.0
      %v5130 = vadd.f32 %v5128, %v5129
      %v5131 = vsel %vm2124, %v5084, 0.0
      %v5132 = vadd.f32 %v5130, %v5131
      %v5133 = vsel %vm2124, %v5085, 0.0
      %v5134 = vadd.f32 %v5132, %v5133
      %v5135 = vsel %vm2124, %v5086, 0.0
      %v5136 = vadd.f32 %v5134, %v5135
      %v5137 = vsel %vm2124, %v5087, 0.0
      %v5138 = vadd.f32 %v5136, %v5137
      %v5139 = vsel %vm2124, %v5088, 0.0
      %v5140 = vadd.f32 %v5138, %v5139
      %v5141 = vsel %vm2124, %v5089, 0.0
      %v5142 = vadd.f32 %v5140, %v5141
      %v5143 = vsel %vm2124, %v5090, 0.0
      %v5144 = vadd.f32 %v5142, %v5143
      %v5145 = vsel %vm2124, %v5091, 0.0
      %v5146 = vadd.f32 %v5144, %v5145
      %v5147 = vsel %vm2124, %v5092, 0.0
      %v5148 = vadd.f32 %v5146, %v5147
      %v5149 = vsel %vm2124, %v5093, 0.0
      %v5150 = vadd.f32 %v5148, %v5149
      %v5151 = vsel %vm2124, %v5094, 0.0
      %v5152 = vadd.f32 %v5150, %v5151
      %v5153 = vsel %vm2124, %v5095, 0.0
      %v5154 = vadd.f32 %v5152, %v5153
      %v5155 = vsel %vm2124, %v5096, 0.0
      %v5156 = vadd.f32 %v5154, %v5155
      %v5157 = vsel %vm2124, %v5097, 0.0
      %v5158 = vadd.f32 %v5156, %v5157
      %v5159 = vsel %vm2124, %v5098, 0.0
      %v5160 = vadd.f32 %v5158, %v5159
      %v5161 = vsel %vm2124, %v5099, 0.0
      %v5162 = vadd.f32 %v5160, %v5161
      %v5163 = vrot.slane %v5162, 4
      %v5164 = vadd.f32 %v5162, %v5163
      %v5165 = vrot.slane %v5164, 2
      %v5166 = vadd.f32 %v5164, %v5165
      %v5167 = vrot.slane %v5166, 1
      %v5168 = vadd.f32 %v5166, %v5167
      %v5169 = vadd.f32 %v5168, 0.0
      %v5170 = vmul.f32 %v5067, %v2923
      %v5171 = vmul.f32 %v5169, %v2923
      %v5172 = vmul.f32 %v5170, %v5170
      %v5173 = vsub.f32 %v5171, %v5172
      %v5174 = vmax.f32 %v5173, 0.0
      %v5175 = vadd.f32 %v5174, 1e-05
      %v5176 = vrsqrt.pop %v5175
      %v5177 = vld [vmem:[#allocation3] sm:$0xff]
      %v5178 = vld [vmem:[#allocation3 + $0x8] sm:$0xff]
      %v5179 = vld [vmem:[#allocation3 + $0x10] sm:$0xff]
      %v5180 = vld [vmem:[#allocation3 + $0x18] sm:$0xff]
      %v5181 = vld [vmem:[#allocation3 + $0x20] sm:$0xff]
      %v5182 = vld [vmem:[#allocation3 + $0x28] sm:$0xff]
      %v5183 = vld [vmem:[#allocation3 + $0x30] sm:$0xff]
      %v5184 = vld [vmem:[#allocation3 + $0x38] sm:$0xff]
      %v5185 = vld [vmem:[#allocation3 + $0x40] sm:$0xff]
      %v5186 = vld [vmem:[#allocation3 + $0x48] sm:$0xff]
      %v5187 = vld [vmem:[#allocation3 + $0x50] sm:$0xff]
      %v5188 = vld [vmem:[#allocation3 + $0x58] sm:$0xff]
      %v5189 = vld [vmem:[#allocation3 + $0x60] sm:$0xff]
      %v5190 = vld [vmem:[#allocation3 + $0x68] sm:$0xff]
      %v5191 = vld [vmem:[#allocation3 + $0x70] sm:$0xff]
      %v5192 = vld [vmem:[#allocation3 + $0x78] sm:$0xff]
      %v5193 = vld [vmem:[#allocation3 + $0x80] sm:$0xff]
      %v5194 = vld [vmem:[#allocation3 + $0x88] sm:$0xff]
      %v5195 = vld [vmem:[#allocation3 + $0x90] sm:$0xff]
      %v5196 = vld [vmem:[#allocation3 + $0x98] sm:$0xff]
      %v5197 = vld [vmem:[#allocation3 + $0xa0] sm:$0xff]
      %v5198 = vld [vmem:[#allocation3 + $0xa8] sm:$0xff]
      %v5199 = vld [vmem:[#allocation3 + $0xb0] sm:$0xff]
      %v5200 = vld [vmem:[#allocation3 + $0xb8] sm:$0xff]
      %v5201 = vld [vmem:[#allocation3 + $0xc0] sm:$0xff]
      %v5202 = vld [vmem:[#allocation3 + $0xc8] sm:$0xff]
      %v5203 = vld [vmem:[#allocation3 + $0xd0] sm:$0xff]
      %v5204 = vld [vmem:[#allocation3 + $0xd8] sm:$0xff]
      %v5205 = vld [vmem:[#allocation3 + $0xe0] sm:$0xff]
      %v5206 = vld [vmem:[#allocation3 + $0xe8] sm:$0xff]
      %v5207 = vld [vmem:[#allocation3 + $0xf0] sm:$0xff]
      %v5208 = vld [vmem:[#allocation3 + $0xf8] sm:$0xff]
      %v5209 = vsub.f32 %v5177, %v5170
      %v5210 = vsub.f32 %v5178, %v5170
      %v5211 = vsub.f32 %v5179, %v5170
      %v5212 = vsub.f32 %v5180, %v5170
      %v5213 = vsub.f32 %v5181, %v5170
      %v5214 = vsub.f32 %v5182, %v5170
      %v5215 = vsub.f32 %v5183, %v5170
      %v5216 = vsub.f32 %v5184, %v5170
      %v5217 = vsub.f32 %v5185, %v5170
      %v5218 = vsub.f32 %v5186, %v5170
      %v5219 = vsub.f32 %v5187, %v5170
      %v5220 = vsub.f32 %v5188, %v5170
      %v5221 = vsub.f32 %v5189, %v5170
      %v5222 = vsub.f32 %v5190, %v5170
      %v5223 = vsub.f32 %v5191, %v5170
      %v5224 = vsub.f32 %v5192, %v5170
      %v5225 = vsub.f32 %v5193, %v5170
      %v5226 = vsub.f32 %v5194, %v5170
      %v5227 = vsub.f32 %v5195, %v5170
      %v5228 = vsub.f32 %v5196, %v5170
      %v5229 = vsub.f32 %v5197, %v5170
      %v5230 = vsub.f32 %v5198, %v5170
      %v5231 = vsub.f32 %v5199, %v5170
      %v5232 = vsub.f32 %v5200, %v5170
      %v5233 = vsub.f32 %v5201, %v5170
      %v5234 = vsub.f32 %v5202, %v5170
      %v5235 = vsub.f32 %v5203, %v5170
      %v5236 = vsub.f32 %v5204, %v5170
      %v5237 = vsub.f32 %v5205, %v5170
      %v5238 = vsub.f32 %v5206, %v5170
      %v5239 = vsub.f32 %v5207, %v5170
      %v5240 = vsub.f32 %v5208, %v5170
      %v5241 = vmul.f32 %v5209, %v5176
      %v5242 = vmul.f32 %v5210, %v5176
      %v5243 = vmul.f32 %v5211, %v5176
      %v5244 = vmul.f32 %v5212, %v5176
      %v5245 = vmul.f32 %v5213, %v5176
      %v5246 = vmul.f32 %v5214, %v5176
      %v5247 = vmul.f32 %v5215, %v5176
      %v5248 = vmul.f32 %v5216, %v5176
      %v5249 = vmul.f32 %v5217, %v5176
      %v5250 = vmul.f32 %v5218, %v5176
      %v5251 = vmul.f32 %v5219, %v5176
      %v5252 = vmul.f32 %v5220, %v5176
      %v5253 = vmul.f32 %v5221, %v5176
      %v5254 = vmul.f32 %v5222, %v5176
      %v5255 = vmul.f32 %v5223, %v5176
      %v5256 = vmul.f32 %v5224, %v5176
      %v5257 = vmul.f32 %v5225, %v5176
      %v5258 = vmul.f32 %v5226, %v5176
      %v5259 = vmul.f32 %v5227, %v5176
      %v5260 = vmul.f32 %v5228, %v5176
      %v5261 = vmul.f32 %v5229, %v5176
      %v5262 = vmul.f32 %v5230, %v5176
      %v5263 = vmul.f32 %v5231, %v5176
      %v5264 = vmul.f32 %v5232, %v5176
      %v5265 = vmul.f32 %v5233, %v5176
      %v5266 = vmul.f32 %v5234, %v5176
      %v5267 = vmul.f32 %v5235, %v5176
      %v5268 = vmul.f32 %v5236, %v5176
      %v5269 = vmul.f32 %v5237, %v5176
      %v5270 = vmul.f32 %v5238, %v5176
      %v5271 = vmul.f32 %v5239, %v5176
      %v5272 = vmul.f32 %v5240, %v5176
      %v5273 = vld [vmem:[%s165] sm:$0xff]
      %v5274 = vld [vmem:[%s165 + $0x8] sm:$0xff]
      %v5275 = vld [vmem:[%s165 + $0x10] sm:$0xff]
      %v5276 = vld [vmem:[%s165 + $0x18] sm:$0xff]
      %v5277 = vld [vmem:[%s165 + $0x20] sm:$0xff]
      %v5278 = vld [vmem:[%s165 + $0x28] sm:$0xff]
      %v5279 = vld [vmem:[%s165 + $0x30] sm:$0xff]
      %v5280 = vld [vmem:[%s165 + $0x38] sm:$0xff]
      %v5281 = vld [vmem:[%s165 + $0x40] sm:$0xff]
      %v5282 = vld [vmem:[%s165 + $0x48] sm:$0xff]
      %v5283 = vld [vmem:[%s165 + $0x50] sm:$0xff]
      %v5284 = vld [vmem:[%s165 + $0x58] sm:$0xff]
      %v5285 = vld [vmem:[%s165 + $0x60] sm:$0xff]
      %v5286 = vld [vmem:[%s165 + $0x68] sm:$0xff]
      %v5287 = vld [vmem:[%s165 + $0x70] sm:$0xff]
      %v5288 = vld [vmem:[%s165 + $0x78] sm:$0xff]
      %v5289 = vld [vmem:[%s165 + $0x80] sm:$0xff]
      %v5290 = vld [vmem:[%s165 + $0x88] sm:$0xff]
      %v5291 = vld [vmem:[%s165 + $0x90] sm:$0xff]
      %v5292 = vld [vmem:[%s165 + $0x98] sm:$0xff]
      %v5293 = vld [vmem:[%s165 + $0xa0] sm:$0xff]
      %v5294 = vld [vmem:[%s165 + $0xa8] sm:$0xff]
      %v5295 = vld [vmem:[%s165 + $0xb0] sm:$0xff]
      %v5296 = vld [vmem:[%s165 + $0xb8] sm:$0xff]
      %v5297 = vld [vmem:[%s165 + $0xc0] sm:$0xff]
      %v5298 = vld [vmem:[%s165 + $0xc8] sm:$0xff]
      %v5299 = vld [vmem:[%s165 + $0xd0] sm:$0xff]
      %v5300 = vld [vmem:[%s165 + $0xd8] sm:$0xff]
      %v5301 = vld [vmem:[%s165 + $0xe0] sm:$0xff]
      %v5302 = vld [vmem:[%s165 + $0xe8] sm:$0xff]
      %v5303 = vld [vmem:[%s165 + $0xf0] sm:$0xff]
      %v5304 = vld [vmem:[%s165 + $0xf8] sm:$0xff]
      %v5305 = vadd.f32 %v5273, %v5241
      %v5306 = vadd.f32 %v5274, %v5242
      %v5307 = vadd.f32 %v5275, %v5243
      %v5308 = vadd.f32 %v5276, %v5244
      %v5309 = vadd.f32 %v5277, %v5245
      %v5310 = vadd.f32 %v5278, %v5246
      %v5311 = vadd.f32 %v5279, %v5247
      %v5312 = vadd.f32 %v5280, %v5248
      %v5313 = vadd.f32 %v5281, %v5249
      %v5314 = vadd.f32 %v5282, %v5250
      %v5315 = vadd.f32 %v5283, %v5251
      %v5316 = vadd.f32 %v5284, %v5252
      %v5317 = vadd.f32 %v5285, %v5253
      %v5318 = vadd.f32 %v5286, %v5254
      %v5319 = vadd.f32 %v5287, %v5255
      %v5320 = vadd.f32 %v5288, %v5256
      %v5321 = vadd.f32 %v5289, %v5257
      %v5322 = vadd.f32 %v5290, %v5258
      %v5323 = vadd.f32 %v5291, %v5259
      %v5324 = vadd.f32 %v5292, %v5260
      %v5325 = vadd.f32 %v5293, %v5261
      %v5326 = vadd.f32 %v5294, %v5262
      %v5327 = vadd.f32 %v5295, %v5263
      %v5328 = vadd.f32 %v5296, %v5264
      %v5329 = vadd.f32 %v5297, %v5265
      %v5330 = vadd.f32 %v5298, %v5266
      %v5331 = vadd.f32 %v5299, %v5267
      %v5332 = vadd.f32 %v5300, %v5268
      %v5333 = vadd.f32 %v5301, %v5269
      %v5334 = vadd.f32 %v5302, %v5270
      %v5335 = vadd.f32 %v5303, %v5271
      %v5336 = vadd.f32 %v5304, %v5272
      %5337 = vst.msk [vmem:[%s170] sm:$0xff] %vm2124, %v5305
      %5338 = vst.msk [vmem:[%s170 + $0x8] sm:$0xff] %vm2124, %v5306
      %5339 = vst.msk [vmem:[%s170 + $0x10] sm:$0xff] %vm2124, %v5307
      %5340 = vst.msk [vmem:[%s170 + $0x18] sm:$0xff] %vm2124, %v5308
      %5341 = vst.msk [vmem:[%s170 + $0x20] sm:$0xff] %vm2124, %v5309
      %5342 = vst.msk [vmem:[%s170 + $0x28] sm:$0xff] %vm2124, %v5310
      %5343 = vst.msk [vmem:[%s170 + $0x30] sm:$0xff] %vm2124, %v5311
      %5344 = vst.msk [vmem:[%s170 + $0x38] sm:$0xff] %vm2124, %v5312
      %5345 = vst.msk [vmem:[%s170 + $0x40] sm:$0xff] %vm2124, %v5313
      %5346 = vst.msk [vmem:[%s170 + $0x48] sm:$0xff] %vm2124, %v5314
      %5347 = vst.msk [vmem:[%s170 + $0x50] sm:$0xff] %vm2124, %v5315
      %5348 = vst.msk [vmem:[%s170 + $0x58] sm:$0xff] %vm2124, %v5316
      %5349 = vst.msk [vmem:[%s170 + $0x60] sm:$0xff] %vm2124, %v5317
      %5350 = vst.msk [vmem:[%s170 + $0x68] sm:$0xff] %vm2124, %v5318
      %5351 = vst.msk [vmem:[%s170 + $0x70] sm:$0xff] %vm2124, %v5319
      %5352 = vst.msk [vmem:[%s170 + $0x78] sm:$0xff] %vm2124, %v5320
      %5353 = vst.msk [vmem:[%s170 + $0x80] sm:$0xff] %vm2124, %v5321
      %5354 = vst.msk [vmem:[%s170 + $0x88] sm:$0xff] %vm2124, %v5322
      %5355 = vst.msk [vmem:[%s170 + $0x90] sm:$0xff] %vm2124, %v5323
      %5356 = vst.msk [vmem:[%s170 + $0x98] sm:$0xff] %vm2124, %v5324
      %5357 = vst.msk [vmem:[%s170 + $0xa0] sm:$0xff] %vm2124, %v5325
      %5358 = vst.msk [vmem:[%s170 + $0xa8] sm:$0xff] %vm2124, %v5326
      %5359 = vst.msk [vmem:[%s170 + $0xb0] sm:$0xff] %vm2124, %v5327
      %5360 = vst.msk [vmem:[%s170 + $0xb8] sm:$0xff] %vm2124, %v5328
      %5361 = vst.msk [vmem:[%s170 + $0xc0] sm:$0xff] %vm2124, %v5329
      %5362 = vst.msk [vmem:[%s170 + $0xc8] sm:$0xff] %vm2124, %v5330
      %5363 = vst.msk [vmem:[%s170 + $0xd0] sm:$0xff] %vm2124, %v5331
      %5364 = vst.msk [vmem:[%s170 + $0xd8] sm:$0xff] %vm2124, %v5332
      %5365 = vst.msk [vmem:[%s170 + $0xe0] sm:$0xff] %vm2124, %v5333
      %5366 = vst.msk [vmem:[%s170 + $0xe8] sm:$0xff] %vm2124, %v5334
      %5367 = vst.msk [vmem:[%s170 + $0xf0] sm:$0xff] %vm2124, %v5335
      %5368 = vst.msk [vmem:[%s170 + $0xf8] sm:$0xff] %vm2124, %v5336
      %p5369 = scmp.lt.s32.totalorder %s14, 1
      %s5370 = scalar_select %p5369, %s14, 1
      %s5371 = smul.addr %s5370, 32
      %s5372 = smul.addr %s5371, 8
      %s5373 = scalar_lea.vmem %s3, %s5372
      // Predicated region
      $region33: #{tpu_custom_call.1} parent=31 // pred_check
        %p5374 = pneg %p100
      $region34: #{tpu_custom_call.1} parent=31 // pred_check_branch
        %5376 = sbr.rel (%p5374) target = $region36
      $region35: #{tpu_custom_call.1} parent=31 // pred_region
        _
      $region36: #{tpu_custom_call.1} parent=31 // pred_fallthru
        _
      // Predicated region
      $region37: #{tpu_custom_call.1} parent=31 // pred_check
        %p5377 = pneg %p100
      $region38: #{tpu_custom_call.1} parent=31 // pred_check_branch
        %5379 = sbr.rel (%p5377) target = $region40
      $region39: #{tpu_custom_call.1} parent=31 // pred_region
        %p5380 = scmp.lt.s32.totalorder %s14, 1
        %s5381 = scalar_select %p5380, %s14, 1
        %s5382 = smul.addr %s5381, 32
        %s5383 = smul.addr %s5382, 8
        %s5384 = scalar_lea.vmem %s3, %s5383
      $region40: #{tpu_custom_call.1} parent=31 // pred_fallthru
        _
    $region32: #{tpu_custom_call.1} parent=5 // pred_fallthru
      _
    %p5385 = scmp.le.s32.totalorder 2, %s9
    // Predicated region
    $region41: #{tpu_custom_call.1} parent=5 // pred_check
      %p5386 = pneg %p5385
    $region42: #{tpu_custom_call.1} parent=5 // pred_check_branch
      %5388 = sbr.rel (%p5386) target = $region44
    $region43: #{tpu_custom_call.1} parent=5 // pred_region
      %s5389 = ssub.s32 %s9, 2
    $region44: #{tpu_custom_call.1} parent=5 // pred_fallthru
      _
  $region6: #{tpu_custom_call.1} parent=0 // loop_footer
    %s13 = sadd.s32 1, %s9
  $region7: #{tpu_custom_call.1} parent=0 // loop_footer_branch
    %8 = sbr.rel target = $region3
  $region8: #{tpu_custom_call.1} parent=0 // loop_exit
    _

</llo_original>
